<compile_context>
chip_gen: v6e
topology: v6e:2x2x1
jax: 0.10.0
libtpu: 0.0.40
codegen_flags: <defaults>
</compile_context>

<pallas_src>
import jax
import jax.numpy as jnp
from jax.experimental import pallas as pl
from jax.experimental.pallas import tpu as pltpu

_VMEM_SPEC = pl.BlockSpec(memory_space=pltpu.MemorySpace.VMEM)


def _lstm_pass(x_parts_steps, w_parts, w_h, b, reverse):
    """One LSTM layer, one direction, fully unrolled over time (values only).

    x_parts_steps: list over input "parts"; each part is a list of T (B, d_p)
                   values (a bidirectional predecessor contributes 2 parts).
    w_parts:       list of (d_p, 4H) weight values (pre-transposed W_ih splits).
    w_h:           (H, 4H) value (pre-transposed W_hh).
    b:             (1, 4H) value (b_ih + b_hh).
    Returns a list of T (B, H) hidden states in natural time order.
    Gate order along 4H is PyTorch's (i, f, g, o).
    """
    T = len(x_parts_steps[0])
    B = x_parts_steps[0][0].shape[0]
    H = w_h.shape[0]
    G = 4 * H

    # Hoist all broadcasts out of the unrolled time loop (JAX does not CSE
    # broadcast_in_dim).
    b_full = jnp.broadcast_to(b, (B, G))
    wx_rows = [
        [jnp.broadcast_to(wp[k:k + 1, :], (B, G)) for k in range(wp.shape[0])]
        for wp in w_parts
    ]
    wh_rows = [jnp.broadcast_to(w_h[k:k + 1, :], (B, G)) for k in range(H)]

    h = jnp.zeros((B, H), jnp.float32)
    c = jnp.zeros((B, H), jnp.float32)
    outs = [None] * T
    order = range(T - 1, -1, -1) if reverse else range(T)
    for t in order:
        # gates = [x_t, h] @ [W_ih; W_hh]^T + b, done as VPU broadcast-FMAs
        # (contraction dims are 1..4: far too small to be worth an MXU push).
        gates = b_full
        for p, rows in enumerate(wx_rows):
            xp_t = x_parts_steps[p][t]                       # (B, d_p)
            for k, row in enumerate(rows):
                gates = gates + xp_t[:, k:k + 1] * row
        for k, row in enumerate(wh_rows):
            gates = gates + h[:, k:k + 1] * row

        # Whole-tile activations, then slice out the i, f, g, o gates.
        sig = jax.nn.sigmoid(gates)
        th = jnp.tanh(gates)
        i_g = sig[:, 0 * H:1 * H]
        f_g = sig[:, 1 * H:2 * H]
        g_g = th[:, 2 * H:3 * H]
        o_g = sig[:, 3 * H:4 * H]

        c = f_g * c + i_g * g_g
        h = o_g * jnp.tanh(c)
        outs[t] = h
    return outs


def make_actor_kernel(n_rnn1_layers, n_rnn2_layers):
    """Build the fused forward kernel for the given (static) layer counts."""

    def kernel(*refs):
        x_ref = refs[0]
        out_ref = refs[-1]
        w_refs = refs[1:-1]
        T = x_ref.shape[0]

        cursor = [0]

        def take(n_parts):
            i0 = cursor[0]
            w_parts = [w_refs[i0 + k][...] for k in range(n_parts)]
            w_h = w_refs[i0 + n_parts][...]
            b = w_refs[i0 + n_parts + 1][...]
            cursor[0] = i0 + n_parts + 2
            return w_parts, w_h, b

        x_val = x_ref[...]                                   # (T, B, Din)
        seq_parts = [[x_val[t] for t in range(T)]]

        # rnn1: stacked bidirectional LSTM (fwd + rev both inside this kernel;
        # the "concat" of directions is kept implicit as two feature parts).
        for _ in range(n_rnn1_layers):
            n_parts = len(seq_parts)
            wpf, whf, bf = take(n_parts)
            wpr, whr, br = take(n_parts)
            fwd = _lstm_pass(seq_parts, wpf, whf, bf, reverse=False)
            rev = _lstm_pass(seq_parts, wpr, whr, br, reverse=True)
            seq_parts = [fwd, rev]

        # rnn2: stacked unidirectional LSTM.
        for _ in range(n_rnn2_layers):
            wp, wh, b = take(len(seq_parts))
            seq_parts = [_lstm_pass(seq_parts, wp, wh, b, reverse=False)]

        y = jnp.stack(seq_parts[0], axis=0)                  # (T, B, H)
        # out = y / softmax(y, dim=0) = y * sum(exp(y - m)) * (1 / exp(y - m))
        m = jnp.max(y, axis=0, keepdims=True)
        e = jnp.exp(y - m)
        s = jnp.sum(e, axis=0, keepdims=True)
        out_ref[...] = (y * s) * pl.reciprocal(e, approx=False)

    return kernel


def actor_network_forward(x, flat_weights, n_rnn1_layers, n_rnn2_layers, hidden_size):
    """Single pallas_call implementing ActorNetwork.forward."""
    T, B, _ = x.shape
    return pl.pallas_call(
        make_actor_kernel(n_rnn1_layers, n_rnn2_layers),
        out_shape=jax.ShapeDtypeStruct((T, B, hidden_size), jnp.float32),
        in_specs=[_VMEM_SPEC] * (1 + len(flat_weights)),
        out_specs=_VMEM_SPEC,
    )(x, *flat_weights)


def init_lstm_params(key, input_size, hidden_size, num_layers, bidirectional):
    """PyTorch nn.LSTM-style init: U(-1/sqrt(H), 1/sqrt(H)), gate order i,f,g,o."""
    num_directions = 2 if bidirectional else 1
    k = 1.0 / (hidden_size ** 0.5)
    layers = []
    for l in range(num_layers):
        layer_in = input_size if l == 0 else num_directions * hidden_size
        dirs = []
        for _ in range(num_directions):
            key, k1, k2, k3, k4 = jax.random.split(key, 5)
            w_ih = jax.random.uniform(k1, (4 * hidden_size, layer_in), jnp.float32, -k, k)
            w_hh = jax.random.uniform(k2, (4 * hidden_size, hidden_size), jnp.float32, -k, k)
            b_ih = jax.random.uniform(k3, (4 * hidden_size,), jnp.float32, -k, k)
            b_hh = jax.random.uniform(k4, (4 * hidden_size,), jnp.float32, -k, k)
            dirs.append((w_ih, w_hh, b_ih, b_hh))
        layers.append(dirs)
    return layers, key


def prepare_params(rnn1_params, rnn2_params, input_size, hidden_size):
    """Host-side prep (once): transpose W, split W_ih per input part, fuse biases.

    Returns a flat list of arrays in exactly the order the kernel consumes them.
    """
    H = hidden_size
    flat = []

    def add_direction(w_ih, w_hh, b_ih, b_hh, part_dims):
        w_x = w_ih.T                                         # (Din, 4H)
        off = 0
        for d in part_dims:
            flat.append(w_x[off:off + d, :])
            off += d
        flat.append(w_hh.T)                                  # (H, 4H)
        flat.append((b_ih + b_hh).reshape(1, 4 * H))

    part_dims = [input_size]
    for layer in rnn1_params:                                # bidirectional
        add_direction(*layer[0], part_dims)
        add_direction(*layer[1], part_dims)
        part_dims = [H, H]
    for layer in rnn2_params:                                # unidirectional
        add_direction(*layer[0], part_dims)
        part_dims = [H]
    return flat


if __name__ == "__main__":
    # The forward only type-checks when 2 * hidden_size == 2 (rnn2 in-size is 2).
    input_size, hidden_size, action_size = 4, 1, 2           # action_size == num_layers
    T, B = 8, 2

    key = jax.random.PRNGKey(0)
    key, kx = jax.random.split(key)
    x = jax.random.normal(kx, (T, B, input_size), dtype=jnp.float32)

    rnn1_params, key = init_lstm_params(key, input_size, hidden_size,
                                        num_layers=action_size, bidirectional=True)
    rnn2_params, key = init_lstm_params(key, 2, hidden_size,
                                        num_layers=action_size, bidirectional=False)
    flat_w = prepare_params(rnn1_params, rnn2_params, input_size, hidden_size)

    # TODO(synk): on v7x the independent fwd/rev directions could be split over
    # the two TensorCores; at these toy shapes a single-core fused kernel wins.
    out = actor_network_forward(x, flat_w, len(rnn1_params), len(rnn2_params),
                                hidden_size)
    out = jax.block_until_ready(out)
    assert out.shape == (T, B, hidden_size)
    assert bool(jnp.all(jnp.isfinite(out)))
    print("KERNEL_OK")
</pallas_src>

<mosaic_0001>
module attributes {stable_mosaic.version = 11 : i64} {
  func.func @kernel(%arg0: memref<8x2x4xf32, #tpu.memory_space<vmem>>, %arg1: memref<4x4xf32, #tpu.memory_space<vmem>>, %arg2: memref<1x4xf32, #tpu.memory_space<vmem>>, %arg3: memref<1x4xf32, #tpu.memory_space<vmem>>, %arg4: memref<4x4xf32, #tpu.memory_space<vmem>>, %arg5: memref<1x4xf32, #tpu.memory_space<vmem>>, %arg6: memref<1x4xf32, #tpu.memory_space<vmem>>, %arg7: memref<1x4xf32, #tpu.memory_space<vmem>>, %arg8: memref<1x4xf32, #tpu.memory_space<vmem>>, %arg9: memref<1x4xf32, #tpu.memory_space<vmem>>, %arg10: memref<1x4xf32, #tpu.memory_space<vmem>>, %arg11: memref<1x4xf32, #tpu.memory_space<vmem>>, %arg12: memref<1x4xf32, #tpu.memory_space<vmem>>, %arg13: memref<1x4xf32, #tpu.memory_space<vmem>>, %arg14: memref<1x4xf32, #tpu.memory_space<vmem>>, %arg15: memref<1x4xf32, #tpu.memory_space<vmem>>, %arg16: memref<1x4xf32, #tpu.memory_space<vmem>>, %arg17: memref<1x4xf32, #tpu.memory_space<vmem>>, %arg18: memref<1x4xf32, #tpu.memory_space<vmem>>, %arg19: memref<1x4xf32, #tpu.memory_space<vmem>>, %arg20: memref<1x4xf32, #tpu.memory_space<vmem>>, %arg21: memref<1x4xf32, #tpu.memory_space<vmem>>, %arg22: memref<8x2x1xf32, #tpu.memory_space<vmem>>) attributes {dimension_semantics = [], scalar_prefetch = 0 : i64, scratch_operands = 0 : i64, tpu.core_type = #tpu.core_type<tc>} {
    %c0 = arith.constant 0 : index
    %c0_0 = arith.constant 0 : index
    %c0_1 = arith.constant 0 : index
    %0 = vector.load %arg0[%c0, %c0_0, %c0_1] : memref<8x2x4xf32, #tpu.memory_space<vmem>>, vector<8x2x4xf32>
    %1 = vector.extract_strided_slice %0 {offsets = [0, 0, 0], sizes = [1, 2, 4], strides = [1, 1, 1]} : vector<8x2x4xf32> to vector<1x2x4xf32>
    %2 = vector.shape_cast %1 : vector<1x2x4xf32> to vector<2x4xf32>
    %3 = vector.extract_strided_slice %0 {offsets = [1, 0, 0], sizes = [1, 2, 4], strides = [1, 1, 1]} : vector<8x2x4xf32> to vector<1x2x4xf32>
    %4 = vector.shape_cast %3 : vector<1x2x4xf32> to vector<2x4xf32>
    %5 = vector.extract_strided_slice %0 {offsets = [2, 0, 0], sizes = [1, 2, 4], strides = [1, 1, 1]} : vector<8x2x4xf32> to vector<1x2x4xf32>
    %6 = vector.shape_cast %5 : vector<1x2x4xf32> to vector<2x4xf32>
    %7 = vector.extract_strided_slice %0 {offsets = [3, 0, 0], sizes = [1, 2, 4], strides = [1, 1, 1]} : vector<8x2x4xf32> to vector<1x2x4xf32>
    %8 = vector.shape_cast %7 : vector<1x2x4xf32> to vector<2x4xf32>
    %9 = vector.extract_strided_slice %0 {offsets = [4, 0, 0], sizes = [1, 2, 4], strides = [1, 1, 1]} : vector<8x2x4xf32> to vector<1x2x4xf32>
    %10 = vector.shape_cast %9 : vector<1x2x4xf32> to vector<2x4xf32>
    %11 = vector.extract_strided_slice %0 {offsets = [5, 0, 0], sizes = [1, 2, 4], strides = [1, 1, 1]} : vector<8x2x4xf32> to vector<1x2x4xf32>
    %12 = vector.shape_cast %11 : vector<1x2x4xf32> to vector<2x4xf32>
    %13 = vector.extract_strided_slice %0 {offsets = [6, 0, 0], sizes = [1, 2, 4], strides = [1, 1, 1]} : vector<8x2x4xf32> to vector<1x2x4xf32>
    %14 = vector.shape_cast %13 : vector<1x2x4xf32> to vector<2x4xf32>
    %15 = vector.extract_strided_slice %0 {offsets = [7, 0, 0], sizes = [1, 2, 4], strides = [1, 1, 1]} : vector<8x2x4xf32> to vector<1x2x4xf32>
    %16 = vector.shape_cast %15 : vector<1x2x4xf32> to vector<2x4xf32>
    %c0_2 = arith.constant 0 : index
    %c0_3 = arith.constant 0 : index
    %17 = vector.load %arg1[%c0_2, %c0_3] : memref<4x4xf32, #tpu.memory_space<vmem>>, vector<4x4xf32>
    %c0_4 = arith.constant 0 : index
    %c0_5 = arith.constant 0 : index
    %18 = vector.load %arg2[%c0_4, %c0_5] : memref<1x4xf32, #tpu.memory_space<vmem>>, vector<1x4xf32>
    %c0_6 = arith.constant 0 : index
    %c0_7 = arith.constant 0 : index
    %19 = vector.load %arg3[%c0_6, %c0_7] : memref<1x4xf32, #tpu.memory_space<vmem>>, vector<1x4xf32>
    %c0_8 = arith.constant 0 : index
    %c0_9 = arith.constant 0 : index
    %20 = vector.load %arg4[%c0_8, %c0_9] : memref<4x4xf32, #tpu.memory_space<vmem>>, vector<4x4xf32>
    %c0_10 = arith.constant 0 : index
    %c0_11 = arith.constant 0 : index
    %21 = vector.load %arg5[%c0_10, %c0_11] : memref<1x4xf32, #tpu.memory_space<vmem>>, vector<1x4xf32>
    %c0_12 = arith.constant 0 : index
    %c0_13 = arith.constant 0 : index
    %22 = vector.load %arg6[%c0_12, %c0_13] : memref<1x4xf32, #tpu.memory_space<vmem>>, vector<1x4xf32>
    %23 = vector.shape_cast %19 : vector<1x4xf32> to vector<1x4xf32>
    %24 = vector.broadcast %23 : vector<1x4xf32> to vector<2x4xf32>
    %25 = vector.extract_strided_slice %17 {offsets = [0, 0], sizes = [1, 4], strides = [1, 1]} : vector<4x4xf32> to vector<1x4xf32>
    %26 = vector.shape_cast %25 : vector<1x4xf32> to vector<1x4xf32>
    %27 = vector.broadcast %26 : vector<1x4xf32> to vector<2x4xf32>
    %28 = vector.extract_strided_slice %17 {offsets = [1, 0], sizes = [1, 4], strides = [1, 1]} : vector<4x4xf32> to vector<1x4xf32>
    %29 = vector.shape_cast %28 : vector<1x4xf32> to vector<1x4xf32>
    %30 = vector.broadcast %29 : vector<1x4xf32> to vector<2x4xf32>
    %31 = vector.extract_strided_slice %17 {offsets = [2, 0], sizes = [1, 4], strides = [1, 1]} : vector<4x4xf32> to vector<1x4xf32>
    %32 = vector.shape_cast %31 : vector<1x4xf32> to vector<1x4xf32>
    %33 = vector.broadcast %32 : vector<1x4xf32> to vector<2x4xf32>
    %34 = vector.extract_strided_slice %17 {offsets = [3, 0], sizes = [1, 4], strides = [1, 1]} : vector<4x4xf32> to vector<1x4xf32>
    %35 = vector.shape_cast %34 : vector<1x4xf32> to vector<1x4xf32>
    %36 = vector.broadcast %35 : vector<1x4xf32> to vector<2x4xf32>
    %37 = vector.shape_cast %18 : vector<1x4xf32> to vector<1x4xf32>
    %38 = vector.broadcast %37 : vector<1x4xf32> to vector<2x4xf32>
    %cst = arith.constant 0.000000e+00 : f32
    %39 = vector.broadcast %cst : f32 to vector<2x1xf32>
    %cst_14 = arith.constant 0.000000e+00 : f32
    %40 = vector.broadcast %cst_14 : f32 to vector<2x1xf32>
    %41 = vector.extract_strided_slice %2 {offsets = [0, 0], sizes = [2, 1], strides = [1, 1]} : vector<2x4xf32> to vector<2x1xf32>
    %42 = vector.broadcast %41 : vector<2x1xf32> to vector<2x4xf32>
    %43 = arith.mulf %42, %27 : vector<2x4xf32>
    %44 = arith.addf %24, %43 : vector<2x4xf32>
    %45 = vector.extract_strided_slice %2 {offsets = [0, 1], sizes = [2, 1], strides = [1, 1]} : vector<2x4xf32> to vector<2x1xf32>
    %46 = vector.broadcast %45 : vector<2x1xf32> to vector<2x4xf32>
    %47 = arith.mulf %46, %30 : vector<2x4xf32>
    %48 = arith.addf %44, %47 : vector<2x4xf32>
    %49 = vector.extract_strided_slice %2 {offsets = [0, 2], sizes = [2, 1], strides = [1, 1]} : vector<2x4xf32> to vector<2x1xf32>
    %50 = vector.broadcast %49 : vector<2x1xf32> to vector<2x4xf32>
    %51 = arith.mulf %50, %33 : vector<2x4xf32>
    %52 = arith.addf %48, %51 : vector<2x4xf32>
    %53 = vector.extract_strided_slice %2 {offsets = [0, 3], sizes = [2, 1], strides = [1, 1]} : vector<2x4xf32> to vector<2x1xf32>
    %54 = vector.broadcast %53 : vector<2x1xf32> to vector<2x4xf32>
    %55 = arith.mulf %54, %36 : vector<2x4xf32>
    %56 = arith.addf %52, %55 : vector<2x4xf32>
    %57 = vector.broadcast %39 : vector<2x1xf32> to vector<2x4xf32>
    %58 = arith.mulf %57, %38 : vector<2x4xf32>
    %59 = arith.addf %56, %58 : vector<2x4xf32>
    %60 = arith.negf %59 : vector<2x4xf32>
    %61 = math.exp %60 : vector<2x4xf32>
    %cst_15 = arith.constant 1.000000e+00 : f32
    %62 = vector.broadcast %cst_15 : f32 to vector<2x4xf32>
    %63 = arith.addf %62, %61 : vector<2x4xf32>
    %64 = arith.divf %62, %63 : vector<2x4xf32>
    %65 = math.tanh %59 : vector<2x4xf32>
    %66 = vector.extract_strided_slice %64 {offsets = [0, 0], sizes = [2, 1], strides = [1, 1]} : vector<2x4xf32> to vector<2x1xf32>
    %67 = vector.extract_strided_slice %64 {offsets = [0, 1], sizes = [2, 1], strides = [1, 1]} : vector<2x4xf32> to vector<2x1xf32>
    %68 = vector.extract_strided_slice %65 {offsets = [0, 2], sizes = [2, 1], strides = [1, 1]} : vector<2x4xf32> to vector<2x1xf32>
    %69 = vector.extract_strided_slice %64 {offsets = [0, 3], sizes = [2, 1], strides = [1, 1]} : vector<2x4xf32> to vector<2x1xf32>
    %70 = arith.mulf %67, %40 : vector<2x1xf32>
    %71 = arith.mulf %66, %68 : vector<2x1xf32>
    %72 = arith.addf %70, %71 : vector<2x1xf32>
    %73 = math.tanh %72 : vector<2x1xf32>
    %74 = arith.mulf %69, %73 : vector<2x1xf32>
    %75 = vector.extract_strided_slice %4 {offsets = [0, 0], sizes = [2, 1], strides = [1, 1]} : vector<2x4xf32> to vector<2x1xf32>
    %76 = vector.broadcast %75 : vector<2x1xf32> to vector<2x4xf32>
    %77 = arith.mulf %76, %27 : vector<2x4xf32>
    %78 = arith.addf %24, %77 : vector<2x4xf32>
    %79 = vector.extract_strided_slice %4 {offsets = [0, 1], sizes = [2, 1], strides = [1, 1]} : vector<2x4xf32> to vector<2x1xf32>
    %80 = vector.broadcast %79 : vector<2x1xf32> to vector<2x4xf32>
    %81 = arith.mulf %80, %30 : vector<2x4xf32>
    %82 = arith.addf %78, %81 : vector<2x4xf32>
    %83 = vector.extract_strided_slice %4 {offsets = [0, 2], sizes = [2, 1], strides = [1, 1]} : vector<2x4xf32> to vector<2x1xf32>
    %84 = vector.broadcast %83 : vector<2x1xf32> to vector<2x4xf32>
    %85 = arith.mulf %84, %33 : vector<2x4xf32>
    %86 = arith.addf %82, %85 : vector<2x4xf32>
    %87 = vector.extract_strided_slice %4 {offsets = [0, 3], sizes = [2, 1], strides = [1, 1]} : vector<2x4xf32> to vector<2x1xf32>
    %88 = vector.broadcast %87 : vector<2x1xf32> to vector<2x4xf32>
    %89 = arith.mulf %88, %36 : vector<2x4xf32>
    %90 = arith.addf %86, %89 : vector<2x4xf32>
    %91 = vector.broadcast %74 : vector<2x1xf32> to vector<2x4xf32>
    %92 = arith.mulf %91, %38 : vector<2x4xf32>
    %93 = arith.addf %90, %92 : vector<2x4xf32>
    %94 = arith.negf %93 : vector<2x4xf32>
    %95 = math.exp %94 : vector<2x4xf32>
    %cst_16 = arith.constant 1.000000e+00 : f32
    %96 = vector.broadcast %cst_16 : f32 to vector<2x4xf32>
    %97 = arith.addf %96, %95 : vector<2x4xf32>
    %98 = arith.divf %96, %97 : vector<2x4xf32>
    %99 = math.tanh %93 : vector<2x4xf32>
    %100 = vector.extract_strided_slice %98 {offsets = [0, 0], sizes = [2, 1], strides = [1, 1]} : vector<2x4xf32> to vector<2x1xf32>
    %101 = vector.extract_strided_slice %98 {offsets = [0, 1], sizes = [2, 1], strides = [1, 1]} : vector<2x4xf32> to vector<2x1xf32>
    %102 = vector.extract_strided_slice %99 {offsets = [0, 2], sizes = [2, 1], strides = [1, 1]} : vector<2x4xf32> to vector<2x1xf32>
    %103 = vector.extract_strided_slice %98 {offsets = [0, 3], sizes = [2, 1], strides = [1, 1]} : vector<2x4xf32> to vector<2x1xf32>
    %104 = arith.mulf %101, %72 : vector<2x1xf32>
    %105 = arith.mulf %100, %102 : vector<2x1xf32>
    %106 = arith.addf %104, %105 : vector<2x1xf32>
    %107 = math.tanh %106 : vector<2x1xf32>
    %108 = arith.mulf %103, %107 : vector<2x1xf32>
    %109 = vector.extract_strided_slice %6 {offsets = [0, 0], sizes = [2, 1], strides = [1, 1]} : vector<2x4xf32> to vector<2x1xf32>
    %110 = vector.broadcast %109 : vector<2x1xf32> to vector<2x4xf32>
    %111 = arith.mulf %110, %27 : vector<2x4xf32>
    %112 = arith.addf %24, %111 : vector<2x4xf32>
    %113 = vector.extract_strided_slice %6 {offsets = [0, 1], sizes = [2, 1], strides = [1, 1]} : vector<2x4xf32> to vector<2x1xf32>
    %114 = vector.broadcast %113 : vector<2x1xf32> to vector<2x4xf32>
    %115 = arith.mulf %114, %30 : vector<2x4xf32>
    %116 = arith.addf %112, %115 : vector<2x4xf32>
    %117 = vector.extract_strided_slice %6 {offsets = [0, 2], sizes = [2, 1], strides = [1, 1]} : vector<2x4xf32> to vector<2x1xf32>
    %118 = vector.broadcast %117 : vector<2x1xf32> to vector<2x4xf32>
    %119 = arith.mulf %118, %33 : vector<2x4xf32>
    %120 = arith.addf %116, %119 : vector<2x4xf32>
    %121 = vector.extract_strided_slice %6 {offsets = [0, 3], sizes = [2, 1], strides = [1, 1]} : vector<2x4xf32> to vector<2x1xf32>
    %122 = vector.broadcast %121 : vector<2x1xf32> to vector<2x4xf32>
    %123 = arith.mulf %122, %36 : vector<2x4xf32>
    %124 = arith.addf %120, %123 : vector<2x4xf32>
    %125 = vector.broadcast %108 : vector<2x1xf32> to vector<2x4xf32>
    %126 = arith.mulf %125, %38 : vector<2x4xf32>
    %127 = arith.addf %124, %126 : vector<2x4xf32>
    %128 = arith.negf %127 : vector<2x4xf32>
    %129 = math.exp %128 : vector<2x4xf32>
    %cst_17 = arith.constant 1.000000e+00 : f32
    %130 = vector.broadcast %cst_17 : f32 to vector<2x4xf32>
    %131 = arith.addf %130, %129 : vector<2x4xf32>
    %132 = arith.divf %130, %131 : vector<2x4xf32>
    %133 = math.tanh %127 : vector<2x4xf32>
    %134 = vector.extract_strided_slice %132 {offsets = [0, 0], sizes = [2, 1], strides = [1, 1]} : vector<2x4xf32> to vector<2x1xf32>
    %135 = vector.extract_strided_slice %132 {offsets = [0, 1], sizes = [2, 1], strides = [1, 1]} : vector<2x4xf32> to vector<2x1xf32>
    %136 = vector.extract_strided_slice %133 {offsets = [0, 2], sizes = [2, 1], strides = [1, 1]} : vector<2x4xf32> to vector<2x1xf32>
    %137 = vector.extract_strided_slice %132 {offsets = [0, 3], sizes = [2, 1], strides = [1, 1]} : vector<2x4xf32> to vector<2x1xf32>
    %138 = arith.mulf %135, %106 : vector<2x1xf32>
    %139 = arith.mulf %134, %136 : vector<2x1xf32>
    %140 = arith.addf %138, %139 : vector<2x1xf32>
    %141 = math.tanh %140 : vector<2x1xf32>
    %142 = arith.mulf %137, %141 : vector<2x1xf32>
    %143 = vector.extract_strided_slice %8 {offsets = [0, 0], sizes = [2, 1], strides = [1, 1]} : vector<2x4xf32> to vector<2x1xf32>
    %144 = vector.broadcast %143 : vector<2x1xf32> to vector<2x4xf32>
    %145 = arith.mulf %144, %27 : vector<2x4xf32>
    %146 = arith.addf %24, %145 : vector<2x4xf32>
    %147 = vector.extract_strided_slice %8 {offsets = [0, 1], sizes = [2, 1], strides = [1, 1]} : vector<2x4xf32> to vector<2x1xf32>
    %148 = vector.broadcast %147 : vector<2x1xf32> to vector<2x4xf32>
    %149 = arith.mulf %148, %30 : vector<2x4xf32>
    %150 = arith.addf %146, %149 : vector<2x4xf32>
    %151 = vector.extract_strided_slice %8 {offsets = [0, 2], sizes = [2, 1], strides = [1, 1]} : vector<2x4xf32> to vector<2x1xf32>
    %152 = vector.broadcast %151 : vector<2x1xf32> to vector<2x4xf32>
    %153 = arith.mulf %152, %33 : vector<2x4xf32>
    %154 = arith.addf %150, %153 : vector<2x4xf32>
    %155 = vector.extract_strided_slice %8 {offsets = [0, 3], sizes = [2, 1], strides = [1, 1]} : vector<2x4xf32> to vector<2x1xf32>
    %156 = vector.broadcast %155 : vector<2x1xf32> to vector<2x4xf32>
    %157 = arith.mulf %156, %36 : vector<2x4xf32>
    %158 = arith.addf %154, %157 : vector<2x4xf32>
    %159 = vector.broadcast %142 : vector<2x1xf32> to vector<2x4xf32>
    %160 = arith.mulf %159, %38 : vector<2x4xf32>
    %161 = arith.addf %158, %160 : vector<2x4xf32>
    %162 = arith.negf %161 : vector<2x4xf32>
    %163 = math.exp %162 : vector<2x4xf32>
    %cst_18 = arith.constant 1.000000e+00 : f32
    %164 = vector.broadcast %cst_18 : f32 to vector<2x4xf32>
    %165 = arith.addf %164, %163 : vector<2x4xf32>
    %166 = arith.divf %164, %165 : vector<2x4xf32>
    %167 = math.tanh %161 : vector<2x4xf32>
    %168 = vector.extract_strided_slice %166 {offsets = [0, 0], sizes = [2, 1], strides = [1, 1]} : vector<2x4xf32> to vector<2x1xf32>
    %169 = vector.extract_strided_slice %166 {offsets = [0, 1], sizes = [2, 1], strides = [1, 1]} : vector<2x4xf32> to vector<2x1xf32>
    %170 = vector.extract_strided_slice %167 {offsets = [0, 2], sizes = [2, 1], strides = [1, 1]} : vector<2x4xf32> to vector<2x1xf32>
    %171 = vector.extract_strided_slice %166 {offsets = [0, 3], sizes = [2, 1], strides = [1, 1]} : vector<2x4xf32> to vector<2x1xf32>
    %172 = arith.mulf %169, %140 : vector<2x1xf32>
    %173 = arith.mulf %168, %170 : vector<2x1xf32>
    %174 = arith.addf %172, %173 : vector<2x1xf32>
    %175 = math.tanh %174 : vector<2x1xf32>
    %176 = arith.mulf %171, %175 : vector<2x1xf32>
    %177 = vector.extract_strided_slice %10 {offsets = [0, 0], sizes = [2, 1], strides = [1, 1]} : vector<2x4xf32> to vector<2x1xf32>
    %178 = vector.broadcast %177 : vector<2x1xf32> to vector<2x4xf32>
    %179 = arith.mulf %178, %27 : vector<2x4xf32>
    %180 = arith.addf %24, %179 : vector<2x4xf32>
    %181 = vector.extract_strided_slice %10 {offsets = [0, 1], sizes = [2, 1], strides = [1, 1]} : vector<2x4xf32> to vector<2x1xf32>
    %182 = vector.broadcast %181 : vector<2x1xf32> to vector<2x4xf32>
    %183 = arith.mulf %182, %30 : vector<2x4xf32>
    %184 = arith.addf %180, %183 : vector<2x4xf32>
    %185 = vector.extract_strided_slice %10 {offsets = [0, 2], sizes = [2, 1], strides = [1, 1]} : vector<2x4xf32> to vector<2x1xf32>
    %186 = vector.broadcast %185 : vector<2x1xf32> to vector<2x4xf32>
    %187 = arith.mulf %186, %33 : vector<2x4xf32>
    %188 = arith.addf %184, %187 : vector<2x4xf32>
    %189 = vector.extract_strided_slice %10 {offsets = [0, 3], sizes = [2, 1], strides = [1, 1]} : vector<2x4xf32> to vector<2x1xf32>
    %190 = vector.broadcast %189 : vector<2x1xf32> to vector<2x4xf32>
    %191 = arith.mulf %190, %36 : vector<2x4xf32>
    %192 = arith.addf %188, %191 : vector<2x4xf32>
    %193 = vector.broadcast %176 : vector<2x1xf32> to vector<2x4xf32>
    %194 = arith.mulf %193, %38 : vector<2x4xf32>
    %195 = arith.addf %192, %194 : vector<2x4xf32>
    %196 = arith.negf %195 : vector<2x4xf32>
    %197 = math.exp %196 : vector<2x4xf32>
    %cst_19 = arith.constant 1.000000e+00 : f32
    %198 = vector.broadcast %cst_19 : f32 to vector<2x4xf32>
    %199 = arith.addf %198, %197 : vector<2x4xf32>
    %200 = arith.divf %198, %199 : vector<2x4xf32>
    %201 = math.tanh %195 : vector<2x4xf32>
    %202 = vector.extract_strided_slice %200 {offsets = [0, 0], sizes = [2, 1], strides = [1, 1]} : vector<2x4xf32> to vector<2x1xf32>
    %203 = vector.extract_strided_slice %200 {offsets = [0, 1], sizes = [2, 1], strides = [1, 1]} : vector<2x4xf32> to vector<2x1xf32>
    %204 = vector.extract_strided_slice %201 {offsets = [0, 2], sizes = [2, 1], strides = [1, 1]} : vector<2x4xf32> to vector<2x1xf32>
    %205 = vector.extract_strided_slice %200 {offsets = [0, 3], sizes = [2, 1], strides = [1, 1]} : vector<2x4xf32> to vector<2x1xf32>
    %206 = arith.mulf %203, %174 : vector<2x1xf32>
    %207 = arith.mulf %202, %204 : vector<2x1xf32>
    %208 = arith.addf %206, %207 : vector<2x1xf32>
    %209 = math.tanh %208 : vector<2x1xf32>
    %210 = arith.mulf %205, %209 : vector<2x1xf32>
    %211 = vector.extract_strided_slice %12 {offsets = [0, 0], sizes = [2, 1], strides = [1, 1]} : vector<2x4xf32> to vector<2x1xf32>
    %212 = vector.broadcast %211 : vector<2x1xf32> to vector<2x4xf32>
    %213 = arith.mulf %212, %27 : vector<2x4xf32>
    %214 = arith.addf %24, %213 : vector<2x4xf32>
    %215 = vector.extract_strided_slice %12 {offsets = [0, 1], sizes = [2, 1], strides = [1, 1]} : vector<2x4xf32> to vector<2x1xf32>
    %216 = vector.broadcast %215 : vector<2x1xf32> to vector<2x4xf32>
    %217 = arith.mulf %216, %30 : vector<2x4xf32>
    %218 = arith.addf %214, %217 : vector<2x4xf32>
    %219 = vector.extract_strided_slice %12 {offsets = [0, 2], sizes = [2, 1], strides = [1, 1]} : vector<2x4xf32> to vector<2x1xf32>
    %220 = vector.broadcast %219 : vector<2x1xf32> to vector<2x4xf32>
    %221 = arith.mulf %220, %33 : vector<2x4xf32>
    %222 = arith.addf %218, %221 : vector<2x4xf32>
    %223 = vector.extract_strided_slice %12 {offsets = [0, 3], sizes = [2, 1], strides = [1, 1]} : vector<2x4xf32> to vector<2x1xf32>
    %224 = vector.broadcast %223 : vector<2x1xf32> to vector<2x4xf32>
    %225 = arith.mulf %224, %36 : vector<2x4xf32>
    %226 = arith.addf %222, %225 : vector<2x4xf32>
    %227 = vector.broadcast %210 : vector<2x1xf32> to vector<2x4xf32>
    %228 = arith.mulf %227, %38 : vector<2x4xf32>
    %229 = arith.addf %226, %228 : vector<2x4xf32>
    %230 = arith.negf %229 : vector<2x4xf32>
    %231 = math.exp %230 : vector<2x4xf32>
    %cst_20 = arith.constant 1.000000e+00 : f32
    %232 = vector.broadcast %cst_20 : f32 to vector<2x4xf32>
    %233 = arith.addf %232, %231 : vector<2x4xf32>
    %234 = arith.divf %232, %233 : vector<2x4xf32>
    %235 = math.tanh %229 : vector<2x4xf32>
    %236 = vector.extract_strided_slice %234 {offsets = [0, 0], sizes = [2, 1], strides = [1, 1]} : vector<2x4xf32> to vector<2x1xf32>
    %237 = vector.extract_strided_slice %234 {offsets = [0, 1], sizes = [2, 1], strides = [1, 1]} : vector<2x4xf32> to vector<2x1xf32>
    %238 = vector.extract_strided_slice %235 {offsets = [0, 2], sizes = [2, 1], strides = [1, 1]} : vector<2x4xf32> to vector<2x1xf32>
    %239 = vector.extract_strided_slice %234 {offsets = [0, 3], sizes = [2, 1], strides = [1, 1]} : vector<2x4xf32> to vector<2x1xf32>
    %240 = arith.mulf %237, %208 : vector<2x1xf32>
    %241 = arith.mulf %236, %238 : vector<2x1xf32>
    %242 = arith.addf %240, %241 : vector<2x1xf32>
    %243 = math.tanh %242 : vector<2x1xf32>
    %244 = arith.mulf %239, %243 : vector<2x1xf32>
    %245 = vector.extract_strided_slice %14 {offsets = [0, 0], sizes = [2, 1], strides = [1, 1]} : vector<2x4xf32> to vector<2x1xf32>
    %246 = vector.broadcast %245 : vector<2x1xf32> to vector<2x4xf32>
    %247 = arith.mulf %246, %27 : vector<2x4xf32>
    %248 = arith.addf %24, %247 : vector<2x4xf32>
    %249 = vector.extract_strided_slice %14 {offsets = [0, 1], sizes = [2, 1], strides = [1, 1]} : vector<2x4xf32> to vector<2x1xf32>
    %250 = vector.broadcast %249 : vector<2x1xf32> to vector<2x4xf32>
    %251 = arith.mulf %250, %30 : vector<2x4xf32>
    %252 = arith.addf %248, %251 : vector<2x4xf32>
    %253 = vector.extract_strided_slice %14 {offsets = [0, 2], sizes = [2, 1], strides = [1, 1]} : vector<2x4xf32> to vector<2x1xf32>
    %254 = vector.broadcast %253 : vector<2x1xf32> to vector<2x4xf32>
    %255 = arith.mulf %254, %33 : vector<2x4xf32>
    %256 = arith.addf %252, %255 : vector<2x4xf32>
    %257 = vector.extract_strided_slice %14 {offsets = [0, 3], sizes = [2, 1], strides = [1, 1]} : vector<2x4xf32> to vector<2x1xf32>
    %258 = vector.broadcast %257 : vector<2x1xf32> to vector<2x4xf32>
    %259 = arith.mulf %258, %36 : vector<2x4xf32>
    %260 = arith.addf %256, %259 : vector<2x4xf32>
    %261 = vector.broadcast %244 : vector<2x1xf32> to vector<2x4xf32>
    %262 = arith.mulf %261, %38 : vector<2x4xf32>
    %263 = arith.addf %260, %262 : vector<2x4xf32>
    %264 = arith.negf %263 : vector<2x4xf32>
    %265 = math.exp %264 : vector<2x4xf32>
    %cst_21 = arith.constant 1.000000e+00 : f32
    %266 = vector.broadcast %cst_21 : f32 to vector<2x4xf32>
    %267 = arith.addf %266, %265 : vector<2x4xf32>
    %268 = arith.divf %266, %267 : vector<2x4xf32>
    %269 = math.tanh %263 : vector<2x4xf32>
    %270 = vector.extract_strided_slice %268 {offsets = [0, 0], sizes = [2, 1], strides = [1, 1]} : vector<2x4xf32> to vector<2x1xf32>
    %271 = vector.extract_strided_slice %268 {offsets = [0, 1], sizes = [2, 1], strides = [1, 1]} : vector<2x4xf32> to vector<2x1xf32>
    %272 = vector.extract_strided_slice %269 {offsets = [0, 2], sizes = [2, 1], strides = [1, 1]} : vector<2x4xf32> to vector<2x1xf32>
    %273 = vector.extract_strided_slice %268 {offsets = [0, 3], sizes = [2, 1], strides = [1, 1]} : vector<2x4xf32> to vector<2x1xf32>
    %274 = arith.mulf %271, %242 : vector<2x1xf32>
    %275 = arith.mulf %270, %272 : vector<2x1xf32>
    %276 = arith.addf %274, %275 : vector<2x1xf32>
    %277 = math.tanh %276 : vector<2x1xf32>
    %278 = arith.mulf %273, %277 : vector<2x1xf32>
    %279 = vector.extract_strided_slice %16 {offsets = [0, 0], sizes = [2, 1], strides = [1, 1]} : vector<2x4xf32> to vector<2x1xf32>
    %280 = vector.broadcast %279 : vector<2x1xf32> to vector<2x4xf32>
    %281 = arith.mulf %280, %27 : vector<2x4xf32>
    %282 = arith.addf %24, %281 : vector<2x4xf32>
    %283 = vector.extract_strided_slice %16 {offsets = [0, 1], sizes = [2, 1], strides = [1, 1]} : vector<2x4xf32> to vector<2x1xf32>
    %284 = vector.broadcast %283 : vector<2x1xf32> to vector<2x4xf32>
    %285 = arith.mulf %284, %30 : vector<2x4xf32>
    %286 = arith.addf %282, %285 : vector<2x4xf32>
    %287 = vector.extract_strided_slice %16 {offsets = [0, 2], sizes = [2, 1], strides = [1, 1]} : vector<2x4xf32> to vector<2x1xf32>
    %288 = vector.broadcast %287 : vector<2x1xf32> to vector<2x4xf32>
    %289 = arith.mulf %288, %33 : vector<2x4xf32>
    %290 = arith.addf %286, %289 : vector<2x4xf32>
    %291 = vector.extract_strided_slice %16 {offsets = [0, 3], sizes = [2, 1], strides = [1, 1]} : vector<2x4xf32> to vector<2x1xf32>
    %292 = vector.broadcast %291 : vector<2x1xf32> to vector<2x4xf32>
    %293 = arith.mulf %292, %36 : vector<2x4xf32>
    %294 = arith.addf %290, %293 : vector<2x4xf32>
    %295 = vector.broadcast %278 : vector<2x1xf32> to vector<2x4xf32>
    %296 = arith.mulf %295, %38 : vector<2x4xf32>
    %297 = arith.addf %294, %296 : vector<2x4xf32>
    %298 = arith.negf %297 : vector<2x4xf32>
    %299 = math.exp %298 : vector<2x4xf32>
    %cst_22 = arith.constant 1.000000e+00 : f32
    %300 = vector.broadcast %cst_22 : f32 to vector<2x4xf32>
    %301 = arith.addf %300, %299 : vector<2x4xf32>
    %302 = arith.divf %300, %301 : vector<2x4xf32>
    %303 = math.tanh %297 : vector<2x4xf32>
    %304 = vector.extract_strided_slice %302 {offsets = [0, 0], sizes = [2, 1], strides = [1, 1]} : vector<2x4xf32> to vector<2x1xf32>
    %305 = vector.extract_strided_slice %302 {offsets = [0, 1], sizes = [2, 1], strides = [1, 1]} : vector<2x4xf32> to vector<2x1xf32>
    %306 = vector.extract_strided_slice %303 {offsets = [0, 2], sizes = [2, 1], strides = [1, 1]} : vector<2x4xf32> to vector<2x1xf32>
    %307 = vector.extract_strided_slice %302 {offsets = [0, 3], sizes = [2, 1], strides = [1, 1]} : vector<2x4xf32> to vector<2x1xf32>
    %308 = arith.mulf %305, %276 : vector<2x1xf32>
    %309 = arith.mulf %304, %306 : vector<2x1xf32>
    %310 = arith.addf %308, %309 : vector<2x1xf32>
    %311 = math.tanh %310 : vector<2x1xf32>
    %312 = arith.mulf %307, %311 : vector<2x1xf32>
    %313 = vector.shape_cast %22 : vector<1x4xf32> to vector<1x4xf32>
    %314 = vector.broadcast %313 : vector<1x4xf32> to vector<2x4xf32>
    %315 = vector.extract_strided_slice %20 {offsets = [0, 0], sizes = [1, 4], strides = [1, 1]} : vector<4x4xf32> to vector<1x4xf32>
    %316 = vector.shape_cast %315 : vector<1x4xf32> to vector<1x4xf32>
    %317 = vector.broadcast %316 : vector<1x4xf32> to vector<2x4xf32>
    %318 = vector.extract_strided_slice %20 {offsets = [1, 0], sizes = [1, 4], strides = [1, 1]} : vector<4x4xf32> to vector<1x4xf32>
    %319 = vector.shape_cast %318 : vector<1x4xf32> to vector<1x4xf32>
    %320 = vector.broadcast %319 : vector<1x4xf32> to vector<2x4xf32>
    %321 = vector.extract_strided_slice %20 {offsets = [2, 0], sizes = [1, 4], strides = [1, 1]} : vector<4x4xf32> to vector<1x4xf32>
    %322 = vector.shape_cast %321 : vector<1x4xf32> to vector<1x4xf32>
    %323 = vector.broadcast %322 : vector<1x4xf32> to vector<2x4xf32>
    %324 = vector.extract_strided_slice %20 {offsets = [3, 0], sizes = [1, 4], strides = [1, 1]} : vector<4x4xf32> to vector<1x4xf32>
    %325 = vector.shape_cast %324 : vector<1x4xf32> to vector<1x4xf32>
    %326 = vector.broadcast %325 : vector<1x4xf32> to vector<2x4xf32>
    %327 = vector.shape_cast %21 : vector<1x4xf32> to vector<1x4xf32>
    %328 = vector.broadcast %327 : vector<1x4xf32> to vector<2x4xf32>
    %cst_23 = arith.constant 0.000000e+00 : f32
    %329 = vector.broadcast %cst_23 : f32 to vector<2x1xf32>
    %cst_24 = arith.constant 0.000000e+00 : f32
    %330 = vector.broadcast %cst_24 : f32 to vector<2x1xf32>
    %331 = vector.extract_strided_slice %16 {offsets = [0, 0], sizes = [2, 1], strides = [1, 1]} : vector<2x4xf32> to vector<2x1xf32>
    %332 = vector.broadcast %331 : vector<2x1xf32> to vector<2x4xf32>
    %333 = arith.mulf %332, %317 : vector<2x4xf32>
    %334 = arith.addf %314, %333 : vector<2x4xf32>
    %335 = vector.extract_strided_slice %16 {offsets = [0, 1], sizes = [2, 1], strides = [1, 1]} : vector<2x4xf32> to vector<2x1xf32>
    %336 = vector.broadcast %335 : vector<2x1xf32> to vector<2x4xf32>
    %337 = arith.mulf %336, %320 : vector<2x4xf32>
    %338 = arith.addf %334, %337 : vector<2x4xf32>
    %339 = vector.extract_strided_slice %16 {offsets = [0, 2], sizes = [2, 1], strides = [1, 1]} : vector<2x4xf32> to vector<2x1xf32>
    %340 = vector.broadcast %339 : vector<2x1xf32> to vector<2x4xf32>
    %341 = arith.mulf %340, %323 : vector<2x4xf32>
    %342 = arith.addf %338, %341 : vector<2x4xf32>
    %343 = vector.extract_strided_slice %16 {offsets = [0, 3], sizes = [2, 1], strides = [1, 1]} : vector<2x4xf32> to vector<2x1xf32>
    %344 = vector.broadcast %343 : vector<2x1xf32> to vector<2x4xf32>
    %345 = arith.mulf %344, %326 : vector<2x4xf32>
    %346 = arith.addf %342, %345 : vector<2x4xf32>
    %347 = vector.broadcast %329 : vector<2x1xf32> to vector<2x4xf32>
    %348 = arith.mulf %347, %328 : vector<2x4xf32>
    %349 = arith.addf %346, %348 : vector<2x4xf32>
    %350 = arith.negf %349 : vector<2x4xf32>
    %351 = math.exp %350 : vector<2x4xf32>
    %cst_25 = arith.constant 1.000000e+00 : f32
    %352 = vector.broadcast %cst_25 : f32 to vector<2x4xf32>
    %353 = arith.addf %352, %351 : vector<2x4xf32>
    %354 = arith.divf %352, %353 : vector<2x4xf32>
    %355 = math.tanh %349 : vector<2x4xf32>
    %356 = vector.extract_strided_slice %354 {offsets = [0, 0], sizes = [2, 1], strides = [1, 1]} : vector<2x4xf32> to vector<2x1xf32>
    %357 = vector.extract_strided_slice %354 {offsets = [0, 1], sizes = [2, 1], strides = [1, 1]} : vector<2x4xf32> to vector<2x1xf32>
    %358 = vector.extract_strided_slice %355 {offsets = [0, 2], sizes = [2, 1], strides = [1, 1]} : vector<2x4xf32> to vector<2x1xf32>
    %359 = vector.extract_strided_slice %354 {offsets = [0, 3], sizes = [2, 1], strides = [1, 1]} : vector<2x4xf32> to vector<2x1xf32>
    %360 = arith.mulf %357, %330 : vector<2x1xf32>
    %361 = arith.mulf %356, %358 : vector<2x1xf32>
    %362 = arith.addf %360, %361 : vector<2x1xf32>
    %363 = math.tanh %362 : vector<2x1xf32>
    %364 = arith.mulf %359, %363 : vector<2x1xf32>
    %365 = vector.extract_strided_slice %14 {offsets = [0, 0], sizes = [2, 1], strides = [1, 1]} : vector<2x4xf32> to vector<2x1xf32>
    %366 = vector.broadcast %365 : vector<2x1xf32> to vector<2x4xf32>
    %367 = arith.mulf %366, %317 : vector<2x4xf32>
    %368 = arith.addf %314, %367 : vector<2x4xf32>
    %369 = vector.extract_strided_slice %14 {offsets = [0, 1], sizes = [2, 1], strides = [1, 1]} : vector<2x4xf32> to vector<2x1xf32>
    %370 = vector.broadcast %369 : vector<2x1xf32> to vector<2x4xf32>
    %371 = arith.mulf %370, %320 : vector<2x4xf32>
    %372 = arith.addf %368, %371 : vector<2x4xf32>
    %373 = vector.extract_strided_slice %14 {offsets = [0, 2], sizes = [2, 1], strides = [1, 1]} : vector<2x4xf32> to vector<2x1xf32>
    %374 = vector.broadcast %373 : vector<2x1xf32> to vector<2x4xf32>
    %375 = arith.mulf %374, %323 : vector<2x4xf32>
    %376 = arith.addf %372, %375 : vector<2x4xf32>
    %377 = vector.extract_strided_slice %14 {offsets = [0, 3], sizes = [2, 1], strides = [1, 1]} : vector<2x4xf32> to vector<2x1xf32>
    %378 = vector.broadcast %377 : vector<2x1xf32> to vector<2x4xf32>
    %379 = arith.mulf %378, %326 : vector<2x4xf32>
    %380 = arith.addf %376, %379 : vector<2x4xf32>
    %381 = vector.broadcast %364 : vector<2x1xf32> to vector<2x4xf32>
    %382 = arith.mulf %381, %328 : vector<2x4xf32>
    %383 = arith.addf %380, %382 : vector<2x4xf32>
    %384 = arith.negf %383 : vector<2x4xf32>
    %385 = math.exp %384 : vector<2x4xf32>
    %cst_26 = arith.constant 1.000000e+00 : f32
    %386 = vector.broadcast %cst_26 : f32 to vector<2x4xf32>
    %387 = arith.addf %386, %385 : vector<2x4xf32>
    %388 = arith.divf %386, %387 : vector<2x4xf32>
    %389 = math.tanh %383 : vector<2x4xf32>
    %390 = vector.extract_strided_slice %388 {offsets = [0, 0], sizes = [2, 1], strides = [1, 1]} : vector<2x4xf32> to vector<2x1xf32>
    %391 = vector.extract_strided_slice %388 {offsets = [0, 1], sizes = [2, 1], strides = [1, 1]} : vector<2x4xf32> to vector<2x1xf32>
    %392 = vector.extract_strided_slice %389 {offsets = [0, 2], sizes = [2, 1], strides = [1, 1]} : vector<2x4xf32> to vector<2x1xf32>
    %393 = vector.extract_strided_slice %388 {offsets = [0, 3], sizes = [2, 1], strides = [1, 1]} : vector<2x4xf32> to vector<2x1xf32>
    %394 = arith.mulf %391, %362 : vector<2x1xf32>
    %395 = arith.mulf %390, %392 : vector<2x1xf32>
    %396 = arith.addf %394, %395 : vector<2x1xf32>
    %397 = math.tanh %396 : vector<2x1xf32>
    %398 = arith.mulf %393, %397 : vector<2x1xf32>
    %399 = vector.extract_strided_slice %12 {offsets = [0, 0], sizes = [2, 1], strides = [1, 1]} : vector<2x4xf32> to vector<2x1xf32>
    %400 = vector.broadcast %399 : vector<2x1xf32> to vector<2x4xf32>
    %401 = arith.mulf %400, %317 : vector<2x4xf32>
    %402 = arith.addf %314, %401 : vector<2x4xf32>
    %403 = vector.extract_strided_slice %12 {offsets = [0, 1], sizes = [2, 1], strides = [1, 1]} : vector<2x4xf32> to vector<2x1xf32>
    %404 = vector.broadcast %403 : vector<2x1xf32> to vector<2x4xf32>
    %405 = arith.mulf %404, %320 : vector<2x4xf32>
    %406 = arith.addf %402, %405 : vector<2x4xf32>
    %407 = vector.extract_strided_slice %12 {offsets = [0, 2], sizes = [2, 1], strides = [1, 1]} : vector<2x4xf32> to vector<2x1xf32>
    %408 = vector.broadcast %407 : vector<2x1xf32> to vector<2x4xf32>
    %409 = arith.mulf %408, %323 : vector<2x4xf32>
    %410 = arith.addf %406, %409 : vector<2x4xf32>
    %411 = vector.extract_strided_slice %12 {offsets = [0, 3], sizes = [2, 1], strides = [1, 1]} : vector<2x4xf32> to vector<2x1xf32>
    %412 = vector.broadcast %411 : vector<2x1xf32> to vector<2x4xf32>
    %413 = arith.mulf %412, %326 : vector<2x4xf32>
    %414 = arith.addf %410, %413 : vector<2x4xf32>
    %415 = vector.broadcast %398 : vector<2x1xf32> to vector<2x4xf32>
    %416 = arith.mulf %415, %328 : vector<2x4xf32>
    %417 = arith.addf %414, %416 : vector<2x4xf32>
    %418 = arith.negf %417 : vector<2x4xf32>
    %419 = math.exp %418 : vector<2x4xf32>
    %cst_27 = arith.constant 1.000000e+00 : f32
    %420 = vector.broadcast %cst_27 : f32 to vector<2x4xf32>
    %421 = arith.addf %420, %419 : vector<2x4xf32>
    %422 = arith.divf %420, %421 : vector<2x4xf32>
    %423 = math.tanh %417 : vector<2x4xf32>
    %424 = vector.extract_strided_slice %422 {offsets = [0, 0], sizes = [2, 1], strides = [1, 1]} : vector<2x4xf32> to vector<2x1xf32>
    %425 = vector.extract_strided_slice %422 {offsets = [0, 1], sizes = [2, 1], strides = [1, 1]} : vector<2x4xf32> to vector<2x1xf32>
    %426 = vector.extract_strided_slice %423 {offsets = [0, 2], sizes = [2, 1], strides = [1, 1]} : vector<2x4xf32> to vector<2x1xf32>
    %427 = vector.extract_strided_slice %422 {offsets = [0, 3], sizes = [2, 1], strides = [1, 1]} : vector<2x4xf32> to vector<2x1xf32>
    %428 = arith.mulf %425, %396 : vector<2x1xf32>
    %429 = arith.mulf %424, %426 : vector<2x1xf32>
    %430 = arith.addf %428, %429 : vector<2x1xf32>
    %431 = math.tanh %430 : vector<2x1xf32>
    %432 = arith.mulf %427, %431 : vector<2x1xf32>
    %433 = vector.extract_strided_slice %10 {offsets = [0, 0], sizes = [2, 1], strides = [1, 1]} : vector<2x4xf32> to vector<2x1xf32>
    %434 = vector.broadcast %433 : vector<2x1xf32> to vector<2x4xf32>
    %435 = arith.mulf %434, %317 : vector<2x4xf32>
    %436 = arith.addf %314, %435 : vector<2x4xf32>
    %437 = vector.extract_strided_slice %10 {offsets = [0, 1], sizes = [2, 1], strides = [1, 1]} : vector<2x4xf32> to vector<2x1xf32>
    %438 = vector.broadcast %437 : vector<2x1xf32> to vector<2x4xf32>
    %439 = arith.mulf %438, %320 : vector<2x4xf32>
    %440 = arith.addf %436, %439 : vector<2x4xf32>
    %441 = vector.extract_strided_slice %10 {offsets = [0, 2], sizes = [2, 1], strides = [1, 1]} : vector<2x4xf32> to vector<2x1xf32>
    %442 = vector.broadcast %441 : vector<2x1xf32> to vector<2x4xf32>
    %443 = arith.mulf %442, %323 : vector<2x4xf32>
    %444 = arith.addf %440, %443 : vector<2x4xf32>
    %445 = vector.extract_strided_slice %10 {offsets = [0, 3], sizes = [2, 1], strides = [1, 1]} : vector<2x4xf32> to vector<2x1xf32>
    %446 = vector.broadcast %445 : vector<2x1xf32> to vector<2x4xf32>
    %447 = arith.mulf %446, %326 : vector<2x4xf32>
    %448 = arith.addf %444, %447 : vector<2x4xf32>
    %449 = vector.broadcast %432 : vector<2x1xf32> to vector<2x4xf32>
    %450 = arith.mulf %449, %328 : vector<2x4xf32>
    %451 = arith.addf %448, %450 : vector<2x4xf32>
    %452 = arith.negf %451 : vector<2x4xf32>
    %453 = math.exp %452 : vector<2x4xf32>
    %cst_28 = arith.constant 1.000000e+00 : f32
    %454 = vector.broadcast %cst_28 : f32 to vector<2x4xf32>
    %455 = arith.addf %454, %453 : vector<2x4xf32>
    %456 = arith.divf %454, %455 : vector<2x4xf32>
    %457 = math.tanh %451 : vector<2x4xf32>
    %458 = vector.extract_strided_slice %456 {offsets = [0, 0], sizes = [2, 1], strides = [1, 1]} : vector<2x4xf32> to vector<2x1xf32>
    %459 = vector.extract_strided_slice %456 {offsets = [0, 1], sizes = [2, 1], strides = [1, 1]} : vector<2x4xf32> to vector<2x1xf32>
    %460 = vector.extract_strided_slice %457 {offsets = [0, 2], sizes = [2, 1], strides = [1, 1]} : vector<2x4xf32> to vector<2x1xf32>
    %461 = vector.extract_strided_slice %456 {offsets = [0, 3], sizes = [2, 1], strides = [1, 1]} : vector<2x4xf32> to vector<2x1xf32>
    %462 = arith.mulf %459, %430 : vector<2x1xf32>
    %463 = arith.mulf %458, %460 : vector<2x1xf32>
    %464 = arith.addf %462, %463 : vector<2x1xf32>
    %465 = math.tanh %464 : vector<2x1xf32>
    %466 = arith.mulf %461, %465 : vector<2x1xf32>
    %467 = vector.extract_strided_slice %8 {offsets = [0, 0], sizes = [2, 1], strides = [1, 1]} : vector<2x4xf32> to vector<2x1xf32>
    %468 = vector.broadcast %467 : vector<2x1xf32> to vector<2x4xf32>
    %469 = arith.mulf %468, %317 : vector<2x4xf32>
    %470 = arith.addf %314, %469 : vector<2x4xf32>
    %471 = vector.extract_strided_slice %8 {offsets = [0, 1], sizes = [2, 1], strides = [1, 1]} : vector<2x4xf32> to vector<2x1xf32>
    %472 = vector.broadcast %471 : vector<2x1xf32> to vector<2x4xf32>
    %473 = arith.mulf %472, %320 : vector<2x4xf32>
    %474 = arith.addf %470, %473 : vector<2x4xf32>
    %475 = vector.extract_strided_slice %8 {offsets = [0, 2], sizes = [2, 1], strides = [1, 1]} : vector<2x4xf32> to vector<2x1xf32>
    %476 = vector.broadcast %475 : vector<2x1xf32> to vector<2x4xf32>
    %477 = arith.mulf %476, %323 : vector<2x4xf32>
    %478 = arith.addf %474, %477 : vector<2x4xf32>
    %479 = vector.extract_strided_slice %8 {offsets = [0, 3], sizes = [2, 1], strides = [1, 1]} : vector<2x4xf32> to vector<2x1xf32>
    %480 = vector.broadcast %479 : vector<2x1xf32> to vector<2x4xf32>
    %481 = arith.mulf %480, %326 : vector<2x4xf32>
    %482 = arith.addf %478, %481 : vector<2x4xf32>
    %483 = vector.broadcast %466 : vector<2x1xf32> to vector<2x4xf32>
    %484 = arith.mulf %483, %328 : vector<2x4xf32>
    %485 = arith.addf %482, %484 : vector<2x4xf32>
    %486 = arith.negf %485 : vector<2x4xf32>
    %487 = math.exp %486 : vector<2x4xf32>
    %cst_29 = arith.constant 1.000000e+00 : f32
    %488 = vector.broadcast %cst_29 : f32 to vector<2x4xf32>
    %489 = arith.addf %488, %487 : vector<2x4xf32>
    %490 = arith.divf %488, %489 : vector<2x4xf32>
    %491 = math.tanh %485 : vector<2x4xf32>
    %492 = vector.extract_strided_slice %490 {offsets = [0, 0], sizes = [2, 1], strides = [1, 1]} : vector<2x4xf32> to vector<2x1xf32>
    %493 = vector.extract_strided_slice %490 {offsets = [0, 1], sizes = [2, 1], strides = [1, 1]} : vector<2x4xf32> to vector<2x1xf32>
    %494 = vector.extract_strided_slice %491 {offsets = [0, 2], sizes = [2, 1], strides = [1, 1]} : vector<2x4xf32> to vector<2x1xf32>
    %495 = vector.extract_strided_slice %490 {offsets = [0, 3], sizes = [2, 1], strides = [1, 1]} : vector<2x4xf32> to vector<2x1xf32>
    %496 = arith.mulf %493, %464 : vector<2x1xf32>
    %497 = arith.mulf %492, %494 : vector<2x1xf32>
    %498 = arith.addf %496, %497 : vector<2x1xf32>
    %499 = math.tanh %498 : vector<2x1xf32>
    %500 = arith.mulf %495, %499 : vector<2x1xf32>
    %501 = vector.extract_strided_slice %6 {offsets = [0, 0], sizes = [2, 1], strides = [1, 1]} : vector<2x4xf32> to vector<2x1xf32>
    %502 = vector.broadcast %501 : vector<2x1xf32> to vector<2x4xf32>
    %503 = arith.mulf %502, %317 : vector<2x4xf32>
    %504 = arith.addf %314, %503 : vector<2x4xf32>
    %505 = vector.extract_strided_slice %6 {offsets = [0, 1], sizes = [2, 1], strides = [1, 1]} : vector<2x4xf32> to vector<2x1xf32>
    %506 = vector.broadcast %505 : vector<2x1xf32> to vector<2x4xf32>
    %507 = arith.mulf %506, %320 : vector<2x4xf32>
    %508 = arith.addf %504, %507 : vector<2x4xf32>
    %509 = vector.extract_strided_slice %6 {offsets = [0, 2], sizes = [2, 1], strides = [1, 1]} : vector<2x4xf32> to vector<2x1xf32>
    %510 = vector.broadcast %509 : vector<2x1xf32> to vector<2x4xf32>
    %511 = arith.mulf %510, %323 : vector<2x4xf32>
    %512 = arith.addf %508, %511 : vector<2x4xf32>
    %513 = vector.extract_strided_slice %6 {offsets = [0, 3], sizes = [2, 1], strides = [1, 1]} : vector<2x4xf32> to vector<2x1xf32>
    %514 = vector.broadcast %513 : vector<2x1xf32> to vector<2x4xf32>
    %515 = arith.mulf %514, %326 : vector<2x4xf32>
    %516 = arith.addf %512, %515 : vector<2x4xf32>
    %517 = vector.broadcast %500 : vector<2x1xf32> to vector<2x4xf32>
    %518 = arith.mulf %517, %328 : vector<2x4xf32>
    %519 = arith.addf %516, %518 : vector<2x4xf32>
    %520 = arith.negf %519 : vector<2x4xf32>
    %521 = math.exp %520 : vector<2x4xf32>
    %cst_30 = arith.constant 1.000000e+00 : f32
    %522 = vector.broadcast %cst_30 : f32 to vector<2x4xf32>
    %523 = arith.addf %522, %521 : vector<2x4xf32>
    %524 = arith.divf %522, %523 : vector<2x4xf32>
    %525 = math.tanh %519 : vector<2x4xf32>
    %526 = vector.extract_strided_slice %524 {offsets = [0, 0], sizes = [2, 1], strides = [1, 1]} : vector<2x4xf32> to vector<2x1xf32>
    %527 = vector.extract_strided_slice %524 {offsets = [0, 1], sizes = [2, 1], strides = [1, 1]} : vector<2x4xf32> to vector<2x1xf32>
    %528 = vector.extract_strided_slice %525 {offsets = [0, 2], sizes = [2, 1], strides = [1, 1]} : vector<2x4xf32> to vector<2x1xf32>
    %529 = vector.extract_strided_slice %524 {offsets = [0, 3], sizes = [2, 1], strides = [1, 1]} : vector<2x4xf32> to vector<2x1xf32>
    %530 = arith.mulf %527, %498 : vector<2x1xf32>
    %531 = arith.mulf %526, %528 : vector<2x1xf32>
    %532 = arith.addf %530, %531 : vector<2x1xf32>
    %533 = math.tanh %532 : vector<2x1xf32>
    %534 = arith.mulf %529, %533 : vector<2x1xf32>
    %535 = vector.extract_strided_slice %4 {offsets = [0, 0], sizes = [2, 1], strides = [1, 1]} : vector<2x4xf32> to vector<2x1xf32>
    %536 = vector.broadcast %535 : vector<2x1xf32> to vector<2x4xf32>
    %537 = arith.mulf %536, %317 : vector<2x4xf32>
    %538 = arith.addf %314, %537 : vector<2x4xf32>
    %539 = vector.extract_strided_slice %4 {offsets = [0, 1], sizes = [2, 1], strides = [1, 1]} : vector<2x4xf32> to vector<2x1xf32>
    %540 = vector.broadcast %539 : vector<2x1xf32> to vector<2x4xf32>
    %541 = arith.mulf %540, %320 : vector<2x4xf32>
    %542 = arith.addf %538, %541 : vector<2x4xf32>
    %543 = vector.extract_strided_slice %4 {offsets = [0, 2], sizes = [2, 1], strides = [1, 1]} : vector<2x4xf32> to vector<2x1xf32>
    %544 = vector.broadcast %543 : vector<2x1xf32> to vector<2x4xf32>
    %545 = arith.mulf %544, %323 : vector<2x4xf32>
    %546 = arith.addf %542, %545 : vector<2x4xf32>
    %547 = vector.extract_strided_slice %4 {offsets = [0, 3], sizes = [2, 1], strides = [1, 1]} : vector<2x4xf32> to vector<2x1xf32>
    %548 = vector.broadcast %547 : vector<2x1xf32> to vector<2x4xf32>
    %549 = arith.mulf %548, %326 : vector<2x4xf32>
    %550 = arith.addf %546, %549 : vector<2x4xf32>
    %551 = vector.broadcast %534 : vector<2x1xf32> to vector<2x4xf32>
    %552 = arith.mulf %551, %328 : vector<2x4xf32>
    %553 = arith.addf %550, %552 : vector<2x4xf32>
    %554 = arith.negf %553 : vector<2x4xf32>
    %555 = math.exp %554 : vector<2x4xf32>
    %cst_31 = arith.constant 1.000000e+00 : f32
    %556 = vector.broadcast %cst_31 : f32 to vector<2x4xf32>
    %557 = arith.addf %556, %555 : vector<2x4xf32>
    %558 = arith.divf %556, %557 : vector<2x4xf32>
    %559 = math.tanh %553 : vector<2x4xf32>
    %560 = vector.extract_strided_slice %558 {offsets = [0, 0], sizes = [2, 1], strides = [1, 1]} : vector<2x4xf32> to vector<2x1xf32>
    %561 = vector.extract_strided_slice %558 {offsets = [0, 1], sizes = [2, 1], strides = [1, 1]} : vector<2x4xf32> to vector<2x1xf32>
    %562 = vector.extract_strided_slice %559 {offsets = [0, 2], sizes = [2, 1], strides = [1, 1]} : vector<2x4xf32> to vector<2x1xf32>
    %563 = vector.extract_strided_slice %558 {offsets = [0, 3], sizes = [2, 1], strides = [1, 1]} : vector<2x4xf32> to vector<2x1xf32>
    %564 = arith.mulf %561, %532 : vector<2x1xf32>
    %565 = arith.mulf %560, %562 : vector<2x1xf32>
    %566 = arith.addf %564, %565 : vector<2x1xf32>
    %567 = math.tanh %566 : vector<2x1xf32>
    %568 = arith.mulf %563, %567 : vector<2x1xf32>
    %569 = vector.extract_strided_slice %2 {offsets = [0, 0], sizes = [2, 1], strides = [1, 1]} : vector<2x4xf32> to vector<2x1xf32>
    %570 = vector.broadcast %569 : vector<2x1xf32> to vector<2x4xf32>
    %571 = arith.mulf %570, %317 : vector<2x4xf32>
    %572 = arith.addf %314, %571 : vector<2x4xf32>
    %573 = vector.extract_strided_slice %2 {offsets = [0, 1], sizes = [2, 1], strides = [1, 1]} : vector<2x4xf32> to vector<2x1xf32>
    %574 = vector.broadcast %573 : vector<2x1xf32> to vector<2x4xf32>
    %575 = arith.mulf %574, %320 : vector<2x4xf32>
    %576 = arith.addf %572, %575 : vector<2x4xf32>
    %577 = vector.extract_strided_slice %2 {offsets = [0, 2], sizes = [2, 1], strides = [1, 1]} : vector<2x4xf32> to vector<2x1xf32>
    %578 = vector.broadcast %577 : vector<2x1xf32> to vector<2x4xf32>
    %579 = arith.mulf %578, %323 : vector<2x4xf32>
    %580 = arith.addf %576, %579 : vector<2x4xf32>
    %581 = vector.extract_strided_slice %2 {offsets = [0, 3], sizes = [2, 1], strides = [1, 1]} : vector<2x4xf32> to vector<2x1xf32>
    %582 = vector.broadcast %581 : vector<2x1xf32> to vector<2x4xf32>
    %583 = arith.mulf %582, %326 : vector<2x4xf32>
    %584 = arith.addf %580, %583 : vector<2x4xf32>
    %585 = vector.broadcast %568 : vector<2x1xf32> to vector<2x4xf32>
    %586 = arith.mulf %585, %328 : vector<2x4xf32>
    %587 = arith.addf %584, %586 : vector<2x4xf32>
    %588 = arith.negf %587 : vector<2x4xf32>
    %589 = math.exp %588 : vector<2x4xf32>
    %cst_32 = arith.constant 1.000000e+00 : f32
    %590 = vector.broadcast %cst_32 : f32 to vector<2x4xf32>
    %591 = arith.addf %590, %589 : vector<2x4xf32>
    %592 = arith.divf %590, %591 : vector<2x4xf32>
    %593 = math.tanh %587 : vector<2x4xf32>
    %594 = vector.extract_strided_slice %592 {offsets = [0, 0], sizes = [2, 1], strides = [1, 1]} : vector<2x4xf32> to vector<2x1xf32>
    %595 = vector.extract_strided_slice %592 {offsets = [0, 1], sizes = [2, 1], strides = [1, 1]} : vector<2x4xf32> to vector<2x1xf32>
    %596 = vector.extract_strided_slice %593 {offsets = [0, 2], sizes = [2, 1], strides = [1, 1]} : vector<2x4xf32> to vector<2x1xf32>
    %597 = vector.extract_strided_slice %592 {offsets = [0, 3], sizes = [2, 1], strides = [1, 1]} : vector<2x4xf32> to vector<2x1xf32>
    %598 = arith.mulf %595, %566 : vector<2x1xf32>
    %599 = arith.mulf %594, %596 : vector<2x1xf32>
    %600 = arith.addf %598, %599 : vector<2x1xf32>
    %601 = math.tanh %600 : vector<2x1xf32>
    %602 = arith.mulf %597, %601 : vector<2x1xf32>
    %c0_33 = arith.constant 0 : index
    %c0_34 = arith.constant 0 : index
    %603 = vector.load %arg7[%c0_33, %c0_34] : memref<1x4xf32, #tpu.memory_space<vmem>>, vector<1x4xf32>
    %c0_35 = arith.constant 0 : index
    %c0_36 = arith.constant 0 : index
    %604 = vector.load %arg8[%c0_35, %c0_36] : memref<1x4xf32, #tpu.memory_space<vmem>>, vector<1x4xf32>
    %c0_37 = arith.constant 0 : index
    %c0_38 = arith.constant 0 : index
    %605 = vector.load %arg9[%c0_37, %c0_38] : memref<1x4xf32, #tpu.memory_space<vmem>>, vector<1x4xf32>
    %c0_39 = arith.constant 0 : index
    %c0_40 = arith.constant 0 : index
    %606 = vector.load %arg10[%c0_39, %c0_40] : memref<1x4xf32, #tpu.memory_space<vmem>>, vector<1x4xf32>
    %c0_41 = arith.constant 0 : index
    %c0_42 = arith.constant 0 : index
    %607 = vector.load %arg11[%c0_41, %c0_42] : memref<1x4xf32, #tpu.memory_space<vmem>>, vector<1x4xf32>
    %c0_43 = arith.constant 0 : index
    %c0_44 = arith.constant 0 : index
    %608 = vector.load %arg12[%c0_43, %c0_44] : memref<1x4xf32, #tpu.memory_space<vmem>>, vector<1x4xf32>
    %c0_45 = arith.constant 0 : index
    %c0_46 = arith.constant 0 : index
    %609 = vector.load %arg13[%c0_45, %c0_46] : memref<1x4xf32, #tpu.memory_space<vmem>>, vector<1x4xf32>
    %c0_47 = arith.constant 0 : index
    %c0_48 = arith.constant 0 : index
    %610 = vector.load %arg14[%c0_47, %c0_48] : memref<1x4xf32, #tpu.memory_space<vmem>>, vector<1x4xf32>
    %611 = vector.shape_cast %606 : vector<1x4xf32> to vector<1x4xf32>
    %612 = vector.broadcast %611 : vector<1x4xf32> to vector<2x4xf32>
    %613 = vector.shape_cast %603 : vector<1x4xf32> to vector<1x4xf32>
    %614 = vector.broadcast %613 : vector<1x4xf32> to vector<2x4xf32>
    %615 = vector.shape_cast %604 : vector<1x4xf32> to vector<1x4xf32>
    %616 = vector.broadcast %615 : vector<1x4xf32> to vector<2x4xf32>
    %617 = vector.shape_cast %605 : vector<1x4xf32> to vector<1x4xf32>
    %618 = vector.broadcast %617 : vector<1x4xf32> to vector<2x4xf32>
    %cst_49 = arith.constant 0.000000e+00 : f32
    %619 = vector.broadcast %cst_49 : f32 to vector<2x1xf32>
    %cst_50 = arith.constant 0.000000e+00 : f32
    %620 = vector.broadcast %cst_50 : f32 to vector<2x1xf32>
    %621 = vector.broadcast %74 : vector<2x1xf32> to vector<2x4xf32>
    %622 = arith.mulf %621, %614 : vector<2x4xf32>
    %623 = arith.addf %612, %622 : vector<2x4xf32>
    %624 = vector.broadcast %602 : vector<2x1xf32> to vector<2x4xf32>
    %625 = arith.mulf %624, %616 : vector<2x4xf32>
    %626 = arith.addf %623, %625 : vector<2x4xf32>
    %627 = vector.broadcast %619 : vector<2x1xf32> to vector<2x4xf32>
    %628 = arith.mulf %627, %618 : vector<2x4xf32>
    %629 = arith.addf %626, %628 : vector<2x4xf32>
    %630 = arith.negf %629 : vector<2x4xf32>
    %631 = math.exp %630 : vector<2x4xf32>
    %cst_51 = arith.constant 1.000000e+00 : f32
    %632 = vector.broadcast %cst_51 : f32 to vector<2x4xf32>
    %633 = arith.addf %632, %631 : vector<2x4xf32>
    %634 = arith.divf %632, %633 : vector<2x4xf32>
    %635 = math.tanh %629 : vector<2x4xf32>
    %636 = vector.extract_strided_slice %634 {offsets = [0, 0], sizes = [2, 1], strides = [1, 1]} : vector<2x4xf32> to vector<2x1xf32>
    %637 = vector.extract_strided_slice %634 {offsets = [0, 1], sizes = [2, 1], strides = [1, 1]} : vector<2x4xf32> to vector<2x1xf32>
    %638 = vector.extract_strided_slice %635 {offsets = [0, 2], sizes = [2, 1], strides = [1, 1]} : vector<2x4xf32> to vector<2x1xf32>
    %639 = vector.extract_strided_slice %634 {offsets = [0, 3], sizes = [2, 1], strides = [1, 1]} : vector<2x4xf32> to vector<2x1xf32>
    %640 = arith.mulf %637, %620 : vector<2x1xf32>
    %641 = arith.mulf %636, %638 : vector<2x1xf32>
    %642 = arith.addf %640, %641 : vector<2x1xf32>
    %643 = math.tanh %642 : vector<2x1xf32>
    %644 = arith.mulf %639, %643 : vector<2x1xf32>
    %645 = vector.broadcast %108 : vector<2x1xf32> to vector<2x4xf32>
    %646 = arith.mulf %645, %614 : vector<2x4xf32>
    %647 = arith.addf %612, %646 : vector<2x4xf32>
    %648 = vector.broadcast %568 : vector<2x1xf32> to vector<2x4xf32>
    %649 = arith.mulf %648, %616 : vector<2x4xf32>
    %650 = arith.addf %647, %649 : vector<2x4xf32>
    %651 = vector.broadcast %644 : vector<2x1xf32> to vector<2x4xf32>
    %652 = arith.mulf %651, %618 : vector<2x4xf32>
    %653 = arith.addf %650, %652 : vector<2x4xf32>
    %654 = arith.negf %653 : vector<2x4xf32>
    %655 = math.exp %654 : vector<2x4xf32>
    %cst_52 = arith.constant 1.000000e+00 : f32
    %656 = vector.broadcast %cst_52 : f32 to vector<2x4xf32>
    %657 = arith.addf %656, %655 : vector<2x4xf32>
    %658 = arith.divf %656, %657 : vector<2x4xf32>
    %659 = math.tanh %653 : vector<2x4xf32>
    %660 = vector.extract_strided_slice %658 {offsets = [0, 0], sizes = [2, 1], strides = [1, 1]} : vector<2x4xf32> to vector<2x1xf32>
    %661 = vector.extract_strided_slice %658 {offsets = [0, 1], sizes = [2, 1], strides = [1, 1]} : vector<2x4xf32> to vector<2x1xf32>
    %662 = vector.extract_strided_slice %659 {offsets = [0, 2], sizes = [2, 1], strides = [1, 1]} : vector<2x4xf32> to vector<2x1xf32>
    %663 = vector.extract_strided_slice %658 {offsets = [0, 3], sizes = [2, 1], strides = [1, 1]} : vector<2x4xf32> to vector<2x1xf32>
    %664 = arith.mulf %661, %642 : vector<2x1xf32>
    %665 = arith.mulf %660, %662 : vector<2x1xf32>
    %666 = arith.addf %664, %665 : vector<2x1xf32>
    %667 = math.tanh %666 : vector<2x1xf32>
    %668 = arith.mulf %663, %667 : vector<2x1xf32>
    %669 = vector.broadcast %142 : vector<2x1xf32> to vector<2x4xf32>
    %670 = arith.mulf %669, %614 : vector<2x4xf32>
    %671 = arith.addf %612, %670 : vector<2x4xf32>
    %672 = vector.broadcast %534 : vector<2x1xf32> to vector<2x4xf32>
    %673 = arith.mulf %672, %616 : vector<2x4xf32>
    %674 = arith.addf %671, %673 : vector<2x4xf32>
    %675 = vector.broadcast %668 : vector<2x1xf32> to vector<2x4xf32>
    %676 = arith.mulf %675, %618 : vector<2x4xf32>
    %677 = arith.addf %674, %676 : vector<2x4xf32>
    %678 = arith.negf %677 : vector<2x4xf32>
    %679 = math.exp %678 : vector<2x4xf32>
    %cst_53 = arith.constant 1.000000e+00 : f32
    %680 = vector.broadcast %cst_53 : f32 to vector<2x4xf32>
    %681 = arith.addf %680, %679 : vector<2x4xf32>
    %682 = arith.divf %680, %681 : vector<2x4xf32>
    %683 = math.tanh %677 : vector<2x4xf32>
    %684 = vector.extract_strided_slice %682 {offsets = [0, 0], sizes = [2, 1], strides = [1, 1]} : vector<2x4xf32> to vector<2x1xf32>
    %685 = vector.extract_strided_slice %682 {offsets = [0, 1], sizes = [2, 1], strides = [1, 1]} : vector<2x4xf32> to vector<2x1xf32>
    %686 = vector.extract_strided_slice %683 {offsets = [0, 2], sizes = [2, 1], strides = [1, 1]} : vector<2x4xf32> to vector<2x1xf32>
    %687 = vector.extract_strided_slice %682 {offsets = [0, 3], sizes = [2, 1], strides = [1, 1]} : vector<2x4xf32> to vector<2x1xf32>
    %688 = arith.mulf %685, %666 : vector<2x1xf32>
    %689 = arith.mulf %684, %686 : vector<2x1xf32>
    %690 = arith.addf %688, %689 : vector<2x1xf32>
    %691 = math.tanh %690 : vector<2x1xf32>
    %692 = arith.mulf %687, %691 : vector<2x1xf32>
    %693 = vector.broadcast %176 : vector<2x1xf32> to vector<2x4xf32>
    %694 = arith.mulf %693, %614 : vector<2x4xf32>
    %695 = arith.addf %612, %694 : vector<2x4xf32>
    %696 = vector.broadcast %500 : vector<2x1xf32> to vector<2x4xf32>
    %697 = arith.mulf %696, %616 : vector<2x4xf32>
    %698 = arith.addf %695, %697 : vector<2x4xf32>
    %699 = vector.broadcast %692 : vector<2x1xf32> to vector<2x4xf32>
    %700 = arith.mulf %699, %618 : vector<2x4xf32>
    %701 = arith.addf %698, %700 : vector<2x4xf32>
    %702 = arith.negf %701 : vector<2x4xf32>
    %703 = math.exp %702 : vector<2x4xf32>
    %cst_54 = arith.constant 1.000000e+00 : f32
    %704 = vector.broadcast %cst_54 : f32 to vector<2x4xf32>
    %705 = arith.addf %704, %703 : vector<2x4xf32>
    %706 = arith.divf %704, %705 : vector<2x4xf32>
    %707 = math.tanh %701 : vector<2x4xf32>
    %708 = vector.extract_strided_slice %706 {offsets = [0, 0], sizes = [2, 1], strides = [1, 1]} : vector<2x4xf32> to vector<2x1xf32>
    %709 = vector.extract_strided_slice %706 {offsets = [0, 1], sizes = [2, 1], strides = [1, 1]} : vector<2x4xf32> to vector<2x1xf32>
    %710 = vector.extract_strided_slice %707 {offsets = [0, 2], sizes = [2, 1], strides = [1, 1]} : vector<2x4xf32> to vector<2x1xf32>
    %711 = vector.extract_strided_slice %706 {offsets = [0, 3], sizes = [2, 1], strides = [1, 1]} : vector<2x4xf32> to vector<2x1xf32>
    %712 = arith.mulf %709, %690 : vector<2x1xf32>
    %713 = arith.mulf %708, %710 : vector<2x1xf32>
    %714 = arith.addf %712, %713 : vector<2x1xf32>
    %715 = math.tanh %714 : vector<2x1xf32>
    %716 = arith.mulf %711, %715 : vector<2x1xf32>
    %717 = vector.broadcast %210 : vector<2x1xf32> to vector<2x4xf32>
    %718 = arith.mulf %717, %614 : vector<2x4xf32>
    %719 = arith.addf %612, %718 : vector<2x4xf32>
    %720 = vector.broadcast %466 : vector<2x1xf32> to vector<2x4xf32>
    %721 = arith.mulf %720, %616 : vector<2x4xf32>
    %722 = arith.addf %719, %721 : vector<2x4xf32>
    %723 = vector.broadcast %716 : vector<2x1xf32> to vector<2x4xf32>
    %724 = arith.mulf %723, %618 : vector<2x4xf32>
    %725 = arith.addf %722, %724 : vector<2x4xf32>
    %726 = arith.negf %725 : vector<2x4xf32>
    %727 = math.exp %726 : vector<2x4xf32>
    %cst_55 = arith.constant 1.000000e+00 : f32
    %728 = vector.broadcast %cst_55 : f32 to vector<2x4xf32>
    %729 = arith.addf %728, %727 : vector<2x4xf32>
    %730 = arith.divf %728, %729 : vector<2x4xf32>
    %731 = math.tanh %725 : vector<2x4xf32>
    %732 = vector.extract_strided_slice %730 {offsets = [0, 0], sizes = [2, 1], strides = [1, 1]} : vector<2x4xf32> to vector<2x1xf32>
    %733 = vector.extract_strided_slice %730 {offsets = [0, 1], sizes = [2, 1], strides = [1, 1]} : vector<2x4xf32> to vector<2x1xf32>
    %734 = vector.extract_strided_slice %731 {offsets = [0, 2], sizes = [2, 1], strides = [1, 1]} : vector<2x4xf32> to vector<2x1xf32>
    %735 = vector.extract_strided_slice %730 {offsets = [0, 3], sizes = [2, 1], strides = [1, 1]} : vector<2x4xf32> to vector<2x1xf32>
    %736 = arith.mulf %733, %714 : vector<2x1xf32>
    %737 = arith.mulf %732, %734 : vector<2x1xf32>
    %738 = arith.addf %736, %737 : vector<2x1xf32>
    %739 = math.tanh %738 : vector<2x1xf32>
    %740 = arith.mulf %735, %739 : vector<2x1xf32>
    %741 = vector.broadcast %244 : vector<2x1xf32> to vector<2x4xf32>
    %742 = arith.mulf %741, %614 : vector<2x4xf32>
    %743 = arith.addf %612, %742 : vector<2x4xf32>
    %744 = vector.broadcast %432 : vector<2x1xf32> to vector<2x4xf32>
    %745 = arith.mulf %744, %616 : vector<2x4xf32>
    %746 = arith.addf %743, %745 : vector<2x4xf32>
    %747 = vector.broadcast %740 : vector<2x1xf32> to vector<2x4xf32>
    %748 = arith.mulf %747, %618 : vector<2x4xf32>
    %749 = arith.addf %746, %748 : vector<2x4xf32>
    %750 = arith.negf %749 : vector<2x4xf32>
    %751 = math.exp %750 : vector<2x4xf32>
    %cst_56 = arith.constant 1.000000e+00 : f32
    %752 = vector.broadcast %cst_56 : f32 to vector<2x4xf32>
    %753 = arith.addf %752, %751 : vector<2x4xf32>
    %754 = arith.divf %752, %753 : vector<2x4xf32>
    %755 = math.tanh %749 : vector<2x4xf32>
    %756 = vector.extract_strided_slice %754 {offsets = [0, 0], sizes = [2, 1], strides = [1, 1]} : vector<2x4xf32> to vector<2x1xf32>
    %757 = vector.extract_strided_slice %754 {offsets = [0, 1], sizes = [2, 1], strides = [1, 1]} : vector<2x4xf32> to vector<2x1xf32>
    %758 = vector.extract_strided_slice %755 {offsets = [0, 2], sizes = [2, 1], strides = [1, 1]} : vector<2x4xf32> to vector<2x1xf32>
    %759 = vector.extract_strided_slice %754 {offsets = [0, 3], sizes = [2, 1], strides = [1, 1]} : vector<2x4xf32> to vector<2x1xf32>
    %760 = arith.mulf %757, %738 : vector<2x1xf32>
    %761 = arith.mulf %756, %758 : vector<2x1xf32>
    %762 = arith.addf %760, %761 : vector<2x1xf32>
    %763 = math.tanh %762 : vector<2x1xf32>
    %764 = arith.mulf %759, %763 : vector<2x1xf32>
    %765 = vector.broadcast %278 : vector<2x1xf32> to vector<2x4xf32>
    %766 = arith.mulf %765, %614 : vector<2x4xf32>
    %767 = arith.addf %612, %766 : vector<2x4xf32>
    %768 = vector.broadcast %398 : vector<2x1xf32> to vector<2x4xf32>
    %769 = arith.mulf %768, %616 : vector<2x4xf32>
    %770 = arith.addf %767, %769 : vector<2x4xf32>
    %771 = vector.broadcast %764 : vector<2x1xf32> to vector<2x4xf32>
    %772 = arith.mulf %771, %618 : vector<2x4xf32>
    %773 = arith.addf %770, %772 : vector<2x4xf32>
    %774 = arith.negf %773 : vector<2x4xf32>
    %775 = math.exp %774 : vector<2x4xf32>
    %cst_57 = arith.constant 1.000000e+00 : f32
    %776 = vector.broadcast %cst_57 : f32 to vector<2x4xf32>
    %777 = arith.addf %776, %775 : vector<2x4xf32>
    %778 = arith.divf %776, %777 : vector<2x4xf32>
    %779 = math.tanh %773 : vector<2x4xf32>
    %780 = vector.extract_strided_slice %778 {offsets = [0, 0], sizes = [2, 1], strides = [1, 1]} : vector<2x4xf32> to vector<2x1xf32>
    %781 = vector.extract_strided_slice %778 {offsets = [0, 1], sizes = [2, 1], strides = [1, 1]} : vector<2x4xf32> to vector<2x1xf32>
    %782 = vector.extract_strided_slice %779 {offsets = [0, 2], sizes = [2, 1], strides = [1, 1]} : vector<2x4xf32> to vector<2x1xf32>
    %783 = vector.extract_strided_slice %778 {offsets = [0, 3], sizes = [2, 1], strides = [1, 1]} : vector<2x4xf32> to vector<2x1xf32>
    %784 = arith.mulf %781, %762 : vector<2x1xf32>
    %785 = arith.mulf %780, %782 : vector<2x1xf32>
    %786 = arith.addf %784, %785 : vector<2x1xf32>
    %787 = math.tanh %786 : vector<2x1xf32>
    %788 = arith.mulf %783, %787 : vector<2x1xf32>
    %789 = vector.broadcast %312 : vector<2x1xf32> to vector<2x4xf32>
    %790 = arith.mulf %789, %614 : vector<2x4xf32>
    %791 = arith.addf %612, %790 : vector<2x4xf32>
    %792 = vector.broadcast %364 : vector<2x1xf32> to vector<2x4xf32>
    %793 = arith.mulf %792, %616 : vector<2x4xf32>
    %794 = arith.addf %791, %793 : vector<2x4xf32>
    %795 = vector.broadcast %788 : vector<2x1xf32> to vector<2x4xf32>
    %796 = arith.mulf %795, %618 : vector<2x4xf32>
    %797 = arith.addf %794, %796 : vector<2x4xf32>
    %798 = arith.negf %797 : vector<2x4xf32>
    %799 = math.exp %798 : vector<2x4xf32>
    %cst_58 = arith.constant 1.000000e+00 : f32
    %800 = vector.broadcast %cst_58 : f32 to vector<2x4xf32>
    %801 = arith.addf %800, %799 : vector<2x4xf32>
    %802 = arith.divf %800, %801 : vector<2x4xf32>
    %803 = math.tanh %797 : vector<2x4xf32>
    %804 = vector.extract_strided_slice %802 {offsets = [0, 0], sizes = [2, 1], strides = [1, 1]} : vector<2x4xf32> to vector<2x1xf32>
    %805 = vector.extract_strided_slice %802 {offsets = [0, 1], sizes = [2, 1], strides = [1, 1]} : vector<2x4xf32> to vector<2x1xf32>
    %806 = vector.extract_strided_slice %803 {offsets = [0, 2], sizes = [2, 1], strides = [1, 1]} : vector<2x4xf32> to vector<2x1xf32>
    %807 = vector.extract_strided_slice %802 {offsets = [0, 3], sizes = [2, 1], strides = [1, 1]} : vector<2x4xf32> to vector<2x1xf32>
    %808 = arith.mulf %805, %786 : vector<2x1xf32>
    %809 = arith.mulf %804, %806 : vector<2x1xf32>
    %810 = arith.addf %808, %809 : vector<2x1xf32>
    %811 = math.tanh %810 : vector<2x1xf32>
    %812 = arith.mulf %807, %811 : vector<2x1xf32>
    %813 = vector.shape_cast %610 : vector<1x4xf32> to vector<1x4xf32>
    %814 = vector.broadcast %813 : vector<1x4xf32> to vector<2x4xf32>
    %815 = vector.shape_cast %607 : vector<1x4xf32> to vector<1x4xf32>
    %816 = vector.broadcast %815 : vector<1x4xf32> to vector<2x4xf32>
    %817 = vector.shape_cast %608 : vector<1x4xf32> to vector<1x4xf32>
    %818 = vector.broadcast %817 : vector<1x4xf32> to vector<2x4xf32>
    %819 = vector.shape_cast %609 : vector<1x4xf32> to vector<1x4xf32>
    %820 = vector.broadcast %819 : vector<1x4xf32> to vector<2x4xf32>
    %cst_59 = arith.constant 0.000000e+00 : f32
    %821 = vector.broadcast %cst_59 : f32 to vector<2x1xf32>
    %cst_60 = arith.constant 0.000000e+00 : f32
    %822 = vector.broadcast %cst_60 : f32 to vector<2x1xf32>
    %823 = vector.broadcast %312 : vector<2x1xf32> to vector<2x4xf32>
    %824 = arith.mulf %823, %816 : vector<2x4xf32>
    %825 = arith.addf %814, %824 : vector<2x4xf32>
    %826 = vector.broadcast %364 : vector<2x1xf32> to vector<2x4xf32>
    %827 = arith.mulf %826, %818 : vector<2x4xf32>
    %828 = arith.addf %825, %827 : vector<2x4xf32>
    %829 = vector.broadcast %821 : vector<2x1xf32> to vector<2x4xf32>
    %830 = arith.mulf %829, %820 : vector<2x4xf32>
    %831 = arith.addf %828, %830 : vector<2x4xf32>
    %832 = arith.negf %831 : vector<2x4xf32>
    %833 = math.exp %832 : vector<2x4xf32>
    %cst_61 = arith.constant 1.000000e+00 : f32
    %834 = vector.broadcast %cst_61 : f32 to vector<2x4xf32>
    %835 = arith.addf %834, %833 : vector<2x4xf32>
    %836 = arith.divf %834, %835 : vector<2x4xf32>
    %837 = math.tanh %831 : vector<2x4xf32>
    %838 = vector.extract_strided_slice %836 {offsets = [0, 0], sizes = [2, 1], strides = [1, 1]} : vector<2x4xf32> to vector<2x1xf32>
    %839 = vector.extract_strided_slice %836 {offsets = [0, 1], sizes = [2, 1], strides = [1, 1]} : vector<2x4xf32> to vector<2x1xf32>
    %840 = vector.extract_strided_slice %837 {offsets = [0, 2], sizes = [2, 1], strides = [1, 1]} : vector<2x4xf32> to vector<2x1xf32>
    %841 = vector.extract_strided_slice %836 {offsets = [0, 3], sizes = [2, 1], strides = [1, 1]} : vector<2x4xf32> to vector<2x1xf32>
    %842 = arith.mulf %839, %822 : vector<2x1xf32>
    %843 = arith.mulf %838, %840 : vector<2x1xf32>
    %844 = arith.addf %842, %843 : vector<2x1xf32>
    %845 = math.tanh %844 : vector<2x1xf32>
    %846 = arith.mulf %841, %845 : vector<2x1xf32>
    %847 = vector.broadcast %278 : vector<2x1xf32> to vector<2x4xf32>
    %848 = arith.mulf %847, %816 : vector<2x4xf32>
    %849 = arith.addf %814, %848 : vector<2x4xf32>
    %850 = vector.broadcast %398 : vector<2x1xf32> to vector<2x4xf32>
    %851 = arith.mulf %850, %818 : vector<2x4xf32>
    %852 = arith.addf %849, %851 : vector<2x4xf32>
    %853 = vector.broadcast %846 : vector<2x1xf32> to vector<2x4xf32>
    %854 = arith.mulf %853, %820 : vector<2x4xf32>
    %855 = arith.addf %852, %854 : vector<2x4xf32>
    %856 = arith.negf %855 : vector<2x4xf32>
    %857 = math.exp %856 : vector<2x4xf32>
    %cst_62 = arith.constant 1.000000e+00 : f32
    %858 = vector.broadcast %cst_62 : f32 to vector<2x4xf32>
    %859 = arith.addf %858, %857 : vector<2x4xf32>
    %860 = arith.divf %858, %859 : vector<2x4xf32>
    %861 = math.tanh %855 : vector<2x4xf32>
    %862 = vector.extract_strided_slice %860 {offsets = [0, 0], sizes = [2, 1], strides = [1, 1]} : vector<2x4xf32> to vector<2x1xf32>
    %863 = vector.extract_strided_slice %860 {offsets = [0, 1], sizes = [2, 1], strides = [1, 1]} : vector<2x4xf32> to vector<2x1xf32>
    %864 = vector.extract_strided_slice %861 {offsets = [0, 2], sizes = [2, 1], strides = [1, 1]} : vector<2x4xf32> to vector<2x1xf32>
    %865 = vector.extract_strided_slice %860 {offsets = [0, 3], sizes = [2, 1], strides = [1, 1]} : vector<2x4xf32> to vector<2x1xf32>
    %866 = arith.mulf %863, %844 : vector<2x1xf32>
    %867 = arith.mulf %862, %864 : vector<2x1xf32>
    %868 = arith.addf %866, %867 : vector<2x1xf32>
    %869 = math.tanh %868 : vector<2x1xf32>
    %870 = arith.mulf %865, %869 : vector<2x1xf32>
    %871 = vector.broadcast %244 : vector<2x1xf32> to vector<2x4xf32>
    %872 = arith.mulf %871, %816 : vector<2x4xf32>
    %873 = arith.addf %814, %872 : vector<2x4xf32>
    %874 = vector.broadcast %432 : vector<2x1xf32> to vector<2x4xf32>
    %875 = arith.mulf %874, %818 : vector<2x4xf32>
    %876 = arith.addf %873, %875 : vector<2x4xf32>
    %877 = vector.broadcast %870 : vector<2x1xf32> to vector<2x4xf32>
    %878 = arith.mulf %877, %820 : vector<2x4xf32>
    %879 = arith.addf %876, %878 : vector<2x4xf32>
    %880 = arith.negf %879 : vector<2x4xf32>
    %881 = math.exp %880 : vector<2x4xf32>
    %cst_63 = arith.constant 1.000000e+00 : f32
    %882 = vector.broadcast %cst_63 : f32 to vector<2x4xf32>
    %883 = arith.addf %882, %881 : vector<2x4xf32>
    %884 = arith.divf %882, %883 : vector<2x4xf32>
    %885 = math.tanh %879 : vector<2x4xf32>
    %886 = vector.extract_strided_slice %884 {offsets = [0, 0], sizes = [2, 1], strides = [1, 1]} : vector<2x4xf32> to vector<2x1xf32>
    %887 = vector.extract_strided_slice %884 {offsets = [0, 1], sizes = [2, 1], strides = [1, 1]} : vector<2x4xf32> to vector<2x1xf32>
    %888 = vector.extract_strided_slice %885 {offsets = [0, 2], sizes = [2, 1], strides = [1, 1]} : vector<2x4xf32> to vector<2x1xf32>
    %889 = vector.extract_strided_slice %884 {offsets = [0, 3], sizes = [2, 1], strides = [1, 1]} : vector<2x4xf32> to vector<2x1xf32>
    %890 = arith.mulf %887, %868 : vector<2x1xf32>
    %891 = arith.mulf %886, %888 : vector<2x1xf32>
    %892 = arith.addf %890, %891 : vector<2x1xf32>
    %893 = math.tanh %892 : vector<2x1xf32>
    %894 = arith.mulf %889, %893 : vector<2x1xf32>
    %895 = vector.broadcast %210 : vector<2x1xf32> to vector<2x4xf32>
    %896 = arith.mulf %895, %816 : vector<2x4xf32>
    %897 = arith.addf %814, %896 : vector<2x4xf32>
    %898 = vector.broadcast %466 : vector<2x1xf32> to vector<2x4xf32>
    %899 = arith.mulf %898, %818 : vector<2x4xf32>
    %900 = arith.addf %897, %899 : vector<2x4xf32>
    %901 = vector.broadcast %894 : vector<2x1xf32> to vector<2x4xf32>
    %902 = arith.mulf %901, %820 : vector<2x4xf32>
    %903 = arith.addf %900, %902 : vector<2x4xf32>
    %904 = arith.negf %903 : vector<2x4xf32>
    %905 = math.exp %904 : vector<2x4xf32>
    %cst_64 = arith.constant 1.000000e+00 : f32
    %906 = vector.broadcast %cst_64 : f32 to vector<2x4xf32>
    %907 = arith.addf %906, %905 : vector<2x4xf32>
    %908 = arith.divf %906, %907 : vector<2x4xf32>
    %909 = math.tanh %903 : vector<2x4xf32>
    %910 = vector.extract_strided_slice %908 {offsets = [0, 0], sizes = [2, 1], strides = [1, 1]} : vector<2x4xf32> to vector<2x1xf32>
    %911 = vector.extract_strided_slice %908 {offsets = [0, 1], sizes = [2, 1], strides = [1, 1]} : vector<2x4xf32> to vector<2x1xf32>
    %912 = vector.extract_strided_slice %909 {offsets = [0, 2], sizes = [2, 1], strides = [1, 1]} : vector<2x4xf32> to vector<2x1xf32>
    %913 = vector.extract_strided_slice %908 {offsets = [0, 3], sizes = [2, 1], strides = [1, 1]} : vector<2x4xf32> to vector<2x1xf32>
    %914 = arith.mulf %911, %892 : vector<2x1xf32>
    %915 = arith.mulf %910, %912 : vector<2x1xf32>
    %916 = arith.addf %914, %915 : vector<2x1xf32>
    %917 = math.tanh %916 : vector<2x1xf32>
    %918 = arith.mulf %913, %917 : vector<2x1xf32>
    %919 = vector.broadcast %176 : vector<2x1xf32> to vector<2x4xf32>
    %920 = arith.mulf %919, %816 : vector<2x4xf32>
    %921 = arith.addf %814, %920 : vector<2x4xf32>
    %922 = vector.broadcast %500 : vector<2x1xf32> to vector<2x4xf32>
    %923 = arith.mulf %922, %818 : vector<2x4xf32>
    %924 = arith.addf %921, %923 : vector<2x4xf32>
    %925 = vector.broadcast %918 : vector<2x1xf32> to vector<2x4xf32>
    %926 = arith.mulf %925, %820 : vector<2x4xf32>
    %927 = arith.addf %924, %926 : vector<2x4xf32>
    %928 = arith.negf %927 : vector<2x4xf32>
    %929 = math.exp %928 : vector<2x4xf32>
    %cst_65 = arith.constant 1.000000e+00 : f32
    %930 = vector.broadcast %cst_65 : f32 to vector<2x4xf32>
    %931 = arith.addf %930, %929 : vector<2x4xf32>
    %932 = arith.divf %930, %931 : vector<2x4xf32>
    %933 = math.tanh %927 : vector<2x4xf32>
    %934 = vector.extract_strided_slice %932 {offsets = [0, 0], sizes = [2, 1], strides = [1, 1]} : vector<2x4xf32> to vector<2x1xf32>
    %935 = vector.extract_strided_slice %932 {offsets = [0, 1], sizes = [2, 1], strides = [1, 1]} : vector<2x4xf32> to vector<2x1xf32>
    %936 = vector.extract_strided_slice %933 {offsets = [0, 2], sizes = [2, 1], strides = [1, 1]} : vector<2x4xf32> to vector<2x1xf32>
    %937 = vector.extract_strided_slice %932 {offsets = [0, 3], sizes = [2, 1], strides = [1, 1]} : vector<2x4xf32> to vector<2x1xf32>
    %938 = arith.mulf %935, %916 : vector<2x1xf32>
    %939 = arith.mulf %934, %936 : vector<2x1xf32>
    %940 = arith.addf %938, %939 : vector<2x1xf32>
    %941 = math.tanh %940 : vector<2x1xf32>
    %942 = arith.mulf %937, %941 : vector<2x1xf32>
    %943 = vector.broadcast %142 : vector<2x1xf32> to vector<2x4xf32>
    %944 = arith.mulf %943, %816 : vector<2x4xf32>
    %945 = arith.addf %814, %944 : vector<2x4xf32>
    %946 = vector.broadcast %534 : vector<2x1xf32> to vector<2x4xf32>
    %947 = arith.mulf %946, %818 : vector<2x4xf32>
    %948 = arith.addf %945, %947 : vector<2x4xf32>
    %949 = vector.broadcast %942 : vector<2x1xf32> to vector<2x4xf32>
    %950 = arith.mulf %949, %820 : vector<2x4xf32>
    %951 = arith.addf %948, %950 : vector<2x4xf32>
    %952 = arith.negf %951 : vector<2x4xf32>
    %953 = math.exp %952 : vector<2x4xf32>
    %cst_66 = arith.constant 1.000000e+00 : f32
    %954 = vector.broadcast %cst_66 : f32 to vector<2x4xf32>
    %955 = arith.addf %954, %953 : vector<2x4xf32>
    %956 = arith.divf %954, %955 : vector<2x4xf32>
    %957 = math.tanh %951 : vector<2x4xf32>
    %958 = vector.extract_strided_slice %956 {offsets = [0, 0], sizes = [2, 1], strides = [1, 1]} : vector<2x4xf32> to vector<2x1xf32>
    %959 = vector.extract_strided_slice %956 {offsets = [0, 1], sizes = [2, 1], strides = [1, 1]} : vector<2x4xf32> to vector<2x1xf32>
    %960 = vector.extract_strided_slice %957 {offsets = [0, 2], sizes = [2, 1], strides = [1, 1]} : vector<2x4xf32> to vector<2x1xf32>
    %961 = vector.extract_strided_slice %956 {offsets = [0, 3], sizes = [2, 1], strides = [1, 1]} : vector<2x4xf32> to vector<2x1xf32>
    %962 = arith.mulf %959, %940 : vector<2x1xf32>
    %963 = arith.mulf %958, %960 : vector<2x1xf32>
    %964 = arith.addf %962, %963 : vector<2x1xf32>
    %965 = math.tanh %964 : vector<2x1xf32>
    %966 = arith.mulf %961, %965 : vector<2x1xf32>
    %967 = vector.broadcast %108 : vector<2x1xf32> to vector<2x4xf32>
    %968 = arith.mulf %967, %816 : vector<2x4xf32>
    %969 = arith.addf %814, %968 : vector<2x4xf32>
    %970 = vector.broadcast %568 : vector<2x1xf32> to vector<2x4xf32>
    %971 = arith.mulf %970, %818 : vector<2x4xf32>
    %972 = arith.addf %969, %971 : vector<2x4xf32>
    %973 = vector.broadcast %966 : vector<2x1xf32> to vector<2x4xf32>
    %974 = arith.mulf %973, %820 : vector<2x4xf32>
    %975 = arith.addf %972, %974 : vector<2x4xf32>
    %976 = arith.negf %975 : vector<2x4xf32>
    %977 = math.exp %976 : vector<2x4xf32>
    %cst_67 = arith.constant 1.000000e+00 : f32
    %978 = vector.broadcast %cst_67 : f32 to vector<2x4xf32>
    %979 = arith.addf %978, %977 : vector<2x4xf32>
    %980 = arith.divf %978, %979 : vector<2x4xf32>
    %981 = math.tanh %975 : vector<2x4xf32>
    %982 = vector.extract_strided_slice %980 {offsets = [0, 0], sizes = [2, 1], strides = [1, 1]} : vector<2x4xf32> to vector<2x1xf32>
    %983 = vector.extract_strided_slice %980 {offsets = [0, 1], sizes = [2, 1], strides = [1, 1]} : vector<2x4xf32> to vector<2x1xf32>
    %984 = vector.extract_strided_slice %981 {offsets = [0, 2], sizes = [2, 1], strides = [1, 1]} : vector<2x4xf32> to vector<2x1xf32>
    %985 = vector.extract_strided_slice %980 {offsets = [0, 3], sizes = [2, 1], strides = [1, 1]} : vector<2x4xf32> to vector<2x1xf32>
    %986 = arith.mulf %983, %964 : vector<2x1xf32>
    %987 = arith.mulf %982, %984 : vector<2x1xf32>
    %988 = arith.addf %986, %987 : vector<2x1xf32>
    %989 = math.tanh %988 : vector<2x1xf32>
    %990 = arith.mulf %985, %989 : vector<2x1xf32>
    %991 = vector.broadcast %74 : vector<2x1xf32> to vector<2x4xf32>
    %992 = arith.mulf %991, %816 : vector<2x4xf32>
    %993 = arith.addf %814, %992 : vector<2x4xf32>
    %994 = vector.broadcast %602 : vector<2x1xf32> to vector<2x4xf32>
    %995 = arith.mulf %994, %818 : vector<2x4xf32>
    %996 = arith.addf %993, %995 : vector<2x4xf32>
    %997 = vector.broadcast %990 : vector<2x1xf32> to vector<2x4xf32>
    %998 = arith.mulf %997, %820 : vector<2x4xf32>
    %999 = arith.addf %996, %998 : vector<2x4xf32>
    %1000 = arith.negf %999 : vector<2x4xf32>
    %1001 = math.exp %1000 : vector<2x4xf32>
    %cst_68 = arith.constant 1.000000e+00 : f32
    %1002 = vector.broadcast %cst_68 : f32 to vector<2x4xf32>
    %1003 = arith.addf %1002, %1001 : vector<2x4xf32>
    %1004 = arith.divf %1002, %1003 : vector<2x4xf32>
    %1005 = math.tanh %999 : vector<2x4xf32>
    %1006 = vector.extract_strided_slice %1004 {offsets = [0, 0], sizes = [2, 1], strides = [1, 1]} : vector<2x4xf32> to vector<2x1xf32>
    %1007 = vector.extract_strided_slice %1004 {offsets = [0, 1], sizes = [2, 1], strides = [1, 1]} : vector<2x4xf32> to vector<2x1xf32>
    %1008 = vector.extract_strided_slice %1005 {offsets = [0, 2], sizes = [2, 1], strides = [1, 1]} : vector<2x4xf32> to vector<2x1xf32>
    %1009 = vector.extract_strided_slice %1004 {offsets = [0, 3], sizes = [2, 1], strides = [1, 1]} : vector<2x4xf32> to vector<2x1xf32>
    %1010 = arith.mulf %1007, %988 : vector<2x1xf32>
    %1011 = arith.mulf %1006, %1008 : vector<2x1xf32>
    %1012 = arith.addf %1010, %1011 : vector<2x1xf32>
    %1013 = math.tanh %1012 : vector<2x1xf32>
    %1014 = arith.mulf %1009, %1013 : vector<2x1xf32>
    %c0_69 = arith.constant 0 : index
    %c0_70 = arith.constant 0 : index
    %1015 = vector.load %arg15[%c0_69, %c0_70] : memref<1x4xf32, #tpu.memory_space<vmem>>, vector<1x4xf32>
    %c0_71 = arith.constant 0 : index
    %c0_72 = arith.constant 0 : index
    %1016 = vector.load %arg16[%c0_71, %c0_72] : memref<1x4xf32, #tpu.memory_space<vmem>>, vector<1x4xf32>
    %c0_73 = arith.constant 0 : index
    %c0_74 = arith.constant 0 : index
    %1017 = vector.load %arg17[%c0_73, %c0_74] : memref<1x4xf32, #tpu.memory_space<vmem>>, vector<1x4xf32>
    %c0_75 = arith.constant 0 : index
    %c0_76 = arith.constant 0 : index
    %1018 = vector.load %arg18[%c0_75, %c0_76] : memref<1x4xf32, #tpu.memory_space<vmem>>, vector<1x4xf32>
    %1019 = vector.shape_cast %1018 : vector<1x4xf32> to vector<1x4xf32>
    %1020 = vector.broadcast %1019 : vector<1x4xf32> to vector<2x4xf32>
    %1021 = vector.shape_cast %1015 : vector<1x4xf32> to vector<1x4xf32>
    %1022 = vector.broadcast %1021 : vector<1x4xf32> to vector<2x4xf32>
    %1023 = vector.shape_cast %1016 : vector<1x4xf32> to vector<1x4xf32>
    %1024 = vector.broadcast %1023 : vector<1x4xf32> to vector<2x4xf32>
    %1025 = vector.shape_cast %1017 : vector<1x4xf32> to vector<1x4xf32>
    %1026 = vector.broadcast %1025 : vector<1x4xf32> to vector<2x4xf32>
    %cst_77 = arith.constant 0.000000e+00 : f32
    %1027 = vector.broadcast %cst_77 : f32 to vector<2x1xf32>
    %cst_78 = arith.constant 0.000000e+00 : f32
    %1028 = vector.broadcast %cst_78 : f32 to vector<2x1xf32>
    %1029 = vector.broadcast %644 : vector<2x1xf32> to vector<2x4xf32>
    %1030 = arith.mulf %1029, %1022 : vector<2x4xf32>
    %1031 = arith.addf %1020, %1030 : vector<2x4xf32>
    %1032 = vector.broadcast %1014 : vector<2x1xf32> to vector<2x4xf32>
    %1033 = arith.mulf %1032, %1024 : vector<2x4xf32>
    %1034 = arith.addf %1031, %1033 : vector<2x4xf32>
    %1035 = vector.broadcast %1027 : vector<2x1xf32> to vector<2x4xf32>
    %1036 = arith.mulf %1035, %1026 : vector<2x4xf32>
    %1037 = arith.addf %1034, %1036 : vector<2x4xf32>
    %1038 = arith.negf %1037 : vector<2x4xf32>
    %1039 = math.exp %1038 : vector<2x4xf32>
    %cst_79 = arith.constant 1.000000e+00 : f32
    %1040 = vector.broadcast %cst_79 : f32 to vector<2x4xf32>
    %1041 = arith.addf %1040, %1039 : vector<2x4xf32>
    %1042 = arith.divf %1040, %1041 : vector<2x4xf32>
    %1043 = math.tanh %1037 : vector<2x4xf32>
    %1044 = vector.extract_strided_slice %1042 {offsets = [0, 0], sizes = [2, 1], strides = [1, 1]} : vector<2x4xf32> to vector<2x1xf32>
    %1045 = vector.extract_strided_slice %1042 {offsets = [0, 1], sizes = [2, 1], strides = [1, 1]} : vector<2x4xf32> to vector<2x1xf32>
    %1046 = vector.extract_strided_slice %1043 {offsets = [0, 2], sizes = [2, 1], strides = [1, 1]} : vector<2x4xf32> to vector<2x1xf32>
    %1047 = vector.extract_strided_slice %1042 {offsets = [0, 3], sizes = [2, 1], strides = [1, 1]} : vector<2x4xf32> to vector<2x1xf32>
    %1048 = arith.mulf %1045, %1028 : vector<2x1xf32>
    %1049 = arith.mulf %1044, %1046 : vector<2x1xf32>
    %1050 = arith.addf %1048, %1049 : vector<2x1xf32>
    %1051 = math.tanh %1050 : vector<2x1xf32>
    %1052 = arith.mulf %1047, %1051 : vector<2x1xf32>
    %1053 = vector.broadcast %668 : vector<2x1xf32> to vector<2x4xf32>
    %1054 = arith.mulf %1053, %1022 : vector<2x4xf32>
    %1055 = arith.addf %1020, %1054 : vector<2x4xf32>
    %1056 = vector.broadcast %990 : vector<2x1xf32> to vector<2x4xf32>
    %1057 = arith.mulf %1056, %1024 : vector<2x4xf32>
    %1058 = arith.addf %1055, %1057 : vector<2x4xf32>
    %1059 = vector.broadcast %1052 : vector<2x1xf32> to vector<2x4xf32>
    %1060 = arith.mulf %1059, %1026 : vector<2x4xf32>
    %1061 = arith.addf %1058, %1060 : vector<2x4xf32>
    %1062 = arith.negf %1061 : vector<2x4xf32>
    %1063 = math.exp %1062 : vector<2x4xf32>
    %cst_80 = arith.constant 1.000000e+00 : f32
    %1064 = vector.broadcast %cst_80 : f32 to vector<2x4xf32>
    %1065 = arith.addf %1064, %1063 : vector<2x4xf32>
    %1066 = arith.divf %1064, %1065 : vector<2x4xf32>
    %1067 = math.tanh %1061 : vector<2x4xf32>
    %1068 = vector.extract_strided_slice %1066 {offsets = [0, 0], sizes = [2, 1], strides = [1, 1]} : vector<2x4xf32> to vector<2x1xf32>
    %1069 = vector.extract_strided_slice %1066 {offsets = [0, 1], sizes = [2, 1], strides = [1, 1]} : vector<2x4xf32> to vector<2x1xf32>
    %1070 = vector.extract_strided_slice %1067 {offsets = [0, 2], sizes = [2, 1], strides = [1, 1]} : vector<2x4xf32> to vector<2x1xf32>
    %1071 = vector.extract_strided_slice %1066 {offsets = [0, 3], sizes = [2, 1], strides = [1, 1]} : vector<2x4xf32> to vector<2x1xf32>
    %1072 = arith.mulf %1069, %1050 : vector<2x1xf32>
    %1073 = arith.mulf %1068, %1070 : vector<2x1xf32>
    %1074 = arith.addf %1072, %1073 : vector<2x1xf32>
    %1075 = math.tanh %1074 : vector<2x1xf32>
    %1076 = arith.mulf %1071, %1075 : vector<2x1xf32>
    %1077 = vector.broadcast %692 : vector<2x1xf32> to vector<2x4xf32>
    %1078 = arith.mulf %1077, %1022 : vector<2x4xf32>
    %1079 = arith.addf %1020, %1078 : vector<2x4xf32>
    %1080 = vector.broadcast %966 : vector<2x1xf32> to vector<2x4xf32>
    %1081 = arith.mulf %1080, %1024 : vector<2x4xf32>
    %1082 = arith.addf %1079, %1081 : vector<2x4xf32>
    %1083 = vector.broadcast %1076 : vector<2x1xf32> to vector<2x4xf32>
    %1084 = arith.mulf %1083, %1026 : vector<2x4xf32>
    %1085 = arith.addf %1082, %1084 : vector<2x4xf32>
    %1086 = arith.negf %1085 : vector<2x4xf32>
    %1087 = math.exp %1086 : vector<2x4xf32>
    %cst_81 = arith.constant 1.000000e+00 : f32
    %1088 = vector.broadcast %cst_81 : f32 to vector<2x4xf32>
    %1089 = arith.addf %1088, %1087 : vector<2x4xf32>
    %1090 = arith.divf %1088, %1089 : vector<2x4xf32>
    %1091 = math.tanh %1085 : vector<2x4xf32>
    %1092 = vector.extract_strided_slice %1090 {offsets = [0, 0], sizes = [2, 1], strides = [1, 1]} : vector<2x4xf32> to vector<2x1xf32>
    %1093 = vector.extract_strided_slice %1090 {offsets = [0, 1], sizes = [2, 1], strides = [1, 1]} : vector<2x4xf32> to vector<2x1xf32>
    %1094 = vector.extract_strided_slice %1091 {offsets = [0, 2], sizes = [2, 1], strides = [1, 1]} : vector<2x4xf32> to vector<2x1xf32>
    %1095 = vector.extract_strided_slice %1090 {offsets = [0, 3], sizes = [2, 1], strides = [1, 1]} : vector<2x4xf32> to vector<2x1xf32>
    %1096 = arith.mulf %1093, %1074 : vector<2x1xf32>
    %1097 = arith.mulf %1092, %1094 : vector<2x1xf32>
    %1098 = arith.addf %1096, %1097 : vector<2x1xf32>
    %1099 = math.tanh %1098 : vector<2x1xf32>
    %1100 = arith.mulf %1095, %1099 : vector<2x1xf32>
    %1101 = vector.broadcast %716 : vector<2x1xf32> to vector<2x4xf32>
    %1102 = arith.mulf %1101, %1022 : vector<2x4xf32>
    %1103 = arith.addf %1020, %1102 : vector<2x4xf32>
    %1104 = vector.broadcast %942 : vector<2x1xf32> to vector<2x4xf32>
    %1105 = arith.mulf %1104, %1024 : vector<2x4xf32>
    %1106 = arith.addf %1103, %1105 : vector<2x4xf32>
    %1107 = vector.broadcast %1100 : vector<2x1xf32> to vector<2x4xf32>
    %1108 = arith.mulf %1107, %1026 : vector<2x4xf32>
    %1109 = arith.addf %1106, %1108 : vector<2x4xf32>
    %1110 = arith.negf %1109 : vector<2x4xf32>
    %1111 = math.exp %1110 : vector<2x4xf32>
    %cst_82 = arith.constant 1.000000e+00 : f32
    %1112 = vector.broadcast %cst_82 : f32 to vector<2x4xf32>
    %1113 = arith.addf %1112, %1111 : vector<2x4xf32>
    %1114 = arith.divf %1112, %1113 : vector<2x4xf32>
    %1115 = math.tanh %1109 : vector<2x4xf32>
    %1116 = vector.extract_strided_slice %1114 {offsets = [0, 0], sizes = [2, 1], strides = [1, 1]} : vector<2x4xf32> to vector<2x1xf32>
    %1117 = vector.extract_strided_slice %1114 {offsets = [0, 1], sizes = [2, 1], strides = [1, 1]} : vector<2x4xf32> to vector<2x1xf32>
    %1118 = vector.extract_strided_slice %1115 {offsets = [0, 2], sizes = [2, 1], strides = [1, 1]} : vector<2x4xf32> to vector<2x1xf32>
    %1119 = vector.extract_strided_slice %1114 {offsets = [0, 3], sizes = [2, 1], strides = [1, 1]} : vector<2x4xf32> to vector<2x1xf32>
    %1120 = arith.mulf %1117, %1098 : vector<2x1xf32>
    %1121 = arith.mulf %1116, %1118 : vector<2x1xf32>
    %1122 = arith.addf %1120, %1121 : vector<2x1xf32>
    %1123 = math.tanh %1122 : vector<2x1xf32>
    %1124 = arith.mulf %1119, %1123 : vector<2x1xf32>
    %1125 = vector.broadcast %740 : vector<2x1xf32> to vector<2x4xf32>
    %1126 = arith.mulf %1125, %1022 : vector<2x4xf32>
    %1127 = arith.addf %1020, %1126 : vector<2x4xf32>
    %1128 = vector.broadcast %918 : vector<2x1xf32> to vector<2x4xf32>
    %1129 = arith.mulf %1128, %1024 : vector<2x4xf32>
    %1130 = arith.addf %1127, %1129 : vector<2x4xf32>
    %1131 = vector.broadcast %1124 : vector<2x1xf32> to vector<2x4xf32>
    %1132 = arith.mulf %1131, %1026 : vector<2x4xf32>
    %1133 = arith.addf %1130, %1132 : vector<2x4xf32>
    %1134 = arith.negf %1133 : vector<2x4xf32>
    %1135 = math.exp %1134 : vector<2x4xf32>
    %cst_83 = arith.constant 1.000000e+00 : f32
    %1136 = vector.broadcast %cst_83 : f32 to vector<2x4xf32>
    %1137 = arith.addf %1136, %1135 : vector<2x4xf32>
    %1138 = arith.divf %1136, %1137 : vector<2x4xf32>
    %1139 = math.tanh %1133 : vector<2x4xf32>
    %1140 = vector.extract_strided_slice %1138 {offsets = [0, 0], sizes = [2, 1], strides = [1, 1]} : vector<2x4xf32> to vector<2x1xf32>
    %1141 = vector.extract_strided_slice %1138 {offsets = [0, 1], sizes = [2, 1], strides = [1, 1]} : vector<2x4xf32> to vector<2x1xf32>
    %1142 = vector.extract_strided_slice %1139 {offsets = [0, 2], sizes = [2, 1], strides = [1, 1]} : vector<2x4xf32> to vector<2x1xf32>
    %1143 = vector.extract_strided_slice %1138 {offsets = [0, 3], sizes = [2, 1], strides = [1, 1]} : vector<2x4xf32> to vector<2x1xf32>
    %1144 = arith.mulf %1141, %1122 : vector<2x1xf32>
    %1145 = arith.mulf %1140, %1142 : vector<2x1xf32>
    %1146 = arith.addf %1144, %1145 : vector<2x1xf32>
    %1147 = math.tanh %1146 : vector<2x1xf32>
    %1148 = arith.mulf %1143, %1147 : vector<2x1xf32>
    %1149 = vector.broadcast %764 : vector<2x1xf32> to vector<2x4xf32>
    %1150 = arith.mulf %1149, %1022 : vector<2x4xf32>
    %1151 = arith.addf %1020, %1150 : vector<2x4xf32>
    %1152 = vector.broadcast %894 : vector<2x1xf32> to vector<2x4xf32>
    %1153 = arith.mulf %1152, %1024 : vector<2x4xf32>
    %1154 = arith.addf %1151, %1153 : vector<2x4xf32>
    %1155 = vector.broadcast %1148 : vector<2x1xf32> to vector<2x4xf32>
    %1156 = arith.mulf %1155, %1026 : vector<2x4xf32>
    %1157 = arith.addf %1154, %1156 : vector<2x4xf32>
    %1158 = arith.negf %1157 : vector<2x4xf32>
    %1159 = math.exp %1158 : vector<2x4xf32>
    %cst_84 = arith.constant 1.000000e+00 : f32
    %1160 = vector.broadcast %cst_84 : f32 to vector<2x4xf32>
    %1161 = arith.addf %1160, %1159 : vector<2x4xf32>
    %1162 = arith.divf %1160, %1161 : vector<2x4xf32>
    %1163 = math.tanh %1157 : vector<2x4xf32>
    %1164 = vector.extract_strided_slice %1162 {offsets = [0, 0], sizes = [2, 1], strides = [1, 1]} : vector<2x4xf32> to vector<2x1xf32>
    %1165 = vector.extract_strided_slice %1162 {offsets = [0, 1], sizes = [2, 1], strides = [1, 1]} : vector<2x4xf32> to vector<2x1xf32>
    %1166 = vector.extract_strided_slice %1163 {offsets = [0, 2], sizes = [2, 1], strides = [1, 1]} : vector<2x4xf32> to vector<2x1xf32>
    %1167 = vector.extract_strided_slice %1162 {offsets = [0, 3], sizes = [2, 1], strides = [1, 1]} : vector<2x4xf32> to vector<2x1xf32>
    %1168 = arith.mulf %1165, %1146 : vector<2x1xf32>
    %1169 = arith.mulf %1164, %1166 : vector<2x1xf32>
    %1170 = arith.addf %1168, %1169 : vector<2x1xf32>
    %1171 = math.tanh %1170 : vector<2x1xf32>
    %1172 = arith.mulf %1167, %1171 : vector<2x1xf32>
    %1173 = vector.broadcast %788 : vector<2x1xf32> to vector<2x4xf32>
    %1174 = arith.mulf %1173, %1022 : vector<2x4xf32>
    %1175 = arith.addf %1020, %1174 : vector<2x4xf32>
    %1176 = vector.broadcast %870 : vector<2x1xf32> to vector<2x4xf32>
    %1177 = arith.mulf %1176, %1024 : vector<2x4xf32>
    %1178 = arith.addf %1175, %1177 : vector<2x4xf32>
    %1179 = vector.broadcast %1172 : vector<2x1xf32> to vector<2x4xf32>
    %1180 = arith.mulf %1179, %1026 : vector<2x4xf32>
    %1181 = arith.addf %1178, %1180 : vector<2x4xf32>
    %1182 = arith.negf %1181 : vector<2x4xf32>
    %1183 = math.exp %1182 : vector<2x4xf32>
    %cst_85 = arith.constant 1.000000e+00 : f32
    %1184 = vector.broadcast %cst_85 : f32 to vector<2x4xf32>
    %1185 = arith.addf %1184, %1183 : vector<2x4xf32>
    %1186 = arith.divf %1184, %1185 : vector<2x4xf32>
    %1187 = math.tanh %1181 : vector<2x4xf32>
    %1188 = vector.extract_strided_slice %1186 {offsets = [0, 0], sizes = [2, 1], strides = [1, 1]} : vector<2x4xf32> to vector<2x1xf32>
    %1189 = vector.extract_strided_slice %1186 {offsets = [0, 1], sizes = [2, 1], strides = [1, 1]} : vector<2x4xf32> to vector<2x1xf32>
    %1190 = vector.extract_strided_slice %1187 {offsets = [0, 2], sizes = [2, 1], strides = [1, 1]} : vector<2x4xf32> to vector<2x1xf32>
    %1191 = vector.extract_strided_slice %1186 {offsets = [0, 3], sizes = [2, 1], strides = [1, 1]} : vector<2x4xf32> to vector<2x1xf32>
    %1192 = arith.mulf %1189, %1170 : vector<2x1xf32>
    %1193 = arith.mulf %1188, %1190 : vector<2x1xf32>
    %1194 = arith.addf %1192, %1193 : vector<2x1xf32>
    %1195 = math.tanh %1194 : vector<2x1xf32>
    %1196 = arith.mulf %1191, %1195 : vector<2x1xf32>
    %1197 = vector.broadcast %812 : vector<2x1xf32> to vector<2x4xf32>
    %1198 = arith.mulf %1197, %1022 : vector<2x4xf32>
    %1199 = arith.addf %1020, %1198 : vector<2x4xf32>
    %1200 = vector.broadcast %846 : vector<2x1xf32> to vector<2x4xf32>
    %1201 = arith.mulf %1200, %1024 : vector<2x4xf32>
    %1202 = arith.addf %1199, %1201 : vector<2x4xf32>
    %1203 = vector.broadcast %1196 : vector<2x1xf32> to vector<2x4xf32>
    %1204 = arith.mulf %1203, %1026 : vector<2x4xf32>
    %1205 = arith.addf %1202, %1204 : vector<2x4xf32>
    %1206 = arith.negf %1205 : vector<2x4xf32>
    %1207 = math.exp %1206 : vector<2x4xf32>
    %cst_86 = arith.constant 1.000000e+00 : f32
    %1208 = vector.broadcast %cst_86 : f32 to vector<2x4xf32>
    %1209 = arith.addf %1208, %1207 : vector<2x4xf32>
    %1210 = arith.divf %1208, %1209 : vector<2x4xf32>
    %1211 = math.tanh %1205 : vector<2x4xf32>
    %1212 = vector.extract_strided_slice %1210 {offsets = [0, 0], sizes = [2, 1], strides = [1, 1]} : vector<2x4xf32> to vector<2x1xf32>
    %1213 = vector.extract_strided_slice %1210 {offsets = [0, 1], sizes = [2, 1], strides = [1, 1]} : vector<2x4xf32> to vector<2x1xf32>
    %1214 = vector.extract_strided_slice %1211 {offsets = [0, 2], sizes = [2, 1], strides = [1, 1]} : vector<2x4xf32> to vector<2x1xf32>
    %1215 = vector.extract_strided_slice %1210 {offsets = [0, 3], sizes = [2, 1], strides = [1, 1]} : vector<2x4xf32> to vector<2x1xf32>
    %1216 = arith.mulf %1213, %1194 : vector<2x1xf32>
    %1217 = arith.mulf %1212, %1214 : vector<2x1xf32>
    %1218 = arith.addf %1216, %1217 : vector<2x1xf32>
    %1219 = math.tanh %1218 : vector<2x1xf32>
    %1220 = arith.mulf %1215, %1219 : vector<2x1xf32>
    %c0_87 = arith.constant 0 : index
    %c0_88 = arith.constant 0 : index
    %1221 = vector.load %arg19[%c0_87, %c0_88] : memref<1x4xf32, #tpu.memory_space<vmem>>, vector<1x4xf32>
    %c0_89 = arith.constant 0 : index
    %c0_90 = arith.constant 0 : index
    %1222 = vector.load %arg20[%c0_89, %c0_90] : memref<1x4xf32, #tpu.memory_space<vmem>>, vector<1x4xf32>
    %c0_91 = arith.constant 0 : index
    %c0_92 = arith.constant 0 : index
    %1223 = vector.load %arg21[%c0_91, %c0_92] : memref<1x4xf32, #tpu.memory_space<vmem>>, vector<1x4xf32>
    %1224 = vector.shape_cast %1223 : vector<1x4xf32> to vector<1x4xf32>
    %1225 = vector.broadcast %1224 : vector<1x4xf32> to vector<2x4xf32>
    %1226 = vector.shape_cast %1221 : vector<1x4xf32> to vector<1x4xf32>
    %1227 = vector.broadcast %1226 : vector<1x4xf32> to vector<2x4xf32>
    %1228 = vector.shape_cast %1222 : vector<1x4xf32> to vector<1x4xf32>
    %1229 = vector.broadcast %1228 : vector<1x4xf32> to vector<2x4xf32>
    %cst_93 = arith.constant 0.000000e+00 : f32
    %1230 = vector.broadcast %cst_93 : f32 to vector<2x1xf32>
    %cst_94 = arith.constant 0.000000e+00 : f32
    %1231 = vector.broadcast %cst_94 : f32 to vector<2x1xf32>
    %1232 = vector.broadcast %1052 : vector<2x1xf32> to vector<2x4xf32>
    %1233 = arith.mulf %1232, %1227 : vector<2x4xf32>
    %1234 = arith.addf %1225, %1233 : vector<2x4xf32>
    %1235 = vector.broadcast %1230 : vector<2x1xf32> to vector<2x4xf32>
    %1236 = arith.mulf %1235, %1229 : vector<2x4xf32>
    %1237 = arith.addf %1234, %1236 : vector<2x4xf32>
    %1238 = arith.negf %1237 : vector<2x4xf32>
    %1239 = math.exp %1238 : vector<2x4xf32>
    %cst_95 = arith.constant 1.000000e+00 : f32
    %1240 = vector.broadcast %cst_95 : f32 to vector<2x4xf32>
    %1241 = arith.addf %1240, %1239 : vector<2x4xf32>
    %1242 = arith.divf %1240, %1241 : vector<2x4xf32>
    %1243 = math.tanh %1237 : vector<2x4xf32>
    %1244 = vector.extract_strided_slice %1242 {offsets = [0, 0], sizes = [2, 1], strides = [1, 1]} : vector<2x4xf32> to vector<2x1xf32>
    %1245 = vector.extract_strided_slice %1242 {offsets = [0, 1], sizes = [2, 1], strides = [1, 1]} : vector<2x4xf32> to vector<2x1xf32>
    %1246 = vector.extract_strided_slice %1243 {offsets = [0, 2], sizes = [2, 1], strides = [1, 1]} : vector<2x4xf32> to vector<2x1xf32>
    %1247 = vector.extract_strided_slice %1242 {offsets = [0, 3], sizes = [2, 1], strides = [1, 1]} : vector<2x4xf32> to vector<2x1xf32>
    %1248 = arith.mulf %1245, %1231 : vector<2x1xf32>
    %1249 = arith.mulf %1244, %1246 : vector<2x1xf32>
    %1250 = arith.addf %1248, %1249 : vector<2x1xf32>
    %1251 = math.tanh %1250 : vector<2x1xf32>
    %1252 = arith.mulf %1247, %1251 : vector<2x1xf32>
    %1253 = vector.broadcast %1076 : vector<2x1xf32> to vector<2x4xf32>
    %1254 = arith.mulf %1253, %1227 : vector<2x4xf32>
    %1255 = arith.addf %1225, %1254 : vector<2x4xf32>
    %1256 = vector.broadcast %1252 : vector<2x1xf32> to vector<2x4xf32>
    %1257 = arith.mulf %1256, %1229 : vector<2x4xf32>
    %1258 = arith.addf %1255, %1257 : vector<2x4xf32>
    %1259 = arith.negf %1258 : vector<2x4xf32>
    %1260 = math.exp %1259 : vector<2x4xf32>
    %cst_96 = arith.constant 1.000000e+00 : f32
    %1261 = vector.broadcast %cst_96 : f32 to vector<2x4xf32>
    %1262 = arith.addf %1261, %1260 : vector<2x4xf32>
    %1263 = arith.divf %1261, %1262 : vector<2x4xf32>
    %1264 = math.tanh %1258 : vector<2x4xf32>
    %1265 = vector.extract_strided_slice %1263 {offsets = [0, 0], sizes = [2, 1], strides = [1, 1]} : vector<2x4xf32> to vector<2x1xf32>
    %1266 = vector.extract_strided_slice %1263 {offsets = [0, 1], sizes = [2, 1], strides = [1, 1]} : vector<2x4xf32> to vector<2x1xf32>
    %1267 = vector.extract_strided_slice %1264 {offsets = [0, 2], sizes = [2, 1], strides = [1, 1]} : vector<2x4xf32> to vector<2x1xf32>
    %1268 = vector.extract_strided_slice %1263 {offsets = [0, 3], sizes = [2, 1], strides = [1, 1]} : vector<2x4xf32> to vector<2x1xf32>
    %1269 = arith.mulf %1266, %1250 : vector<2x1xf32>
    %1270 = arith.mulf %1265, %1267 : vector<2x1xf32>
    %1271 = arith.addf %1269, %1270 : vector<2x1xf32>
    %1272 = math.tanh %1271 : vector<2x1xf32>
    %1273 = arith.mulf %1268, %1272 : vector<2x1xf32>
    %1274 = vector.broadcast %1100 : vector<2x1xf32> to vector<2x4xf32>
    %1275 = arith.mulf %1274, %1227 : vector<2x4xf32>
    %1276 = arith.addf %1225, %1275 : vector<2x4xf32>
    %1277 = vector.broadcast %1273 : vector<2x1xf32> to vector<2x4xf32>
    %1278 = arith.mulf %1277, %1229 : vector<2x4xf32>
    %1279 = arith.addf %1276, %1278 : vector<2x4xf32>
    %1280 = arith.negf %1279 : vector<2x4xf32>
    %1281 = math.exp %1280 : vector<2x4xf32>
    %cst_97 = arith.constant 1.000000e+00 : f32
    %1282 = vector.broadcast %cst_97 : f32 to vector<2x4xf32>
    %1283 = arith.addf %1282, %1281 : vector<2x4xf32>
    %1284 = arith.divf %1282, %1283 : vector<2x4xf32>
    %1285 = math.tanh %1279 : vector<2x4xf32>
    %1286 = vector.extract_strided_slice %1284 {offsets = [0, 0], sizes = [2, 1], strides = [1, 1]} : vector<2x4xf32> to vector<2x1xf32>
    %1287 = vector.extract_strided_slice %1284 {offsets = [0, 1], sizes = [2, 1], strides = [1, 1]} : vector<2x4xf32> to vector<2x1xf32>
    %1288 = vector.extract_strided_slice %1285 {offsets = [0, 2], sizes = [2, 1], strides = [1, 1]} : vector<2x4xf32> to vector<2x1xf32>
    %1289 = vector.extract_strided_slice %1284 {offsets = [0, 3], sizes = [2, 1], strides = [1, 1]} : vector<2x4xf32> to vector<2x1xf32>
    %1290 = arith.mulf %1287, %1271 : vector<2x1xf32>
    %1291 = arith.mulf %1286, %1288 : vector<2x1xf32>
    %1292 = arith.addf %1290, %1291 : vector<2x1xf32>
    %1293 = math.tanh %1292 : vector<2x1xf32>
    %1294 = arith.mulf %1289, %1293 : vector<2x1xf32>
    %1295 = vector.broadcast %1124 : vector<2x1xf32> to vector<2x4xf32>
    %1296 = arith.mulf %1295, %1227 : vector<2x4xf32>
    %1297 = arith.addf %1225, %1296 : vector<2x4xf32>
    %1298 = vector.broadcast %1294 : vector<2x1xf32> to vector<2x4xf32>
    %1299 = arith.mulf %1298, %1229 : vector<2x4xf32>
    %1300 = arith.addf %1297, %1299 : vector<2x4xf32>
    %1301 = arith.negf %1300 : vector<2x4xf32>
    %1302 = math.exp %1301 : vector<2x4xf32>
    %cst_98 = arith.constant 1.000000e+00 : f32
    %1303 = vector.broadcast %cst_98 : f32 to vector<2x4xf32>
    %1304 = arith.addf %1303, %1302 : vector<2x4xf32>
    %1305 = arith.divf %1303, %1304 : vector<2x4xf32>
    %1306 = math.tanh %1300 : vector<2x4xf32>
    %1307 = vector.extract_strided_slice %1305 {offsets = [0, 0], sizes = [2, 1], strides = [1, 1]} : vector<2x4xf32> to vector<2x1xf32>
    %1308 = vector.extract_strided_slice %1305 {offsets = [0, 1], sizes = [2, 1], strides = [1, 1]} : vector<2x4xf32> to vector<2x1xf32>
    %1309 = vector.extract_strided_slice %1306 {offsets = [0, 2], sizes = [2, 1], strides = [1, 1]} : vector<2x4xf32> to vector<2x1xf32>
    %1310 = vector.extract_strided_slice %1305 {offsets = [0, 3], sizes = [2, 1], strides = [1, 1]} : vector<2x4xf32> to vector<2x1xf32>
    %1311 = arith.mulf %1308, %1292 : vector<2x1xf32>
    %1312 = arith.mulf %1307, %1309 : vector<2x1xf32>
    %1313 = arith.addf %1311, %1312 : vector<2x1xf32>
    %1314 = math.tanh %1313 : vector<2x1xf32>
    %1315 = arith.mulf %1310, %1314 : vector<2x1xf32>
    %1316 = vector.broadcast %1148 : vector<2x1xf32> to vector<2x4xf32>
    %1317 = arith.mulf %1316, %1227 : vector<2x4xf32>
    %1318 = arith.addf %1225, %1317 : vector<2x4xf32>
    %1319 = vector.broadcast %1315 : vector<2x1xf32> to vector<2x4xf32>
    %1320 = arith.mulf %1319, %1229 : vector<2x4xf32>
    %1321 = arith.addf %1318, %1320 : vector<2x4xf32>
    %1322 = arith.negf %1321 : vector<2x4xf32>
    %1323 = math.exp %1322 : vector<2x4xf32>
    %cst_99 = arith.constant 1.000000e+00 : f32
    %1324 = vector.broadcast %cst_99 : f32 to vector<2x4xf32>
    %1325 = arith.addf %1324, %1323 : vector<2x4xf32>
    %1326 = arith.divf %1324, %1325 : vector<2x4xf32>
    %1327 = math.tanh %1321 : vector<2x4xf32>
    %1328 = vector.extract_strided_slice %1326 {offsets = [0, 0], sizes = [2, 1], strides = [1, 1]} : vector<2x4xf32> to vector<2x1xf32>
    %1329 = vector.extract_strided_slice %1326 {offsets = [0, 1], sizes = [2, 1], strides = [1, 1]} : vector<2x4xf32> to vector<2x1xf32>
    %1330 = vector.extract_strided_slice %1327 {offsets = [0, 2], sizes = [2, 1], strides = [1, 1]} : vector<2x4xf32> to vector<2x1xf32>
    %1331 = vector.extract_strided_slice %1326 {offsets = [0, 3], sizes = [2, 1], strides = [1, 1]} : vector<2x4xf32> to vector<2x1xf32>
    %1332 = arith.mulf %1329, %1313 : vector<2x1xf32>
    %1333 = arith.mulf %1328, %1330 : vector<2x1xf32>
    %1334 = arith.addf %1332, %1333 : vector<2x1xf32>
    %1335 = math.tanh %1334 : vector<2x1xf32>
    %1336 = arith.mulf %1331, %1335 : vector<2x1xf32>
    %1337 = vector.broadcast %1172 : vector<2x1xf32> to vector<2x4xf32>
    %1338 = arith.mulf %1337, %1227 : vector<2x4xf32>
    %1339 = arith.addf %1225, %1338 : vector<2x4xf32>
    %1340 = vector.broadcast %1336 : vector<2x1xf32> to vector<2x4xf32>
    %1341 = arith.mulf %1340, %1229 : vector<2x4xf32>
    %1342 = arith.addf %1339, %1341 : vector<2x4xf32>
    %1343 = arith.negf %1342 : vector<2x4xf32>
    %1344 = math.exp %1343 : vector<2x4xf32>
    %cst_100 = arith.constant 1.000000e+00 : f32
    %1345 = vector.broadcast %cst_100 : f32 to vector<2x4xf32>
    %1346 = arith.addf %1345, %1344 : vector<2x4xf32>
    %1347 = arith.divf %1345, %1346 : vector<2x4xf32>
    %1348 = math.tanh %1342 : vector<2x4xf32>
    %1349 = vector.extract_strided_slice %1347 {offsets = [0, 0], sizes = [2, 1], strides = [1, 1]} : vector<2x4xf32> to vector<2x1xf32>
    %1350 = vector.extract_strided_slice %1347 {offsets = [0, 1], sizes = [2, 1], strides = [1, 1]} : vector<2x4xf32> to vector<2x1xf32>
    %1351 = vector.extract_strided_slice %1348 {offsets = [0, 2], sizes = [2, 1], strides = [1, 1]} : vector<2x4xf32> to vector<2x1xf32>
    %1352 = vector.extract_strided_slice %1347 {offsets = [0, 3], sizes = [2, 1], strides = [1, 1]} : vector<2x4xf32> to vector<2x1xf32>
    %1353 = arith.mulf %1350, %1334 : vector<2x1xf32>
    %1354 = arith.mulf %1349, %1351 : vector<2x1xf32>
    %1355 = arith.addf %1353, %1354 : vector<2x1xf32>
    %1356 = math.tanh %1355 : vector<2x1xf32>
    %1357 = arith.mulf %1352, %1356 : vector<2x1xf32>
    %1358 = vector.broadcast %1196 : vector<2x1xf32> to vector<2x4xf32>
    %1359 = arith.mulf %1358, %1227 : vector<2x4xf32>
    %1360 = arith.addf %1225, %1359 : vector<2x4xf32>
    %1361 = vector.broadcast %1357 : vector<2x1xf32> to vector<2x4xf32>
    %1362 = arith.mulf %1361, %1229 : vector<2x4xf32>
    %1363 = arith.addf %1360, %1362 : vector<2x4xf32>
    %1364 = arith.negf %1363 : vector<2x4xf32>
    %1365 = math.exp %1364 : vector<2x4xf32>
    %cst_101 = arith.constant 1.000000e+00 : f32
    %1366 = vector.broadcast %cst_101 : f32 to vector<2x4xf32>
    %1367 = arith.addf %1366, %1365 : vector<2x4xf32>
    %1368 = arith.divf %1366, %1367 : vector<2x4xf32>
    %1369 = math.tanh %1363 : vector<2x4xf32>
    %1370 = vector.extract_strided_slice %1368 {offsets = [0, 0], sizes = [2, 1], strides = [1, 1]} : vector<2x4xf32> to vector<2x1xf32>
    %1371 = vector.extract_strided_slice %1368 {offsets = [0, 1], sizes = [2, 1], strides = [1, 1]} : vector<2x4xf32> to vector<2x1xf32>
    %1372 = vector.extract_strided_slice %1369 {offsets = [0, 2], sizes = [2, 1], strides = [1, 1]} : vector<2x4xf32> to vector<2x1xf32>
    %1373 = vector.extract_strided_slice %1368 {offsets = [0, 3], sizes = [2, 1], strides = [1, 1]} : vector<2x4xf32> to vector<2x1xf32>
    %1374 = arith.mulf %1371, %1355 : vector<2x1xf32>
    %1375 = arith.mulf %1370, %1372 : vector<2x1xf32>
    %1376 = arith.addf %1374, %1375 : vector<2x1xf32>
    %1377 = math.tanh %1376 : vector<2x1xf32>
    %1378 = arith.mulf %1373, %1377 : vector<2x1xf32>
    %1379 = vector.broadcast %1220 : vector<2x1xf32> to vector<2x4xf32>
    %1380 = arith.mulf %1379, %1227 : vector<2x4xf32>
    %1381 = arith.addf %1225, %1380 : vector<2x4xf32>
    %1382 = vector.broadcast %1378 : vector<2x1xf32> to vector<2x4xf32>
    %1383 = arith.mulf %1382, %1229 : vector<2x4xf32>
    %1384 = arith.addf %1381, %1383 : vector<2x4xf32>
    %1385 = arith.negf %1384 : vector<2x4xf32>
    %1386 = math.exp %1385 : vector<2x4xf32>
    %cst_102 = arith.constant 1.000000e+00 : f32
    %1387 = vector.broadcast %cst_102 : f32 to vector<2x4xf32>
    %1388 = arith.addf %1387, %1386 : vector<2x4xf32>
    %1389 = arith.divf %1387, %1388 : vector<2x4xf32>
    %1390 = math.tanh %1384 : vector<2x4xf32>
    %1391 = vector.extract_strided_slice %1389 {offsets = [0, 0], sizes = [2, 1], strides = [1, 1]} : vector<2x4xf32> to vector<2x1xf32>
    %1392 = vector.extract_strided_slice %1389 {offsets = [0, 1], sizes = [2, 1], strides = [1, 1]} : vector<2x4xf32> to vector<2x1xf32>
    %1393 = vector.extract_strided_slice %1390 {offsets = [0, 2], sizes = [2, 1], strides = [1, 1]} : vector<2x4xf32> to vector<2x1xf32>
    %1394 = vector.extract_strided_slice %1389 {offsets = [0, 3], sizes = [2, 1], strides = [1, 1]} : vector<2x4xf32> to vector<2x1xf32>
    %1395 = arith.mulf %1392, %1376 : vector<2x1xf32>
    %1396 = arith.mulf %1391, %1393 : vector<2x1xf32>
    %1397 = arith.addf %1395, %1396 : vector<2x1xf32>
    %1398 = math.tanh %1397 : vector<2x1xf32>
    %1399 = arith.mulf %1394, %1398 : vector<2x1xf32>
    %1400 = vector.shape_cast %1252 : vector<2x1xf32> to vector<1x2x1xf32>
    %1401 = vector.shape_cast %1273 : vector<2x1xf32> to vector<1x2x1xf32>
    %1402 = vector.shape_cast %1294 : vector<2x1xf32> to vector<1x2x1xf32>
    %1403 = vector.shape_cast %1315 : vector<2x1xf32> to vector<1x2x1xf32>
    %1404 = vector.shape_cast %1336 : vector<2x1xf32> to vector<1x2x1xf32>
    %1405 = vector.shape_cast %1357 : vector<2x1xf32> to vector<1x2x1xf32>
    %1406 = vector.shape_cast %1378 : vector<2x1xf32> to vector<1x2x1xf32>
    %1407 = vector.shape_cast %1399 : vector<2x1xf32> to vector<1x2x1xf32>
    %1408 = tpu.concatenate %1400, %1401, %1402, %1403, %1404, %1405, %1406, %1407 in 0 : vector<1x2x1xf32>, vector<1x2x1xf32>, vector<1x2x1xf32>, vector<1x2x1xf32>, vector<1x2x1xf32>, vector<1x2x1xf32>, vector<1x2x1xf32>, vector<1x2x1xf32> -> vector<8x2x1xf32>
    %cst_103 = arith.constant dense<0xFF800000> : vector<2x1xf32>
    %1409 = vector.multi_reduction <maximumf>, %1408, %cst_103 [0] : vector<8x2x1xf32> to vector<2x1xf32>
    %1410 = vector.shape_cast %1409 : vector<2x1xf32> to vector<1x2x1xf32>
    %1411 = vector.broadcast %1410 : vector<1x2x1xf32> to vector<8x2x1xf32>
    %1412 = arith.subf %1408, %1411 : vector<8x2x1xf32>
    %1413 = math.exp %1412 : vector<8x2x1xf32>
    %cst_104 = arith.constant dense<0.000000e+00> : vector<2x1xf32>
    %1414 = vector.multi_reduction <add>, %1413, %cst_104 [0] : vector<8x2x1xf32> to vector<2x1xf32>
    %1415 = vector.shape_cast %1414 : vector<2x1xf32> to vector<1x2x1xf32>
    %1416 = vector.broadcast %1415 : vector<1x2x1xf32> to vector<8x2x1xf32>
    %1417 = arith.mulf %1408, %1416 : vector<8x2x1xf32>
    %1418 = tpu.reciprocal %1413 : vector<8x2x1xf32> -> vector<8x2x1xf32>
    %1419 = arith.mulf %1417, %1418 : vector<8x2x1xf32>
    %c0_105 = arith.constant 0 : index
    %c0_106 = arith.constant 0 : index
    %c0_107 = arith.constant 0 : index
    %1420 = vector.load %arg22[%c0_105, %c0_106, %c0_107] : memref<8x2x1xf32, #tpu.memory_space<vmem>>, vector<8x2x1xf32>
    tpu.vector_store %arg22[%c0_105, %c0_106, %c0_107], %1419 {strides = array<i32>} : memref<8x2x1xf32, #tpu.memory_space<vmem>>, vector<8x2x1xf32>,
    return
  }
}

</mosaic_0001>

<llo_original>
// kernel: tpu_custom_call.1
$region0: #{tpu_custom_call.1}
  #allocation0 [shape = 'u32[]', space=smem, size = 0x4, offset = 0x4, fixed_abs, tag = 'smem constant byte address 0x4 - core index']
  #allocation1 [shape = 'u32[144,128]{1,0:T(1,128)}', space=vmem, size = 0x12000, scoped, tag = 'internal scratch']
  %s0 = inlined_call_operand.vmem [shape: f32[8,2,4], index: 0, kind: input, shape index: {}]
  %s1 = inlined_call_operand.vmem [shape: f32[4,4], index: 1, kind: input, shape index: {}]
  %s2 = inlined_call_operand.vmem [shape: f32[1,4], index: 2, kind: input, shape index: {}]
  %s3 = inlined_call_operand.vmem [shape: f32[1,4], index: 3, kind: input, shape index: {}]
  %s4 = inlined_call_operand.vmem [shape: f32[4,4], index: 4, kind: input, shape index: {}]
  %s5 = inlined_call_operand.vmem [shape: f32[1,4], index: 5, kind: input, shape index: {}]
  %s6 = inlined_call_operand.vmem [shape: f32[1,4], index: 6, kind: input, shape index: {}]
  %s7 = inlined_call_operand.vmem [shape: f32[1,4], index: 7, kind: input, shape index: {}]
  %s8 = inlined_call_operand.vmem [shape: f32[1,4], index: 8, kind: input, shape index: {}]
  %s9 = inlined_call_operand.vmem [shape: f32[1,4], index: 9, kind: input, shape index: {}]
  %s10 = inlined_call_operand.vmem [shape: f32[1,4], index: 10, kind: input, shape index: {}]
  %s11 = inlined_call_operand.vmem [shape: f32[1,4], index: 11, kind: input, shape index: {}]
  %s12 = inlined_call_operand.vmem [shape: f32[1,4], index: 12, kind: input, shape index: {}]
  %s13 = inlined_call_operand.vmem [shape: f32[1,4], index: 13, kind: input, shape index: {}]
  %s14 = inlined_call_operand.vmem [shape: f32[1,4], index: 14, kind: input, shape index: {}]
  %s15 = inlined_call_operand.vmem [shape: f32[1,4], index: 15, kind: input, shape index: {}]
  %s16 = inlined_call_operand.vmem [shape: f32[1,4], index: 16, kind: input, shape index: {}]
  %s17 = inlined_call_operand.vmem [shape: f32[1,4], index: 17, kind: input, shape index: {}]
  %s18 = inlined_call_operand.vmem [shape: f32[1,4], index: 18, kind: input, shape index: {}]
  %s19 = inlined_call_operand.vmem [shape: f32[1,4], index: 19, kind: input, shape index: {}]
  %s20 = inlined_call_operand.vmem [shape: f32[1,4], index: 20, kind: input, shape index: {}]
  %s21 = inlined_call_operand.vmem [shape: f32[1,4], index: 21, kind: input, shape index: {}]
  %s22 = inlined_call_operand.vmem [shape: f32[8,2,1], index: 22, kind: output, shape index: {}]
  %s23 = sld [smem:[#allocation0]]
  $region98: #{tpu_custom_call.1} parent=0
    _
  %s25 = ssub.s32 1, %s23
  %s26 = scalar_select 0, %s25, %s23
  // Predicated region
  $region2: #{tpu_custom_call.1} parent=0 // pred_check
    _
  $region3: #{tpu_custom_call.1} parent=0 // pred_check_branch
    %28 = sbr.rel (0) target = $region5
  $region4: #{tpu_custom_call.1} parent=0 // pred_region
    _
  $region5: #{tpu_custom_call.1} parent=0 // pred_fallthru
    _
  // Predicated region
  $region6: #{tpu_custom_call.1} parent=0 // pred_check
    _
  $region7: #{tpu_custom_call.1} parent=0 // pred_check_branch
    %30 = sbr.rel (0) target = $region9
  $region8: #{tpu_custom_call.1} parent=0 // pred_region
    _
  $region9: #{tpu_custom_call.1} parent=0 // pred_fallthru
    _
  // Predicated region
  $region10: #{tpu_custom_call.1} parent=0 // pred_check
    _
  $region11: #{tpu_custom_call.1} parent=0 // pred_check_branch
    %32 = sbr.rel (0) target = $region13
  $region12: #{tpu_custom_call.1} parent=0 // pred_region
    _
  $region13: #{tpu_custom_call.1} parent=0 // pred_fallthru
    _
  // Predicated region
  $region14: #{tpu_custom_call.1} parent=0 // pred_check
    _
  $region15: #{tpu_custom_call.1} parent=0 // pred_check_branch
    %34 = sbr.rel (0) target = $region17
  $region16: #{tpu_custom_call.1} parent=0 // pred_region
    _
  $region17: #{tpu_custom_call.1} parent=0 // pred_fallthru
    _
  // Predicated region
  $region18: #{tpu_custom_call.1} parent=0 // pred_check
    _
  $region19: #{tpu_custom_call.1} parent=0 // pred_check_branch
    %36 = sbr.rel (0) target = $region21
  $region20: #{tpu_custom_call.1} parent=0 // pred_region
    _
  $region21: #{tpu_custom_call.1} parent=0 // pred_fallthru
    _
  // Predicated region
  $region22: #{tpu_custom_call.1} parent=0 // pred_check
    _
  $region23: #{tpu_custom_call.1} parent=0 // pred_check_branch
    %38 = sbr.rel (0) target = $region25
  $region24: #{tpu_custom_call.1} parent=0 // pred_region
    _
  $region25: #{tpu_custom_call.1} parent=0 // pred_fallthru
    _
  // Predicated region
  $region26: #{tpu_custom_call.1} parent=0 // pred_check
    _
  $region27: #{tpu_custom_call.1} parent=0 // pred_check_branch
    %40 = sbr.rel (0) target = $region29
  $region28: #{tpu_custom_call.1} parent=0 // pred_region
    _
  $region29: #{tpu_custom_call.1} parent=0 // pred_fallthru
    _
  // Predicated region
  $region30: #{tpu_custom_call.1} parent=0 // pred_check
    _
  $region31: #{tpu_custom_call.1} parent=0 // pred_check_branch
    %42 = sbr.rel (0) target = $region33
  $region32: #{tpu_custom_call.1} parent=0 // pred_region
    _
  $region33: #{tpu_custom_call.1} parent=0 // pred_fallthru
    _
  // Predicated region
  $region34: #{tpu_custom_call.1} parent=0 // pred_check
    _
  $region35: #{tpu_custom_call.1} parent=0 // pred_check_branch
    %44 = sbr.rel (0) target = $region37
  $region36: #{tpu_custom_call.1} parent=0 // pred_region
    _
  $region37: #{tpu_custom_call.1} parent=0 // pred_fallthru
    _
  // Predicated region
  $region38: #{tpu_custom_call.1} parent=0 // pred_check
    _
  $region39: #{tpu_custom_call.1} parent=0 // pred_check_branch
    %46 = sbr.rel (0) target = $region41
  $region40: #{tpu_custom_call.1} parent=0 // pred_region
    _
  $region41: #{tpu_custom_call.1} parent=0 // pred_fallthru
    _
  // Predicated region
  $region42: #{tpu_custom_call.1} parent=0 // pred_check
    _
  $region43: #{tpu_custom_call.1} parent=0 // pred_check_branch
    %48 = sbr.rel (0) target = $region45
  $region44: #{tpu_custom_call.1} parent=0 // pred_region
    _
  $region45: #{tpu_custom_call.1} parent=0 // pred_fallthru
    _
  // Predicated region
  $region46: #{tpu_custom_call.1} parent=0 // pred_check
    _
  $region47: #{tpu_custom_call.1} parent=0 // pred_check_branch
    %50 = sbr.rel (0) target = $region49
  $region48: #{tpu_custom_call.1} parent=0 // pred_region
    _
  $region49: #{tpu_custom_call.1} parent=0 // pred_fallthru
    _
  // Predicated region
  $region50: #{tpu_custom_call.1} parent=0 // pred_check
    _
  $region51: #{tpu_custom_call.1} parent=0 // pred_check_branch
    %52 = sbr.rel (0) target = $region53
  $region52: #{tpu_custom_call.1} parent=0 // pred_region
    _
  $region53: #{tpu_custom_call.1} parent=0 // pred_fallthru
    _
  // Predicated region
  $region54: #{tpu_custom_call.1} parent=0 // pred_check
    _
  $region55: #{tpu_custom_call.1} parent=0 // pred_check_branch
    %54 = sbr.rel (0) target = $region57
  $region56: #{tpu_custom_call.1} parent=0 // pred_region
    _
  $region57: #{tpu_custom_call.1} parent=0 // pred_fallthru
    _
  // Predicated region
  $region58: #{tpu_custom_call.1} parent=0 // pred_check
    _
  $region59: #{tpu_custom_call.1} parent=0 // pred_check_branch
    %56 = sbr.rel (0) target = $region61
  $region60: #{tpu_custom_call.1} parent=0 // pred_region
    _
  $region61: #{tpu_custom_call.1} parent=0 // pred_fallthru
    _
  // Predicated region
  $region62: #{tpu_custom_call.1} parent=0 // pred_check
    _
  $region63: #{tpu_custom_call.1} parent=0 // pred_check_branch
    %58 = sbr.rel (0) target = $region65
  $region64: #{tpu_custom_call.1} parent=0 // pred_region
    _
  $region65: #{tpu_custom_call.1} parent=0 // pred_fallthru
    _
  // Predicated region
  $region66: #{tpu_custom_call.1} parent=0 // pred_check
    _
  $region67: #{tpu_custom_call.1} parent=0 // pred_check_branch
    %60 = sbr.rel (0) target = $region69
  $region68: #{tpu_custom_call.1} parent=0 // pred_region
    _
  $region69: #{tpu_custom_call.1} parent=0 // pred_fallthru
    _
  // Predicated region
  $region70: #{tpu_custom_call.1} parent=0 // pred_check
    _
  $region71: #{tpu_custom_call.1} parent=0 // pred_check_branch
    %62 = sbr.rel (0) target = $region73
  $region72: #{tpu_custom_call.1} parent=0 // pred_region
    _
  $region73: #{tpu_custom_call.1} parent=0 // pred_fallthru
    _
  // Predicated region
  $region74: #{tpu_custom_call.1} parent=0 // pred_check
    _
  $region75: #{tpu_custom_call.1} parent=0 // pred_check_branch
    %64 = sbr.rel (0) target = $region77
  $region76: #{tpu_custom_call.1} parent=0 // pred_region
    _
  $region77: #{tpu_custom_call.1} parent=0 // pred_fallthru
    _
  // Predicated region
  $region78: #{tpu_custom_call.1} parent=0 // pred_check
    _
  $region79: #{tpu_custom_call.1} parent=0 // pred_check_branch
    %66 = sbr.rel (0) target = $region81
  $region80: #{tpu_custom_call.1} parent=0 // pred_region
    _
  $region81: #{tpu_custom_call.1} parent=0 // pred_fallthru
    _
  // Predicated region
  $region82: #{tpu_custom_call.1} parent=0 // pred_check
    _
  $region83: #{tpu_custom_call.1} parent=0 // pred_check_branch
    %68 = sbr.rel (0) target = $region85
  $region84: #{tpu_custom_call.1} parent=0 // pred_region
    _
  $region85: #{tpu_custom_call.1} parent=0 // pred_fallthru
    _
  // Predicated region
  $region86: #{tpu_custom_call.1} parent=0 // pred_check
    _
  $region87: #{tpu_custom_call.1} parent=0 // pred_check_branch
    %70 = sbr.rel (0) target = $region89
  $region88: #{tpu_custom_call.1} parent=0 // pred_region
    _
  $region89: #{tpu_custom_call.1} parent=0 // pred_fallthru
    _
  %v71 = vld [vmem:[%s0] sm:$0x3]
  %v72 = vld [vmem:[%s0 + $0x2] sm:$0x3]
  %v73 = vld [vmem:[%s0 + $0x4] sm:$0x3]
  %v74 = vld [vmem:[%s0 + $0x6] sm:$0x3]
  %v75 = vld [vmem:[%s0 + $0x8] sm:$0x3]
  %v76 = vld [vmem:[%s0 + $0xa] sm:$0x3]
  %v77 = vld [vmem:[%s0 + $0xc] sm:$0x3]
  %v78 = vld [vmem:[%s0 + $0xe] sm:$0x3]
  %v79 = vld [vmem:[%s1] sm:$0xf]
  %v80 = vld [vmem:[%s2] sm:$0x1]
  %v81 = vld [vmem:[%s3] sm:$0x1]
  %v82 = vld [vmem:[%s4] sm:$0xf]
  %v83 = vld [vmem:[%s5] sm:$0x1]
  %v84 = vld [vmem:[%s6] sm:$0x1]
  %v86 = vlaneseq
  %v87 = vshrl.u32 %v86, 7
  %v88 = vsub.s32 0, %v87
  %v89 = vrot.slane %v81, %v88
  %v91 = vlaneseq
  %v92 = vshrl.u32 %v91, 7
  %v93 = vsub.s32 0, %v92
  %v94 = vrot.slane %v79, %v93
  %v95 = vlaneseq
  %v96 = vshrl.u32 %v95, 7
  %v97 = vsub.s32 1, %v96
  %v98 = vrot.slane %v79, %v97
  %v99 = vlaneseq
  %v100 = vshrl.u32 %v99, 7
  %v101 = vsub.s32 2, %v100
  %v102 = vrot.slane %v79, %v101
  %v103 = vlaneseq
  %v104 = vshrl.u32 %v103, 7
  %v105 = vsub.s32 3, %v104
  %v106 = vrot.slane %v79, %v105
  %v108 = vlaneseq
  %v109 = vshrl.u32 %v108, 7
  %v110 = vsub.s32 0, %v109
  %v111 = vrot.slane %v80, %v110
  %114 = vset.pattern.permute.xlu0 0
  %115 = vperm.xlu0 %114, %v71
  %v116 = vpop.permute.xlu0 %115
  %v118 = vmul.f32 %v116, %v94
  %v119 = vadd.f32 %v89, %v118
  %120 = vset.pattern.permute.xlu0 1
  %121 = vperm.xlu0 %120, %v71
  %v122 = vpop.permute.xlu0 %121
  %v124 = vmul.f32 %v122, %v98
  %v125 = vadd.f32 %v119, %v124
  %126 = vset.pattern.permute.xlu0 2
  %127 = vperm.xlu0 %126, %v71
  %v128 = vpop.permute.xlu0 %127
  %v130 = vmul.f32 %v128, %v102
  %v131 = vadd.f32 %v125, %v130
  %132 = vset.pattern.permute.xlu0 3
  %133 = vperm.xlu0 %132, %v71
  %v134 = vpop.permute.xlu0 %133
  %v136 = vmul.f32 %v134, %v106
  %v137 = vadd.f32 %v131, %v136
  %v138 = vmul.f32 %v111, 0.0
  %v139 = vadd.f32 %v137, %v138
  %v140 = vxor.u32 %v139, 2147483648
  %v141 = vmul.f32 %v140, 1.442695
  %v142 = vpow.pop %v141
  %v143 = vadd.f32 %v142, 1.0
  %v144 = vrcp.pop %v143
  %v145 = vmul.f32 1.0, %v144
  %v146 = vtanh.pop %v139
  %v147 = vmul.f32 %v145, 0.0
  %149 = vrot.lane.b32.xlu0 %v146, 126
  %v150 = vpop.permute.xlu0 %149
  %v152 = vmul.f32 %v145, %v150
  %154 = vrot.lane.b32.xlu0 %v152, 1
  %v155 = vpop.permute.xlu0 %154
  %v157 = vadd.f32 %v147, %v155
  %v158 = vtanh.pop %v157
  %160 = vrot.lane.b32.xlu0 %v158, 2
  %v161 = vpop.permute.xlu0 %160
  %v163 = vmul.f32 %v145, %v161
  %165 = vset.pattern.permute.xlu0 0
  %166 = vperm.xlu0 %165, %v72
  %v167 = vpop.permute.xlu0 %166
  %v169 = vmul.f32 %v167, %v94
  %v170 = vadd.f32 %v89, %v169
  %171 = vset.pattern.permute.xlu0 1
  %172 = vperm.xlu0 %171, %v72
  %v173 = vpop.permute.xlu0 %172
  %v175 = vmul.f32 %v173, %v98
  %v176 = vadd.f32 %v170, %v175
  %177 = vset.pattern.permute.xlu0 2
  %178 = vperm.xlu0 %177, %v72
  %v179 = vpop.permute.xlu0 %178
  %v181 = vmul.f32 %v179, %v102
  %v182 = vadd.f32 %v176, %v181
  %183 = vset.pattern.permute.xlu0 3
  %184 = vperm.xlu0 %183, %v72
  %v185 = vpop.permute.xlu0 %184
  %v187 = vmul.f32 %v185, %v106
  %v188 = vadd.f32 %v182, %v187
  %190 = vset.pattern.permute.xlu0 3
  %191 = vperm.xlu0 %190, %v163
  %v192 = vpop.permute.xlu0 %191
  %v194 = vmul.f32 %v192, %v111
  %v195 = vadd.f32 %v188, %v194
  %v196 = vxor.u32 %v195, 2147483648
  %v197 = vmul.f32 %v196, 1.442695
  %v198 = vpow.pop %v197
  %v199 = vadd.f32 %v198, 1.0
  %v200 = vrcp.pop %v199
  %v201 = vmul.f32 1.0, %v200
  %v202 = vtanh.pop %v195
  %v203 = vmul.f32 %v201, %v157
  %205 = vrot.lane.b32.xlu0 %v202, 126
  %v206 = vpop.permute.xlu0 %205
  %v208 = vmul.f32 %v201, %v206
  %210 = vrot.lane.b32.xlu0 %v208, 1
  %v211 = vpop.permute.xlu0 %210
  %v213 = vadd.f32 %v203, %v211
  %v214 = vtanh.pop %v213
  %216 = vrot.lane.b32.xlu0 %v214, 2
  %v217 = vpop.permute.xlu0 %216
  %v219 = vmul.f32 %v201, %v217
  %221 = vset.pattern.permute.xlu0 0
  %222 = vperm.xlu0 %221, %v73
  %v223 = vpop.permute.xlu0 %222
  %v225 = vmul.f32 %v223, %v94
  %v226 = vadd.f32 %v89, %v225
  %227 = vset.pattern.permute.xlu0 1
  %228 = vperm.xlu0 %227, %v73
  %v229 = vpop.permute.xlu0 %228
  %v231 = vmul.f32 %v229, %v98
  %v232 = vadd.f32 %v226, %v231
  %233 = vset.pattern.permute.xlu0 2
  %234 = vperm.xlu0 %233, %v73
  %v235 = vpop.permute.xlu0 %234
  %v237 = vmul.f32 %v235, %v102
  %v238 = vadd.f32 %v232, %v237
  %239 = vset.pattern.permute.xlu0 3
  %240 = vperm.xlu0 %239, %v73
  %v241 = vpop.permute.xlu0 %240
  %v243 = vmul.f32 %v241, %v106
  %v244 = vadd.f32 %v238, %v243
  %246 = vset.pattern.permute.xlu0 3
  %247 = vperm.xlu0 %246, %v219
  %v248 = vpop.permute.xlu0 %247
  %v250 = vmul.f32 %v248, %v111
  %v251 = vadd.f32 %v244, %v250
  %v252 = vxor.u32 %v251, 2147483648
  %v253 = vmul.f32 %v252, 1.442695
  %v254 = vpow.pop %v253
  %v255 = vadd.f32 %v254, 1.0
  %v256 = vrcp.pop %v255
  %v257 = vmul.f32 1.0, %v256
  %v258 = vtanh.pop %v251
  %v259 = vmul.f32 %v257, %v213
  %261 = vrot.lane.b32.xlu0 %v258, 126
  %v262 = vpop.permute.xlu0 %261
  %v264 = vmul.f32 %v257, %v262
  %266 = vrot.lane.b32.xlu0 %v264, 1
  %v267 = vpop.permute.xlu0 %266
  %v269 = vadd.f32 %v259, %v267
  %v270 = vtanh.pop %v269
  %272 = vrot.lane.b32.xlu0 %v270, 2
  %v273 = vpop.permute.xlu0 %272
  %v275 = vmul.f32 %v257, %v273
  %277 = vset.pattern.permute.xlu0 0
  %278 = vperm.xlu0 %277, %v74
  %v279 = vpop.permute.xlu0 %278
  %v281 = vmul.f32 %v279, %v94
  %v282 = vadd.f32 %v89, %v281
  %283 = vset.pattern.permute.xlu0 1
  %284 = vperm.xlu0 %283, %v74
  %v285 = vpop.permute.xlu0 %284
  %v287 = vmul.f32 %v285, %v98
  %v288 = vadd.f32 %v282, %v287
  %289 = vset.pattern.permute.xlu0 2
  %290 = vperm.xlu0 %289, %v74
  %v291 = vpop.permute.xlu0 %290
  %v293 = vmul.f32 %v291, %v102
  %v294 = vadd.f32 %v288, %v293
  %295 = vset.pattern.permute.xlu0 3
  %296 = vperm.xlu0 %295, %v74
  %v297 = vpop.permute.xlu0 %296
  %v299 = vmul.f32 %v297, %v106
  %v300 = vadd.f32 %v294, %v299
  %302 = vset.pattern.permute.xlu0 3
  %303 = vperm.xlu0 %302, %v275
  %v304 = vpop.permute.xlu0 %303
  %v306 = vmul.f32 %v304, %v111
  %v307 = vadd.f32 %v300, %v306
  %v308 = vxor.u32 %v307, 2147483648
  %v309 = vmul.f32 %v308, 1.442695
  %v310 = vpow.pop %v309
  %v311 = vadd.f32 %v310, 1.0
  %v312 = vrcp.pop %v311
  %v313 = vmul.f32 1.0, %v312
  %v314 = vtanh.pop %v307
  %v315 = vmul.f32 %v313, %v269
  %317 = vrot.lane.b32.xlu0 %v314, 126
  %v318 = vpop.permute.xlu0 %317
  %v320 = vmul.f32 %v313, %v318
  %322 = vrot.lane.b32.xlu0 %v320, 1
  %v323 = vpop.permute.xlu0 %322
  %v325 = vadd.f32 %v315, %v323
  %v326 = vtanh.pop %v325
  %328 = vrot.lane.b32.xlu0 %v326, 2
  %v329 = vpop.permute.xlu0 %328
  %v331 = vmul.f32 %v313, %v329
  %333 = vset.pattern.permute.xlu0 0
  %334 = vperm.xlu0 %333, %v75
  %v335 = vpop.permute.xlu0 %334
  %v337 = vmul.f32 %v335, %v94
  %v338 = vadd.f32 %v89, %v337
  %339 = vset.pattern.permute.xlu0 1
  %340 = vperm.xlu0 %339, %v75
  %v341 = vpop.permute.xlu0 %340
  %v343 = vmul.f32 %v341, %v98
  %v344 = vadd.f32 %v338, %v343
  %345 = vset.pattern.permute.xlu0 2
  %346 = vperm.xlu0 %345, %v75
  %v347 = vpop.permute.xlu0 %346
  %v349 = vmul.f32 %v347, %v102
  %v350 = vadd.f32 %v344, %v349
  %351 = vset.pattern.permute.xlu0 3
  %352 = vperm.xlu0 %351, %v75
  %v353 = vpop.permute.xlu0 %352
  %v355 = vmul.f32 %v353, %v106
  %v356 = vadd.f32 %v350, %v355
  %358 = vset.pattern.permute.xlu0 3
  %359 = vperm.xlu0 %358, %v331
  %v360 = vpop.permute.xlu0 %359
  %v362 = vmul.f32 %v360, %v111
  %v363 = vadd.f32 %v356, %v362
  %v364 = vxor.u32 %v363, 2147483648
  %v365 = vmul.f32 %v364, 1.442695
  %v366 = vpow.pop %v365
  %v367 = vadd.f32 %v366, 1.0
  %v368 = vrcp.pop %v367
  %v369 = vmul.f32 1.0, %v368
  %v370 = vtanh.pop %v363
  %v371 = vmul.f32 %v369, %v325
  %373 = vrot.lane.b32.xlu0 %v370, 126
  %v374 = vpop.permute.xlu0 %373
  %v376 = vmul.f32 %v369, %v374
  %378 = vrot.lane.b32.xlu0 %v376, 1
  %v379 = vpop.permute.xlu0 %378
  %v381 = vadd.f32 %v371, %v379
  %v382 = vtanh.pop %v381
  %384 = vrot.lane.b32.xlu0 %v382, 2
  %v385 = vpop.permute.xlu0 %384
  %v387 = vmul.f32 %v369, %v385
  %389 = vset.pattern.permute.xlu0 0
  %390 = vperm.xlu0 %389, %v76
  %v391 = vpop.permute.xlu0 %390
  %v393 = vmul.f32 %v391, %v94
  %v394 = vadd.f32 %v89, %v393
  %395 = vset.pattern.permute.xlu0 1
  %396 = vperm.xlu0 %395, %v76
  %v397 = vpop.permute.xlu0 %396
  %v399 = vmul.f32 %v397, %v98
  %v400 = vadd.f32 %v394, %v399
  %401 = vset.pattern.permute.xlu0 2
  %402 = vperm.xlu0 %401, %v76
  %v403 = vpop.permute.xlu0 %402
  %v405 = vmul.f32 %v403, %v102
  %v406 = vadd.f32 %v400, %v405
  %407 = vset.pattern.permute.xlu0 3
  %408 = vperm.xlu0 %407, %v76
  %v409 = vpop.permute.xlu0 %408
  %v411 = vmul.f32 %v409, %v106
  %v412 = vadd.f32 %v406, %v411
  %414 = vset.pattern.permute.xlu0 3
  %415 = vperm.xlu0 %414, %v387
  %v416 = vpop.permute.xlu0 %415
  %v418 = vmul.f32 %v416, %v111
  %v419 = vadd.f32 %v412, %v418
  %v420 = vxor.u32 %v419, 2147483648
  %v421 = vmul.f32 %v420, 1.442695
  %v422 = vpow.pop %v421
  %v423 = vadd.f32 %v422, 1.0
  %v424 = vrcp.pop %v423
  %v425 = vmul.f32 1.0, %v424
  %v426 = vtanh.pop %v419
  %v427 = vmul.f32 %v425, %v381
  %429 = vrot.lane.b32.xlu0 %v426, 126
  %v430 = vpop.permute.xlu0 %429
  %v432 = vmul.f32 %v425, %v430
  %434 = vrot.lane.b32.xlu0 %v432, 1
  %v435 = vpop.permute.xlu0 %434
  %v437 = vadd.f32 %v427, %v435
  %v438 = vtanh.pop %v437
  %440 = vrot.lane.b32.xlu0 %v438, 2
  %v441 = vpop.permute.xlu0 %440
  %v443 = vmul.f32 %v425, %v441
  %445 = vset.pattern.permute.xlu0 0
  %446 = vperm.xlu0 %445, %v77
  %v447 = vpop.permute.xlu0 %446
  %v449 = vmul.f32 %v447, %v94
  %v450 = vadd.f32 %v89, %v449
  %451 = vset.pattern.permute.xlu0 1
  %452 = vperm.xlu0 %451, %v77
  %v453 = vpop.permute.xlu0 %452
  %v455 = vmul.f32 %v453, %v98
  %v456 = vadd.f32 %v450, %v455
  %457 = vset.pattern.permute.xlu0 2
  %458 = vperm.xlu0 %457, %v77
  %v459 = vpop.permute.xlu0 %458
  %v461 = vmul.f32 %v459, %v102
  %v462 = vadd.f32 %v456, %v461
  %463 = vset.pattern.permute.xlu0 3
  %464 = vperm.xlu0 %463, %v77
  %v465 = vpop.permute.xlu0 %464
  %v467 = vmul.f32 %v465, %v106
  %v468 = vadd.f32 %v462, %v467
  %470 = vset.pattern.permute.xlu0 3
  %471 = vperm.xlu0 %470, %v443
  %v472 = vpop.permute.xlu0 %471
  %v474 = vmul.f32 %v472, %v111
  %v475 = vadd.f32 %v468, %v474
  %v476 = vxor.u32 %v475, 2147483648
  %v477 = vmul.f32 %v476, 1.442695
  %v478 = vpow.pop %v477
  %v479 = vadd.f32 %v478, 1.0
  %v480 = vrcp.pop %v479
  %v481 = vmul.f32 1.0, %v480
  %v482 = vtanh.pop %v475
  %v483 = vmul.f32 %v481, %v437
  %485 = vrot.lane.b32.xlu0 %v482, 126
  %v486 = vpop.permute.xlu0 %485
  %v488 = vmul.f32 %v481, %v486
  %490 = vrot.lane.b32.xlu0 %v488, 1
  %v491 = vpop.permute.xlu0 %490
  %v493 = vadd.f32 %v483, %v491
  %v494 = vtanh.pop %v493
  %496 = vrot.lane.b32.xlu0 %v494, 2
  %v497 = vpop.permute.xlu0 %496
  %v499 = vmul.f32 %v481, %v497
  %501 = vset.pattern.permute.xlu0 0
  %502 = vperm.xlu0 %501, %v78
  %v503 = vpop.permute.xlu0 %502
  %v505 = vmul.f32 %v503, %v94
  %v506 = vadd.f32 %v89, %v505
  %507 = vset.pattern.permute.xlu0 1
  %508 = vperm.xlu0 %507, %v78
  %v509 = vpop.permute.xlu0 %508
  %v511 = vmul.f32 %v509, %v98
  %v512 = vadd.f32 %v506, %v511
  %513 = vset.pattern.permute.xlu0 2
  %514 = vperm.xlu0 %513, %v78
  %v515 = vpop.permute.xlu0 %514
  %v517 = vmul.f32 %v515, %v102
  %v518 = vadd.f32 %v512, %v517
  %519 = vset.pattern.permute.xlu0 3
  %520 = vperm.xlu0 %519, %v78
  %v521 = vpop.permute.xlu0 %520
  %v523 = vmul.f32 %v521, %v106
  %v524 = vadd.f32 %v518, %v523
  %526 = vset.pattern.permute.xlu0 3
  %527 = vperm.xlu0 %526, %v499
  %v528 = vpop.permute.xlu0 %527
  %v530 = vmul.f32 %v528, %v111
  %v531 = vadd.f32 %v524, %v530
  %v532 = vxor.u32 %v531, 2147483648
  %v533 = vmul.f32 %v532, 1.442695
  %v534 = vpow.pop %v533
  %v535 = vadd.f32 %v534, 1.0
  %v536 = vrcp.pop %v535
  %v537 = vmul.f32 1.0, %v536
  %v538 = vtanh.pop %v531
  %v539 = vmul.f32 %v537, %v493
  %541 = vrot.lane.b32.xlu0 %v538, 126
  %v542 = vpop.permute.xlu0 %541
  %v544 = vmul.f32 %v537, %v542
  %546 = vrot.lane.b32.xlu0 %v544, 1
  %v547 = vpop.permute.xlu0 %546
  %v549 = vadd.f32 %v539, %v547
  %v550 = vtanh.pop %v549
  %552 = vrot.lane.b32.xlu0 %v550, 2
  %v553 = vpop.permute.xlu0 %552
  %v555 = vmul.f32 %v537, %v553
  %v557 = vlaneseq
  %v558 = vshrl.u32 %v557, 7
  %v559 = vsub.s32 0, %v558
  %v560 = vrot.slane %v84, %v559
  %v562 = vlaneseq
  %v563 = vshrl.u32 %v562, 7
  %v564 = vsub.s32 0, %v563
  %v565 = vrot.slane %v82, %v564
  %v566 = vlaneseq
  %v567 = vshrl.u32 %v566, 7
  %v568 = vsub.s32 1, %v567
  %v569 = vrot.slane %v82, %v568
  %v570 = vlaneseq
  %v571 = vshrl.u32 %v570, 7
  %v572 = vsub.s32 2, %v571
  %v573 = vrot.slane %v82, %v572
  %v574 = vlaneseq
  %v575 = vshrl.u32 %v574, 7
  %v576 = vsub.s32 3, %v575
  %v577 = vrot.slane %v82, %v576
  %v579 = vlaneseq
  %v580 = vshrl.u32 %v579, 7
  %v581 = vsub.s32 0, %v580
  %v582 = vrot.slane %v83, %v581
  %v584 = vmul.f32 %v503, %v565
  %v585 = vadd.f32 %v560, %v584
  %v586 = vmul.f32 %v509, %v569
  %v587 = vadd.f32 %v585, %v586
  %v588 = vmul.f32 %v515, %v573
  %v589 = vadd.f32 %v587, %v588
  %v590 = vmul.f32 %v521, %v577
  %v591 = vadd.f32 %v589, %v590
  %v592 = vmul.f32 %v582, 0.0
  %v593 = vadd.f32 %v591, %v592
  %v594 = vxor.u32 %v593, 2147483648
  %v595 = vmul.f32 %v594, 1.442695
  %v596 = vpow.pop %v595
  %v597 = vadd.f32 %v596, 1.0
  %v598 = vrcp.pop %v597
  %v599 = vmul.f32 1.0, %v598
  %v600 = vtanh.pop %v593
  %v601 = vmul.f32 %v599, 0.0
  %603 = vrot.lane.b32.xlu0 %v600, 126
  %v604 = vpop.permute.xlu0 %603
  %v606 = vmul.f32 %v599, %v604
  %608 = vrot.lane.b32.xlu0 %v606, 1
  %v609 = vpop.permute.xlu0 %608
  %v611 = vadd.f32 %v601, %v609
  %v612 = vtanh.pop %v611
  %614 = vrot.lane.b32.xlu0 %v612, 2
  %v615 = vpop.permute.xlu0 %614
  %v617 = vmul.f32 %v599, %v615
  %v618 = vmul.f32 %v447, %v565
  %v619 = vadd.f32 %v560, %v618
  %v620 = vmul.f32 %v453, %v569
  %v621 = vadd.f32 %v619, %v620
  %v622 = vmul.f32 %v459, %v573
  %v623 = vadd.f32 %v621, %v622
  %v624 = vmul.f32 %v465, %v577
  %v625 = vadd.f32 %v623, %v624
  %627 = vset.pattern.permute.xlu0 3
  %628 = vperm.xlu0 %627, %v617
  %v629 = vpop.permute.xlu0 %628
  %v631 = vmul.f32 %v629, %v582
  %v632 = vadd.f32 %v625, %v631
  %v633 = vxor.u32 %v632, 2147483648
  %v634 = vmul.f32 %v633, 1.442695
  %v635 = vpow.pop %v634
  %v636 = vadd.f32 %v635, 1.0
  %v637 = vrcp.pop %v636
  %v638 = vmul.f32 1.0, %v637
  %v639 = vtanh.pop %v632
  %v640 = vmul.f32 %v638, %v611
  %642 = vrot.lane.b32.xlu0 %v639, 126
  %v643 = vpop.permute.xlu0 %642
  %v645 = vmul.f32 %v638, %v643
  %647 = vrot.lane.b32.xlu0 %v645, 1
  %v648 = vpop.permute.xlu0 %647
  %v650 = vadd.f32 %v640, %v648
  %v651 = vtanh.pop %v650
  %653 = vrot.lane.b32.xlu0 %v651, 2
  %v654 = vpop.permute.xlu0 %653
  %v656 = vmul.f32 %v638, %v654
  %v657 = vmul.f32 %v391, %v565
  %v658 = vadd.f32 %v560, %v657
  %v659 = vmul.f32 %v397, %v569
  %v660 = vadd.f32 %v658, %v659
  %v661 = vmul.f32 %v403, %v573
  %v662 = vadd.f32 %v660, %v661
  %v663 = vmul.f32 %v409, %v577
  %v664 = vadd.f32 %v662, %v663
  %666 = vset.pattern.permute.xlu0 3
  %667 = vperm.xlu0 %666, %v656
  %v668 = vpop.permute.xlu0 %667
  %v670 = vmul.f32 %v668, %v582
  %v671 = vadd.f32 %v664, %v670
  %v672 = vxor.u32 %v671, 2147483648
  %v673 = vmul.f32 %v672, 1.442695
  %v674 = vpow.pop %v673
  %v675 = vadd.f32 %v674, 1.0
  %v676 = vrcp.pop %v675
  %v677 = vmul.f32 1.0, %v676
  %v678 = vtanh.pop %v671
  %v679 = vmul.f32 %v677, %v650
  %681 = vrot.lane.b32.xlu0 %v678, 126
  %v682 = vpop.permute.xlu0 %681
  %v684 = vmul.f32 %v677, %v682
  %686 = vrot.lane.b32.xlu0 %v684, 1
  %v687 = vpop.permute.xlu0 %686
  %v689 = vadd.f32 %v679, %v687
  %v690 = vtanh.pop %v689
  %692 = vrot.lane.b32.xlu0 %v690, 2
  %v693 = vpop.permute.xlu0 %692
  %v695 = vmul.f32 %v677, %v693
  %v696 = vmul.f32 %v335, %v565
  %v697 = vadd.f32 %v560, %v696
  %v698 = vmul.f32 %v341, %v569
  %v699 = vadd.f32 %v697, %v698
  %v700 = vmul.f32 %v347, %v573
  %v701 = vadd.f32 %v699, %v700
  %v702 = vmul.f32 %v353, %v577
  %v703 = vadd.f32 %v701, %v702
  %705 = vset.pattern.permute.xlu0 3
  %706 = vperm.xlu0 %705, %v695
  %v707 = vpop.permute.xlu0 %706
  %v709 = vmul.f32 %v707, %v582
  %v710 = vadd.f32 %v703, %v709
  %v711 = vxor.u32 %v710, 2147483648
  %v712 = vmul.f32 %v711, 1.442695
  %v713 = vpow.pop %v712
  %v714 = vadd.f32 %v713, 1.0
  %v715 = vrcp.pop %v714
  %v716 = vmul.f32 1.0, %v715
  %v717 = vtanh.pop %v710
  %v718 = vmul.f32 %v716, %v689
  %720 = vrot.lane.b32.xlu0 %v717, 126
  %v721 = vpop.permute.xlu0 %720
  %v723 = vmul.f32 %v716, %v721
  %725 = vrot.lane.b32.xlu0 %v723, 1
  %v726 = vpop.permute.xlu0 %725
  %v728 = vadd.f32 %v718, %v726
  %v729 = vtanh.pop %v728
  %731 = vrot.lane.b32.xlu0 %v729, 2
  %v732 = vpop.permute.xlu0 %731
  %v734 = vmul.f32 %v716, %v732
  %v735 = vmul.f32 %v279, %v565
  %v736 = vadd.f32 %v560, %v735
  %v737 = vmul.f32 %v285, %v569
  %v738 = vadd.f32 %v736, %v737
  %v739 = vmul.f32 %v291, %v573
  %v740 = vadd.f32 %v738, %v739
  %v741 = vmul.f32 %v297, %v577
  %v742 = vadd.f32 %v740, %v741
  %744 = vset.pattern.permute.xlu0 3
  %745 = vperm.xlu0 %744, %v734
  %v746 = vpop.permute.xlu0 %745
  %v748 = vmul.f32 %v746, %v582
  %v749 = vadd.f32 %v742, %v748
  %v750 = vxor.u32 %v749, 2147483648
  %v751 = vmul.f32 %v750, 1.442695
  %v752 = vpow.pop %v751
  %v753 = vadd.f32 %v752, 1.0
  %v754 = vrcp.pop %v753
  %v755 = vmul.f32 1.0, %v754
  %v756 = vtanh.pop %v749
  %v757 = vmul.f32 %v755, %v728
  %759 = vrot.lane.b32.xlu0 %v756, 126
  %v760 = vpop.permute.xlu0 %759
  %v762 = vmul.f32 %v755, %v760
  %764 = vrot.lane.b32.xlu0 %v762, 1
  %v765 = vpop.permute.xlu0 %764
  %v767 = vadd.f32 %v757, %v765
  %v768 = vtanh.pop %v767
  %770 = vrot.lane.b32.xlu0 %v768, 2
  %v771 = vpop.permute.xlu0 %770
  %v773 = vmul.f32 %v755, %v771
  %v774 = vmul.f32 %v223, %v565
  %v775 = vadd.f32 %v560, %v774
  %v776 = vmul.f32 %v229, %v569
  %v777 = vadd.f32 %v775, %v776
  %v778 = vmul.f32 %v235, %v573
  %v779 = vadd.f32 %v777, %v778
  %v780 = vmul.f32 %v241, %v577
  %v781 = vadd.f32 %v779, %v780
  %783 = vset.pattern.permute.xlu0 3
  %784 = vperm.xlu0 %783, %v773
  %v785 = vpop.permute.xlu0 %784
  %v787 = vmul.f32 %v785, %v582
  %v788 = vadd.f32 %v781, %v787
  %v789 = vxor.u32 %v788, 2147483648
  %v790 = vmul.f32 %v789, 1.442695
  %v791 = vpow.pop %v790
  %v792 = vadd.f32 %v791, 1.0
  %v793 = vrcp.pop %v792
  %v794 = vmul.f32 1.0, %v793
  %v795 = vtanh.pop %v788
  %v796 = vmul.f32 %v794, %v767
  %798 = vrot.lane.b32.xlu0 %v795, 126
  %v799 = vpop.permute.xlu0 %798
  %v801 = vmul.f32 %v794, %v799
  %803 = vrot.lane.b32.xlu0 %v801, 1
  %v804 = vpop.permute.xlu0 %803
  %v806 = vadd.f32 %v796, %v804
  %v807 = vtanh.pop %v806
  %809 = vrot.lane.b32.xlu0 %v807, 2
  %v810 = vpop.permute.xlu0 %809
  %v812 = vmul.f32 %v794, %v810
  %v813 = vmul.f32 %v167, %v565
  %v814 = vadd.f32 %v560, %v813
  %v815 = vmul.f32 %v173, %v569
  %v816 = vadd.f32 %v814, %v815
  %v817 = vmul.f32 %v179, %v573
  %v818 = vadd.f32 %v816, %v817
  %v819 = vmul.f32 %v185, %v577
  %v820 = vadd.f32 %v818, %v819
  %822 = vset.pattern.permute.xlu0 3
  %823 = vperm.xlu0 %822, %v812
  %v824 = vpop.permute.xlu0 %823
  %v826 = vmul.f32 %v824, %v582
  %v827 = vadd.f32 %v820, %v826
  %v828 = vxor.u32 %v827, 2147483648
  %v829 = vmul.f32 %v828, 1.442695
  %v830 = vpow.pop %v829
  %v831 = vadd.f32 %v830, 1.0
  %v832 = vrcp.pop %v831
  %v833 = vmul.f32 1.0, %v832
  %v834 = vtanh.pop %v827
  %v835 = vmul.f32 %v833, %v806
  %837 = vrot.lane.b32.xlu0 %v834, 126
  %v838 = vpop.permute.xlu0 %837
  %v840 = vmul.f32 %v833, %v838
  %842 = vrot.lane.b32.xlu0 %v840, 1
  %v843 = vpop.permute.xlu0 %842
  %v845 = vadd.f32 %v835, %v843
  %v846 = vtanh.pop %v845
  %848 = vrot.lane.b32.xlu0 %v846, 2
  %v849 = vpop.permute.xlu0 %848
  %v851 = vmul.f32 %v833, %v849
  %v852 = vmul.f32 %v116, %v565
  %v853 = vadd.f32 %v560, %v852
  %v854 = vmul.f32 %v122, %v569
  %v855 = vadd.f32 %v853, %v854
  %v856 = vmul.f32 %v128, %v573
  %v857 = vadd.f32 %v855, %v856
  %v858 = vmul.f32 %v134, %v577
  %v859 = vadd.f32 %v857, %v858
  %861 = vset.pattern.permute.xlu0 3
  %862 = vperm.xlu0 %861, %v851
  %v863 = vpop.permute.xlu0 %862
  %v865 = vmul.f32 %v863, %v582
  %v866 = vadd.f32 %v859, %v865
  %v867 = vxor.u32 %v866, 2147483648
  %v868 = vmul.f32 %v867, 1.442695
  %v869 = vpow.pop %v868
  %v870 = vadd.f32 %v869, 1.0
  %v871 = vrcp.pop %v870
  %v872 = vmul.f32 1.0, %v871
  %v873 = vtanh.pop %v866
  %v874 = vmul.f32 %v872, %v845
  %876 = vrot.lane.b32.xlu0 %v873, 126
  %v877 = vpop.permute.xlu0 %876
  %v879 = vmul.f32 %v872, %v877
  %881 = vrot.lane.b32.xlu0 %v879, 1
  %v882 = vpop.permute.xlu0 %881
  %v884 = vadd.f32 %v874, %v882
  %v885 = vtanh.pop %v884
  %887 = vrot.lane.b32.xlu0 %v885, 2
  %v888 = vpop.permute.xlu0 %887
  %v890 = vmul.f32 %v872, %v888
  %v891 = vld [vmem:[%s7] sm:$0x1]
  %v892 = vld [vmem:[%s8] sm:$0x1]
  %v893 = vld [vmem:[%s9] sm:$0x1]
  %v894 = vld [vmem:[%s10] sm:$0x1]
  %v895 = vld [vmem:[%s11] sm:$0x1]
  %v896 = vld [vmem:[%s12] sm:$0x1]
  %v897 = vld [vmem:[%s13] sm:$0x1]
  %v898 = vld [vmem:[%s14] sm:$0x1]
  %v900 = vlaneseq
  %v901 = vshrl.u32 %v900, 7
  %v902 = vsub.s32 0, %v901
  %v903 = vrot.slane %v894, %v902
  %v906 = vlaneseq
  %v907 = vshrl.u32 %v906, 7
  %v908 = vsub.s32 0, %v907
  %v909 = vrot.slane %v891, %v908
  %v912 = vlaneseq
  %v913 = vshrl.u32 %v912, 7
  %v914 = vsub.s32 0, %v913
  %v915 = vrot.slane %v892, %v914
  %v918 = vlaneseq
  %v919 = vshrl.u32 %v918, 7
  %v920 = vsub.s32 0, %v919
  %v921 = vrot.slane %v893, %v920
  %v923 = vmul.f32 %v192, %v909
  %v924 = vadd.f32 %v903, %v923
  %926 = vset.pattern.permute.xlu0 3
  %927 = vperm.xlu0 %926, %v890
  %v928 = vpop.permute.xlu0 %927
  %v930 = vmul.f32 %v928, %v915
  %v931 = vadd.f32 %v924, %v930
  %v932 = vmul.f32 %v921, 0.0
  %v933 = vadd.f32 %v931, %v932
  %v934 = vxor.u32 %v933, 2147483648
  %v935 = vmul.f32 %v934, 1.442695
  %v936 = vpow.pop %v935
  %v937 = vadd.f32 %v936, 1.0
  %v938 = vrcp.pop %v937
  %v939 = vmul.f32 1.0, %v938
  %v940 = vtanh.pop %v933
  %v941 = vmul.f32 %v939, 0.0
  %943 = vrot.lane.b32.xlu0 %v940, 126
  %v944 = vpop.permute.xlu0 %943
  %v946 = vmul.f32 %v939, %v944
  %948 = vrot.lane.b32.xlu0 %v946, 1
  %v949 = vpop.permute.xlu0 %948
  %v951 = vadd.f32 %v941, %v949
  %v952 = vtanh.pop %v951
  %954 = vrot.lane.b32.xlu0 %v952, 2
  %v955 = vpop.permute.xlu0 %954
  %v957 = vmul.f32 %v939, %v955
  %v958 = vmul.f32 %v248, %v909
  %v959 = vadd.f32 %v903, %v958
  %v960 = vmul.f32 %v863, %v915
  %v961 = vadd.f32 %v959, %v960
  %963 = vset.pattern.permute.xlu0 3
  %964 = vperm.xlu0 %963, %v957
  %v965 = vpop.permute.xlu0 %964
  %v967 = vmul.f32 %v965, %v921
  %v968 = vadd.f32 %v961, %v967
  %v969 = vxor.u32 %v968, 2147483648
  %v970 = vmul.f32 %v969, 1.442695
  %v971 = vpow.pop %v970
  %v972 = vadd.f32 %v971, 1.0
  %v973 = vrcp.pop %v972
  %v974 = vmul.f32 1.0, %v973
  %v975 = vtanh.pop %v968
  %v976 = vmul.f32 %v974, %v951
  %978 = vrot.lane.b32.xlu0 %v975, 126
  %v979 = vpop.permute.xlu0 %978
  %v981 = vmul.f32 %v974, %v979
  %983 = vrot.lane.b32.xlu0 %v981, 1
  %v984 = vpop.permute.xlu0 %983
  %v986 = vadd.f32 %v976, %v984
  %v987 = vtanh.pop %v986
  %989 = vrot.lane.b32.xlu0 %v987, 2
  %v990 = vpop.permute.xlu0 %989
  %v992 = vmul.f32 %v974, %v990
  %v993 = vmul.f32 %v304, %v909
  %v994 = vadd.f32 %v903, %v993
  %v995 = vmul.f32 %v824, %v915
  %v996 = vadd.f32 %v994, %v995
  %998 = vset.pattern.permute.xlu0 3
  %999 = vperm.xlu0 %998, %v992
  %v1000 = vpop.permute.xlu0 %999
  %v1002 = vmul.f32 %v1000, %v921
  %v1003 = vadd.f32 %v996, %v1002
  %v1004 = vxor.u32 %v1003, 2147483648
  %v1005 = vmul.f32 %v1004, 1.442695
  %v1006 = vpow.pop %v1005
  %v1007 = vadd.f32 %v1006, 1.0
  %v1008 = vrcp.pop %v1007
  %v1009 = vmul.f32 1.0, %v1008
  %v1010 = vtanh.pop %v1003
  %v1011 = vmul.f32 %v1009, %v986
  %1013 = vrot.lane.b32.xlu0 %v1010, 126
  %v1014 = vpop.permute.xlu0 %1013
  %v1016 = vmul.f32 %v1009, %v1014
  %1018 = vrot.lane.b32.xlu0 %v1016, 1
  %v1019 = vpop.permute.xlu0 %1018
  %v1021 = vadd.f32 %v1011, %v1019
  %v1022 = vtanh.pop %v1021
  %1024 = vrot.lane.b32.xlu0 %v1022, 2
  %v1025 = vpop.permute.xlu0 %1024
  %v1027 = vmul.f32 %v1009, %v1025
  %v1028 = vmul.f32 %v360, %v909
  %v1029 = vadd.f32 %v903, %v1028
  %v1030 = vmul.f32 %v785, %v915
  %v1031 = vadd.f32 %v1029, %v1030
  %1033 = vset.pattern.permute.xlu0 3
  %1034 = vperm.xlu0 %1033, %v1027
  %v1035 = vpop.permute.xlu0 %1034
  %v1037 = vmul.f32 %v1035, %v921
  %v1038 = vadd.f32 %v1031, %v1037
  %v1039 = vxor.u32 %v1038, 2147483648
  %v1040 = vmul.f32 %v1039, 1.442695
  %v1041 = vpow.pop %v1040
  %v1042 = vadd.f32 %v1041, 1.0
  %v1043 = vrcp.pop %v1042
  %v1044 = vmul.f32 1.0, %v1043
  %v1045 = vtanh.pop %v1038
  %v1046 = vmul.f32 %v1044, %v1021
  %1048 = vrot.lane.b32.xlu0 %v1045, 126
  %v1049 = vpop.permute.xlu0 %1048
  %v1051 = vmul.f32 %v1044, %v1049
  %1053 = vrot.lane.b32.xlu0 %v1051, 1
  %v1054 = vpop.permute.xlu0 %1053
  %v1056 = vadd.f32 %v1046, %v1054
  %v1057 = vtanh.pop %v1056
  %1059 = vrot.lane.b32.xlu0 %v1057, 2
  %v1060 = vpop.permute.xlu0 %1059
  %v1062 = vmul.f32 %v1044, %v1060
  %v1063 = vmul.f32 %v416, %v909
  %v1064 = vadd.f32 %v903, %v1063
  %v1065 = vmul.f32 %v746, %v915
  %v1066 = vadd.f32 %v1064, %v1065
  %1068 = vset.pattern.permute.xlu0 3
  %1069 = vperm.xlu0 %1068, %v1062
  %v1070 = vpop.permute.xlu0 %1069
  %v1072 = vmul.f32 %v1070, %v921
  %v1073 = vadd.f32 %v1066, %v1072
  %v1074 = vxor.u32 %v1073, 2147483648
  %v1075 = vmul.f32 %v1074, 1.442695
  %v1076 = vpow.pop %v1075
  %v1077 = vadd.f32 %v1076, 1.0
  %v1078 = vrcp.pop %v1077
  %v1079 = vmul.f32 1.0, %v1078
  %v1080 = vtanh.pop %v1073
  %v1081 = vmul.f32 %v1079, %v1056
  %1083 = vrot.lane.b32.xlu0 %v1080, 126
  %v1084 = vpop.permute.xlu0 %1083
  %v1086 = vmul.f32 %v1079, %v1084
  %1088 = vrot.lane.b32.xlu0 %v1086, 1
  %v1089 = vpop.permute.xlu0 %1088
  %v1091 = vadd.f32 %v1081, %v1089
  %v1092 = vtanh.pop %v1091
  %1094 = vrot.lane.b32.xlu0 %v1092, 2
  %v1095 = vpop.permute.xlu0 %1094
  %v1097 = vmul.f32 %v1079, %v1095
  %v1098 = vmul.f32 %v472, %v909
  %v1099 = vadd.f32 %v903, %v1098
  %v1100 = vmul.f32 %v707, %v915
  %v1101 = vadd.f32 %v1099, %v1100
  %1103 = vset.pattern.permute.xlu0 3
  %1104 = vperm.xlu0 %1103, %v1097
  %v1105 = vpop.permute.xlu0 %1104
  %v1107 = vmul.f32 %v1105, %v921
  %v1108 = vadd.f32 %v1101, %v1107
  %v1109 = vxor.u32 %v1108, 2147483648
  %v1110 = vmul.f32 %v1109, 1.442695
  %v1111 = vpow.pop %v1110
  %v1112 = vadd.f32 %v1111, 1.0
  %v1113 = vrcp.pop %v1112
  %v1114 = vmul.f32 1.0, %v1113
  %v1115 = vtanh.pop %v1108
  %v1116 = vmul.f32 %v1114, %v1091
  %1118 = vrot.lane.b32.xlu0 %v1115, 126
  %v1119 = vpop.permute.xlu0 %1118
  %v1121 = vmul.f32 %v1114, %v1119
  %1123 = vrot.lane.b32.xlu0 %v1121, 1
  %v1124 = vpop.permute.xlu0 %1123
  %v1126 = vadd.f32 %v1116, %v1124
  %v1127 = vtanh.pop %v1126
  %1129 = vrot.lane.b32.xlu0 %v1127, 2
  %v1130 = vpop.permute.xlu0 %1129
  %v1132 = vmul.f32 %v1114, %v1130
  %v1133 = vmul.f32 %v528, %v909
  %v1134 = vadd.f32 %v903, %v1133
  %v1135 = vmul.f32 %v668, %v915
  %v1136 = vadd.f32 %v1134, %v1135
  %1138 = vset.pattern.permute.xlu0 3
  %1139 = vperm.xlu0 %1138, %v1132
  %v1140 = vpop.permute.xlu0 %1139
  %v1142 = vmul.f32 %v1140, %v921
  %v1143 = vadd.f32 %v1136, %v1142
  %v1144 = vxor.u32 %v1143, 2147483648
  %v1145 = vmul.f32 %v1144, 1.442695
  %v1146 = vpow.pop %v1145
  %v1147 = vadd.f32 %v1146, 1.0
  %v1148 = vrcp.pop %v1147
  %v1149 = vmul.f32 1.0, %v1148
  %v1150 = vtanh.pop %v1143
  %v1151 = vmul.f32 %v1149, %v1126
  %1153 = vrot.lane.b32.xlu0 %v1150, 126
  %v1154 = vpop.permute.xlu0 %1153
  %v1156 = vmul.f32 %v1149, %v1154
  %1158 = vrot.lane.b32.xlu0 %v1156, 1
  %v1159 = vpop.permute.xlu0 %1158
  %v1161 = vadd.f32 %v1151, %v1159
  %v1162 = vtanh.pop %v1161
  %1164 = vrot.lane.b32.xlu0 %v1162, 2
  %v1165 = vpop.permute.xlu0 %1164
  %v1167 = vmul.f32 %v1149, %v1165
  %1169 = vset.pattern.permute.xlu0 3
  %1170 = vperm.xlu0 %1169, %v555
  %v1171 = vpop.permute.xlu0 %1170
  %v1173 = vmul.f32 %v1171, %v909
  %v1174 = vadd.f32 %v903, %v1173
  %v1175 = vmul.f32 %v629, %v915
  %v1176 = vadd.f32 %v1174, %v1175
  %1178 = vset.pattern.permute.xlu0 3
  %1179 = vperm.xlu0 %1178, %v1167
  %v1180 = vpop.permute.xlu0 %1179
  %v1182 = vmul.f32 %v1180, %v921
  %v1183 = vadd.f32 %v1176, %v1182
  %v1184 = vxor.u32 %v1183, 2147483648
  %v1185 = vmul.f32 %v1184, 1.442695
  %v1186 = vpow.pop %v1185
  %v1187 = vadd.f32 %v1186, 1.0
  %v1188 = vrcp.pop %v1187
  %v1189 = vmul.f32 1.0, %v1188
  %v1190 = vtanh.pop %v1183
  %v1191 = vmul.f32 %v1189, %v1161
  %1193 = vrot.lane.b32.xlu0 %v1190, 126
  %v1194 = vpop.permute.xlu0 %1193
  %v1196 = vmul.f32 %v1189, %v1194
  %1198 = vrot.lane.b32.xlu0 %v1196, 1
  %v1199 = vpop.permute.xlu0 %1198
  %v1201 = vadd.f32 %v1191, %v1199
  %v1202 = vtanh.pop %v1201
  %1204 = vrot.lane.b32.xlu0 %v1202, 2
  %v1205 = vpop.permute.xlu0 %1204
  %v1207 = vmul.f32 %v1189, %v1205
  %v1209 = vlaneseq
  %v1210 = vshrl.u32 %v1209, 7
  %v1211 = vsub.s32 0, %v1210
  %v1212 = vrot.slane %v898, %v1211
  %v1215 = vlaneseq
  %v1216 = vshrl.u32 %v1215, 7
  %v1217 = vsub.s32 0, %v1216
  %v1218 = vrot.slane %v895, %v1217
  %v1221 = vlaneseq
  %v1222 = vshrl.u32 %v1221, 7
  %v1223 = vsub.s32 0, %v1222
  %v1224 = vrot.slane %v896, %v1223
  %v1227 = vlaneseq
  %v1228 = vshrl.u32 %v1227, 7
  %v1229 = vsub.s32 0, %v1228
  %v1230 = vrot.slane %v897, %v1229
  %v1232 = vmul.f32 %v1171, %v1218
  %v1233 = vadd.f32 %v1212, %v1232
  %v1234 = vmul.f32 %v629, %v1224
  %v1235 = vadd.f32 %v1233, %v1234
  %v1236 = vmul.f32 %v1230, 0.0
  %v1237 = vadd.f32 %v1235, %v1236
  %v1238 = vxor.u32 %v1237, 2147483648
  %v1239 = vmul.f32 %v1238, 1.442695
  %v1240 = vpow.pop %v1239
  %v1241 = vadd.f32 %v1240, 1.0
  %v1242 = vrcp.pop %v1241
  %v1243 = vmul.f32 1.0, %v1242
  %v1244 = vtanh.pop %v1237
  %v1245 = vmul.f32 %v1243, 0.0
  %1247 = vrot.lane.b32.xlu0 %v1244, 126
  %v1248 = vpop.permute.xlu0 %1247
  %v1250 = vmul.f32 %v1243, %v1248
  %1252 = vrot.lane.b32.xlu0 %v1250, 1
  %v1253 = vpop.permute.xlu0 %1252
  %v1255 = vadd.f32 %v1245, %v1253
  %v1256 = vtanh.pop %v1255
  %1258 = vrot.lane.b32.xlu0 %v1256, 2
  %v1259 = vpop.permute.xlu0 %1258
  %v1261 = vmul.f32 %v1243, %v1259
  %v1262 = vmul.f32 %v528, %v1218
  %v1263 = vadd.f32 %v1212, %v1262
  %v1264 = vmul.f32 %v668, %v1224
  %v1265 = vadd.f32 %v1263, %v1264
  %1267 = vset.pattern.permute.xlu0 3
  %1268 = vperm.xlu0 %1267, %v1261
  %v1269 = vpop.permute.xlu0 %1268
  %v1271 = vmul.f32 %v1269, %v1230
  %v1272 = vadd.f32 %v1265, %v1271
  %v1273 = vxor.u32 %v1272, 2147483648
  %v1274 = vmul.f32 %v1273, 1.442695
  %v1275 = vpow.pop %v1274
  %v1276 = vadd.f32 %v1275, 1.0
  %v1277 = vrcp.pop %v1276
  %v1278 = vmul.f32 1.0, %v1277
  %v1279 = vtanh.pop %v1272
  %v1280 = vmul.f32 %v1278, %v1255
  %1282 = vrot.lane.b32.xlu0 %v1279, 126
  %v1283 = vpop.permute.xlu0 %1282
  %v1285 = vmul.f32 %v1278, %v1283
  %1287 = vrot.lane.b32.xlu0 %v1285, 1
  %v1288 = vpop.permute.xlu0 %1287
  %v1290 = vadd.f32 %v1280, %v1288
  %v1291 = vtanh.pop %v1290
  %1293 = vrot.lane.b32.xlu0 %v1291, 2
  %v1294 = vpop.permute.xlu0 %1293
  %v1296 = vmul.f32 %v1278, %v1294
  %v1297 = vmul.f32 %v472, %v1218
  %v1298 = vadd.f32 %v1212, %v1297
  %v1299 = vmul.f32 %v707, %v1224
  %v1300 = vadd.f32 %v1298, %v1299
  %1302 = vset.pattern.permute.xlu0 3
  %1303 = vperm.xlu0 %1302, %v1296
  %v1304 = vpop.permute.xlu0 %1303
  %v1306 = vmul.f32 %v1304, %v1230
  %v1307 = vadd.f32 %v1300, %v1306
  %v1308 = vxor.u32 %v1307, 2147483648
  %v1309 = vmul.f32 %v1308, 1.442695
  %v1310 = vpow.pop %v1309
  %v1311 = vadd.f32 %v1310, 1.0
  %v1312 = vrcp.pop %v1311
  %v1313 = vmul.f32 1.0, %v1312
  %v1314 = vtanh.pop %v1307
  %v1315 = vmul.f32 %v1313, %v1290
  %1317 = vrot.lane.b32.xlu0 %v1314, 126
  %v1318 = vpop.permute.xlu0 %1317
  %v1320 = vmul.f32 %v1313, %v1318
  %1322 = vrot.lane.b32.xlu0 %v1320, 1
  %v1323 = vpop.permute.xlu0 %1322
  %v1325 = vadd.f32 %v1315, %v1323
  %v1326 = vtanh.pop %v1325
  %1328 = vrot.lane.b32.xlu0 %v1326, 2
  %v1329 = vpop.permute.xlu0 %1328
  %v1331 = vmul.f32 %v1313, %v1329
  %v1332 = vmul.f32 %v416, %v1218
  %v1333 = vadd.f32 %v1212, %v1332
  %v1334 = vmul.f32 %v746, %v1224
  %v1335 = vadd.f32 %v1333, %v1334
  %1337 = vset.pattern.permute.xlu0 3
  %1338 = vperm.xlu0 %1337, %v1331
  %v1339 = vpop.permute.xlu0 %1338
  %v1341 = vmul.f32 %v1339, %v1230
  %v1342 = vadd.f32 %v1335, %v1341
  %v1343 = vxor.u32 %v1342, 2147483648
  %v1344 = vmul.f32 %v1343, 1.442695
  %v1345 = vpow.pop %v1344
  %v1346 = vadd.f32 %v1345, 1.0
  %v1347 = vrcp.pop %v1346
  %v1348 = vmul.f32 1.0, %v1347
  %v1349 = vtanh.pop %v1342
  %v1350 = vmul.f32 %v1348, %v1325
  %1352 = vrot.lane.b32.xlu0 %v1349, 126
  %v1353 = vpop.permute.xlu0 %1352
  %v1355 = vmul.f32 %v1348, %v1353
  %1357 = vrot.lane.b32.xlu0 %v1355, 1
  %v1358 = vpop.permute.xlu0 %1357
  %v1360 = vadd.f32 %v1350, %v1358
  %v1361 = vtanh.pop %v1360
  %1363 = vrot.lane.b32.xlu0 %v1361, 2
  %v1364 = vpop.permute.xlu0 %1363
  %v1366 = vmul.f32 %v1348, %v1364
  %v1367 = vmul.f32 %v360, %v1218
  %v1368 = vadd.f32 %v1212, %v1367
  %v1369 = vmul.f32 %v785, %v1224
  %v1370 = vadd.f32 %v1368, %v1369
  %1372 = vset.pattern.permute.xlu0 3
  %1373 = vperm.xlu0 %1372, %v1366
  %v1374 = vpop.permute.xlu0 %1373
  %v1376 = vmul.f32 %v1374, %v1230
  %v1377 = vadd.f32 %v1370, %v1376
  %v1378 = vxor.u32 %v1377, 2147483648
  %v1379 = vmul.f32 %v1378, 1.442695
  %v1380 = vpow.pop %v1379
  %v1381 = vadd.f32 %v1380, 1.0
  %v1382 = vrcp.pop %v1381
  %v1383 = vmul.f32 1.0, %v1382
  %v1384 = vtanh.pop %v1377
  %v1385 = vmul.f32 %v1383, %v1360
  %1387 = vrot.lane.b32.xlu0 %v1384, 126
  %v1388 = vpop.permute.xlu0 %1387
  %v1390 = vmul.f32 %v1383, %v1388
  %1392 = vrot.lane.b32.xlu0 %v1390, 1
  %v1393 = vpop.permute.xlu0 %1392
  %v1395 = vadd.f32 %v1385, %v1393
  %v1396 = vtanh.pop %v1395
  %1398 = vrot.lane.b32.xlu0 %v1396, 2
  %v1399 = vpop.permute.xlu0 %1398
  %v1401 = vmul.f32 %v1383, %v1399
  %v1402 = vmul.f32 %v304, %v1218
  %v1403 = vadd.f32 %v1212, %v1402
  %v1404 = vmul.f32 %v824, %v1224
  %v1405 = vadd.f32 %v1403, %v1404
  %1407 = vset.pattern.permute.xlu0 3
  %1408 = vperm.xlu0 %1407, %v1401
  %v1409 = vpop.permute.xlu0 %1408
  %v1411 = vmul.f32 %v1409, %v1230
  %v1412 = vadd.f32 %v1405, %v1411
  %v1413 = vxor.u32 %v1412, 2147483648
  %v1414 = vmul.f32 %v1413, 1.442695
  %v1415 = vpow.pop %v1414
  %v1416 = vadd.f32 %v1415, 1.0
  %v1417 = vrcp.pop %v1416
  %v1418 = vmul.f32 1.0, %v1417
  %v1419 = vtanh.pop %v1412
  %v1420 = vmul.f32 %v1418, %v1395
  %1422 = vrot.lane.b32.xlu0 %v1419, 126
  %v1423 = vpop.permute.xlu0 %1422
  %v1425 = vmul.f32 %v1418, %v1423
  %1427 = vrot.lane.b32.xlu0 %v1425, 1
  %v1428 = vpop.permute.xlu0 %1427
  %v1430 = vadd.f32 %v1420, %v1428
  %v1431 = vtanh.pop %v1430
  %1433 = vrot.lane.b32.xlu0 %v1431, 2
  %v1434 = vpop.permute.xlu0 %1433
  %v1436 = vmul.f32 %v1418, %v1434
  %v1437 = vmul.f32 %v248, %v1218
  %v1438 = vadd.f32 %v1212, %v1437
  %v1439 = vmul.f32 %v863, %v1224
  %v1440 = vadd.f32 %v1438, %v1439
  %1442 = vset.pattern.permute.xlu0 3
  %1443 = vperm.xlu0 %1442, %v1436
  %v1444 = vpop.permute.xlu0 %1443
  %v1446 = vmul.f32 %v1444, %v1230
  %v1447 = vadd.f32 %v1440, %v1446
  %v1448 = vxor.u32 %v1447, 2147483648
  %v1449 = vmul.f32 %v1448, 1.442695
  %v1450 = vpow.pop %v1449
  %v1451 = vadd.f32 %v1450, 1.0
  %v1452 = vrcp.pop %v1451
  %v1453 = vmul.f32 1.0, %v1452
  %v1454 = vtanh.pop %v1447
  %v1455 = vmul.f32 %v1453, %v1430
  %1457 = vrot.lane.b32.xlu0 %v1454, 126
  %v1458 = vpop.permute.xlu0 %1457
  %v1460 = vmul.f32 %v1453, %v1458
  %1462 = vrot.lane.b32.xlu0 %v1460, 1
  %v1463 = vpop.permute.xlu0 %1462
  %v1465 = vadd.f32 %v1455, %v1463
  %v1466 = vtanh.pop %v1465
  %1468 = vrot.lane.b32.xlu0 %v1466, 2
  %v1469 = vpop.permute.xlu0 %1468
  %v1471 = vmul.f32 %v1453, %v1469
  %v1472 = vmul.f32 %v192, %v1218
  %v1473 = vadd.f32 %v1212, %v1472
  %v1474 = vmul.f32 %v928, %v1224
  %v1475 = vadd.f32 %v1473, %v1474
  %1477 = vset.pattern.permute.xlu0 3
  %1478 = vperm.xlu0 %1477, %v1471
  %v1479 = vpop.permute.xlu0 %1478
  %v1481 = vmul.f32 %v1479, %v1230
  %v1482 = vadd.f32 %v1475, %v1481
  %v1483 = vxor.u32 %v1482, 2147483648
  %v1484 = vmul.f32 %v1483, 1.442695
  %v1485 = vpow.pop %v1484
  %v1486 = vadd.f32 %v1485, 1.0
  %v1487 = vrcp.pop %v1486
  %v1488 = vmul.f32 1.0, %v1487
  %v1489 = vtanh.pop %v1482
  %v1490 = vmul.f32 %v1488, %v1465
  %1492 = vrot.lane.b32.xlu0 %v1489, 126
  %v1493 = vpop.permute.xlu0 %1492
  %v1495 = vmul.f32 %v1488, %v1493
  %1497 = vrot.lane.b32.xlu0 %v1495, 1
  %v1498 = vpop.permute.xlu0 %1497
  %v1500 = vadd.f32 %v1490, %v1498
  %v1501 = vtanh.pop %v1500
  %1503 = vrot.lane.b32.xlu0 %v1501, 2
  %v1504 = vpop.permute.xlu0 %1503
  %v1506 = vmul.f32 %v1488, %v1504
  %v1507 = vld [vmem:[%s15] sm:$0x1]
  %v1508 = vld [vmem:[%s16] sm:$0x1]
  %v1509 = vld [vmem:[%s17] sm:$0x1]
  %v1510 = vld [vmem:[%s18] sm:$0x1]
  %v1512 = vlaneseq
  %v1513 = vshrl.u32 %v1512, 7
  %v1514 = vsub.s32 0, %v1513
  %v1515 = vrot.slane %v1510, %v1514
  %v1518 = vlaneseq
  %v1519 = vshrl.u32 %v1518, 7
  %v1520 = vsub.s32 0, %v1519
  %v1521 = vrot.slane %v1507, %v1520
  %v1524 = vlaneseq
  %v1525 = vshrl.u32 %v1524, 7
  %v1526 = vsub.s32 0, %v1525
  %v1527 = vrot.slane %v1508, %v1526
  %v1530 = vlaneseq
  %v1531 = vshrl.u32 %v1530, 7
  %v1532 = vsub.s32 0, %v1531
  %v1533 = vrot.slane %v1509, %v1532
  %v1535 = vmul.f32 %v965, %v1521
  %v1536 = vadd.f32 %v1515, %v1535
  %1538 = vset.pattern.permute.xlu0 3
  %1539 = vperm.xlu0 %1538, %v1506
  %v1540 = vpop.permute.xlu0 %1539
  %v1542 = vmul.f32 %v1540, %v1527
  %v1543 = vadd.f32 %v1536, %v1542
  %v1544 = vmul.f32 %v1533, 0.0
  %v1545 = vadd.f32 %v1543, %v1544
  %v1546 = vxor.u32 %v1545, 2147483648
  %v1547 = vmul.f32 %v1546, 1.442695
  %v1548 = vpow.pop %v1547
  %v1549 = vadd.f32 %v1548, 1.0
  %v1550 = vrcp.pop %v1549
  %v1551 = vmul.f32 1.0, %v1550
  %v1552 = vtanh.pop %v1545
  %v1553 = vmul.f32 %v1551, 0.0
  %1555 = vrot.lane.b32.xlu0 %v1552, 126
  %v1556 = vpop.permute.xlu0 %1555
  %v1558 = vmul.f32 %v1551, %v1556
  %1560 = vrot.lane.b32.xlu0 %v1558, 1
  %v1561 = vpop.permute.xlu0 %1560
  %v1563 = vadd.f32 %v1553, %v1561
  %v1564 = vtanh.pop %v1563
  %1566 = vrot.lane.b32.xlu0 %v1564, 2
  %v1567 = vpop.permute.xlu0 %1566
  %v1569 = vmul.f32 %v1551, %v1567
  %v1570 = vmul.f32 %v1000, %v1521
  %v1571 = vadd.f32 %v1515, %v1570
  %v1572 = vmul.f32 %v1479, %v1527
  %v1573 = vadd.f32 %v1571, %v1572
  %1575 = vset.pattern.permute.xlu0 3
  %1576 = vperm.xlu0 %1575, %v1569
  %v1577 = vpop.permute.xlu0 %1576
  %v1579 = vmul.f32 %v1577, %v1533
  %v1580 = vadd.f32 %v1573, %v1579
  %v1581 = vxor.u32 %v1580, 2147483648
  %v1582 = vmul.f32 %v1581, 1.442695
  %v1583 = vpow.pop %v1582
  %v1584 = vadd.f32 %v1583, 1.0
  %v1585 = vrcp.pop %v1584
  %v1586 = vmul.f32 1.0, %v1585
  %v1587 = vtanh.pop %v1580
  %v1588 = vmul.f32 %v1586, %v1563
  %1590 = vrot.lane.b32.xlu0 %v1587, 126
  %v1591 = vpop.permute.xlu0 %1590
  %v1593 = vmul.f32 %v1586, %v1591
  %1595 = vrot.lane.b32.xlu0 %v1593, 1
  %v1596 = vpop.permute.xlu0 %1595
  %v1598 = vadd.f32 %v1588, %v1596
  %v1599 = vtanh.pop %v1598
  %1601 = vrot.lane.b32.xlu0 %v1599, 2
  %v1602 = vpop.permute.xlu0 %1601
  %v1604 = vmul.f32 %v1586, %v1602
  %v1605 = vmul.f32 %v1035, %v1521
  %v1606 = vadd.f32 %v1515, %v1605
  %v1607 = vmul.f32 %v1444, %v1527
  %v1608 = vadd.f32 %v1606, %v1607
  %1610 = vset.pattern.permute.xlu0 3
  %1611 = vperm.xlu0 %1610, %v1604
  %v1612 = vpop.permute.xlu0 %1611
  %v1614 = vmul.f32 %v1612, %v1533
  %v1615 = vadd.f32 %v1608, %v1614
  %v1616 = vxor.u32 %v1615, 2147483648
  %v1617 = vmul.f32 %v1616, 1.442695
  %v1618 = vpow.pop %v1617
  %v1619 = vadd.f32 %v1618, 1.0
  %v1620 = vrcp.pop %v1619
  %v1621 = vmul.f32 1.0, %v1620
  %v1622 = vtanh.pop %v1615
  %v1623 = vmul.f32 %v1621, %v1598
  %1625 = vrot.lane.b32.xlu0 %v1622, 126
  %v1626 = vpop.permute.xlu0 %1625
  %v1628 = vmul.f32 %v1621, %v1626
  %1630 = vrot.lane.b32.xlu0 %v1628, 1
  %v1631 = vpop.permute.xlu0 %1630
  %v1633 = vadd.f32 %v1623, %v1631
  %v1634 = vtanh.pop %v1633
  %1636 = vrot.lane.b32.xlu0 %v1634, 2
  %v1637 = vpop.permute.xlu0 %1636
  %v1639 = vmul.f32 %v1621, %v1637
  %v1640 = vmul.f32 %v1070, %v1521
  %v1641 = vadd.f32 %v1515, %v1640
  %v1642 = vmul.f32 %v1409, %v1527
  %v1643 = vadd.f32 %v1641, %v1642
  %1645 = vset.pattern.permute.xlu0 3
  %1646 = vperm.xlu0 %1645, %v1639
  %v1647 = vpop.permute.xlu0 %1646
  %v1649 = vmul.f32 %v1647, %v1533
  %v1650 = vadd.f32 %v1643, %v1649
  %v1651 = vxor.u32 %v1650, 2147483648
  %v1652 = vmul.f32 %v1651, 1.442695
  %v1653 = vpow.pop %v1652
  %v1654 = vadd.f32 %v1653, 1.0
  %v1655 = vrcp.pop %v1654
  %v1656 = vmul.f32 1.0, %v1655
  %v1657 = vtanh.pop %v1650
  %v1658 = vmul.f32 %v1656, %v1633
  %1660 = vrot.lane.b32.xlu0 %v1657, 126
  %v1661 = vpop.permute.xlu0 %1660
  %v1663 = vmul.f32 %v1656, %v1661
  %1665 = vrot.lane.b32.xlu0 %v1663, 1
  %v1666 = vpop.permute.xlu0 %1665
  %v1668 = vadd.f32 %v1658, %v1666
  %v1669 = vtanh.pop %v1668
  %1671 = vrot.lane.b32.xlu0 %v1669, 2
  %v1672 = vpop.permute.xlu0 %1671
  %v1674 = vmul.f32 %v1656, %v1672
  %v1675 = vmul.f32 %v1105, %v1521
  %v1676 = vadd.f32 %v1515, %v1675
  %v1677 = vmul.f32 %v1374, %v1527
  %v1678 = vadd.f32 %v1676, %v1677
  %1680 = vset.pattern.permute.xlu0 3
  %1681 = vperm.xlu0 %1680, %v1674
  %v1682 = vpop.permute.xlu0 %1681
  %v1684 = vmul.f32 %v1682, %v1533
  %v1685 = vadd.f32 %v1678, %v1684
  %v1686 = vxor.u32 %v1685, 2147483648
  %v1687 = vmul.f32 %v1686, 1.442695
  %v1688 = vpow.pop %v1687
  %v1689 = vadd.f32 %v1688, 1.0
  %v1690 = vrcp.pop %v1689
  %v1691 = vmul.f32 1.0, %v1690
  %v1692 = vtanh.pop %v1685
  %v1693 = vmul.f32 %v1691, %v1668
  %1695 = vrot.lane.b32.xlu0 %v1692, 126
  %v1696 = vpop.permute.xlu0 %1695
  %v1698 = vmul.f32 %v1691, %v1696
  %1700 = vrot.lane.b32.xlu0 %v1698, 1
  %v1701 = vpop.permute.xlu0 %1700
  %v1703 = vadd.f32 %v1693, %v1701
  %v1704 = vtanh.pop %v1703
  %1706 = vrot.lane.b32.xlu0 %v1704, 2
  %v1707 = vpop.permute.xlu0 %1706
  %v1709 = vmul.f32 %v1691, %v1707
  %v1710 = vmul.f32 %v1140, %v1521
  %v1711 = vadd.f32 %v1515, %v1710
  %v1712 = vmul.f32 %v1339, %v1527
  %v1713 = vadd.f32 %v1711, %v1712
  %1715 = vset.pattern.permute.xlu0 3
  %1716 = vperm.xlu0 %1715, %v1709
  %v1717 = vpop.permute.xlu0 %1716
  %v1719 = vmul.f32 %v1717, %v1533
  %v1720 = vadd.f32 %v1713, %v1719
  %v1721 = vxor.u32 %v1720, 2147483648
  %v1722 = vmul.f32 %v1721, 1.442695
  %v1723 = vpow.pop %v1722
  %v1724 = vadd.f32 %v1723, 1.0
  %v1725 = vrcp.pop %v1724
  %v1726 = vmul.f32 1.0, %v1725
  %v1727 = vtanh.pop %v1720
  %v1728 = vmul.f32 %v1726, %v1703
  %1730 = vrot.lane.b32.xlu0 %v1727, 126
  %v1731 = vpop.permute.xlu0 %1730
  %v1733 = vmul.f32 %v1726, %v1731
  %1735 = vrot.lane.b32.xlu0 %v1733, 1
  %v1736 = vpop.permute.xlu0 %1735
  %v1738 = vadd.f32 %v1728, %v1736
  %v1739 = vtanh.pop %v1738
  %1741 = vrot.lane.b32.xlu0 %v1739, 2
  %v1742 = vpop.permute.xlu0 %1741
  %v1744 = vmul.f32 %v1726, %v1742
  %v1745 = vmul.f32 %v1180, %v1521
  %v1746 = vadd.f32 %v1515, %v1745
  %v1747 = vmul.f32 %v1304, %v1527
  %v1748 = vadd.f32 %v1746, %v1747
  %1750 = vset.pattern.permute.xlu0 3
  %1751 = vperm.xlu0 %1750, %v1744
  %v1752 = vpop.permute.xlu0 %1751
  %v1754 = vmul.f32 %v1752, %v1533
  %v1755 = vadd.f32 %v1748, %v1754
  %v1756 = vxor.u32 %v1755, 2147483648
  %v1757 = vmul.f32 %v1756, 1.442695
  %v1758 = vpow.pop %v1757
  %v1759 = vadd.f32 %v1758, 1.0
  %v1760 = vrcp.pop %v1759
  %v1761 = vmul.f32 1.0, %v1760
  %v1762 = vtanh.pop %v1755
  %v1763 = vmul.f32 %v1761, %v1738
  %1765 = vrot.lane.b32.xlu0 %v1762, 126
  %v1766 = vpop.permute.xlu0 %1765
  %v1768 = vmul.f32 %v1761, %v1766
  %1770 = vrot.lane.b32.xlu0 %v1768, 1
  %v1771 = vpop.permute.xlu0 %1770
  %v1773 = vadd.f32 %v1763, %v1771
  %v1774 = vtanh.pop %v1773
  %1776 = vrot.lane.b32.xlu0 %v1774, 2
  %v1777 = vpop.permute.xlu0 %1776
  %v1779 = vmul.f32 %v1761, %v1777
  %1781 = vset.pattern.permute.xlu0 3
  %1782 = vperm.xlu0 %1781, %v1207
  %v1783 = vpop.permute.xlu0 %1782
  %v1785 = vmul.f32 %v1783, %v1521
  %v1786 = vadd.f32 %v1515, %v1785
  %v1787 = vmul.f32 %v1269, %v1527
  %v1788 = vadd.f32 %v1786, %v1787
  %1790 = vset.pattern.permute.xlu0 3
  %1791 = vperm.xlu0 %1790, %v1779
  %v1792 = vpop.permute.xlu0 %1791
  %v1794 = vmul.f32 %v1792, %v1533
  %v1795 = vadd.f32 %v1788, %v1794
  %v1796 = vxor.u32 %v1795, 2147483648
  %v1797 = vmul.f32 %v1796, 1.442695
  %v1798 = vpow.pop %v1797
  %v1799 = vadd.f32 %v1798, 1.0
  %v1800 = vrcp.pop %v1799
  %v1801 = vmul.f32 1.0, %v1800
  %v1802 = vtanh.pop %v1795
  %v1803 = vmul.f32 %v1801, %v1773
  %1805 = vrot.lane.b32.xlu0 %v1802, 126
  %v1806 = vpop.permute.xlu0 %1805
  %v1808 = vmul.f32 %v1801, %v1806
  %1810 = vrot.lane.b32.xlu0 %v1808, 1
  %v1811 = vpop.permute.xlu0 %1810
  %v1813 = vadd.f32 %v1803, %v1811
  %v1814 = vtanh.pop %v1813
  %1816 = vrot.lane.b32.xlu0 %v1814, 2
  %v1817 = vpop.permute.xlu0 %1816
  %v1819 = vmul.f32 %v1801, %v1817
  %v1820 = vld [vmem:[%s19] sm:$0x1]
  %v1821 = vld [vmem:[%s20] sm:$0x1]
  %v1822 = vld [vmem:[%s21] sm:$0x1]
  %v1824 = vlaneseq
  %v1825 = vshrl.u32 %v1824, 7
  %v1826 = vsub.s32 0, %v1825
  %v1827 = vrot.slane %v1822, %v1826
  %v1830 = vlaneseq
  %v1831 = vshrl.u32 %v1830, 7
  %v1832 = vsub.s32 0, %v1831
  %v1833 = vrot.slane %v1820, %v1832
  %v1836 = vlaneseq
  %v1837 = vshrl.u32 %v1836, 7
  %v1838 = vsub.s32 0, %v1837
  %v1839 = vrot.slane %v1821, %v1838
  %v1841 = vmul.f32 %v1577, %v1833
  %v1842 = vadd.f32 %v1827, %v1841
  %v1843 = vmul.f32 %v1839, 0.0
  %v1844 = vadd.f32 %v1842, %v1843
  %v1845 = vxor.u32 %v1844, 2147483648
  %v1846 = vmul.f32 %v1845, 1.442695
  %v1847 = vpow.pop %v1846
  %v1848 = vadd.f32 %v1847, 1.0
  %v1849 = vrcp.pop %v1848
  %v1850 = vmul.f32 1.0, %v1849
  %v1851 = vtanh.pop %v1844
  %v1852 = vmul.f32 %v1850, 0.0
  %1854 = vrot.lane.b32.xlu0 %v1851, 126
  %v1855 = vpop.permute.xlu0 %1854
  %v1857 = vmul.f32 %v1850, %v1855
  %1859 = vrot.lane.b32.xlu0 %v1857, 1
  %v1860 = vpop.permute.xlu0 %1859
  %v1862 = vadd.f32 %v1852, %v1860
  %v1863 = vtanh.pop %v1862
  %1865 = vrot.lane.b32.xlu0 %v1863, 2
  %v1866 = vpop.permute.xlu0 %1865
  %v1868 = vmul.f32 %v1850, %v1866
  %v1869 = vmul.f32 %v1612, %v1833
  %v1870 = vadd.f32 %v1827, %v1869
  %1872 = vset.pattern.permute.xlu0 3
  %1873 = vperm.xlu0 %1872, %v1868
  %v1874 = vpop.permute.xlu0 %1873
  %v1876 = vmul.f32 %v1874, %v1839
  %v1877 = vadd.f32 %v1870, %v1876
  %v1878 = vxor.u32 %v1877, 2147483648
  %v1879 = vmul.f32 %v1878, 1.442695
  %v1880 = vpow.pop %v1879
  %v1881 = vadd.f32 %v1880, 1.0
  %v1882 = vrcp.pop %v1881
  %v1883 = vmul.f32 1.0, %v1882
  %v1884 = vtanh.pop %v1877
  %v1885 = vmul.f32 %v1883, %v1862
  %1887 = vrot.lane.b32.xlu0 %v1884, 126
  %v1888 = vpop.permute.xlu0 %1887
  %v1890 = vmul.f32 %v1883, %v1888
  %1892 = vrot.lane.b32.xlu0 %v1890, 1
  %v1893 = vpop.permute.xlu0 %1892
  %v1895 = vadd.f32 %v1885, %v1893
  %v1896 = vtanh.pop %v1895
  %1898 = vrot.lane.b32.xlu0 %v1896, 2
  %v1899 = vpop.permute.xlu0 %1898
  %v1901 = vmul.f32 %v1883, %v1899
  %v1902 = vmul.f32 %v1647, %v1833
  %v1903 = vadd.f32 %v1827, %v1902
  %1905 = vset.pattern.permute.xlu0 3
  %1906 = vperm.xlu0 %1905, %v1901
  %v1907 = vpop.permute.xlu0 %1906
  %v1909 = vmul.f32 %v1907, %v1839
  %v1910 = vadd.f32 %v1903, %v1909
  %v1911 = vxor.u32 %v1910, 2147483648
  %v1912 = vmul.f32 %v1911, 1.442695
  %v1913 = vpow.pop %v1912
  %v1914 = vadd.f32 %v1913, 1.0
  %v1915 = vrcp.pop %v1914
  %v1916 = vmul.f32 1.0, %v1915
  %v1917 = vtanh.pop %v1910
  %v1918 = vmul.f32 %v1916, %v1895
  %1920 = vrot.lane.b32.xlu0 %v1917, 126
  %v1921 = vpop.permute.xlu0 %1920
  %v1923 = vmul.f32 %v1916, %v1921
  %1925 = vrot.lane.b32.xlu0 %v1923, 1
  %v1926 = vpop.permute.xlu0 %1925
  %v1928 = vadd.f32 %v1918, %v1926
  %v1929 = vtanh.pop %v1928
  %1931 = vrot.lane.b32.xlu0 %v1929, 2
  %v1932 = vpop.permute.xlu0 %1931
  %v1934 = vmul.f32 %v1916, %v1932
  %v1935 = vmul.f32 %v1682, %v1833
  %v1936 = vadd.f32 %v1827, %v1935
  %1938 = vset.pattern.permute.xlu0 3
  %1939 = vperm.xlu0 %1938, %v1934
  %v1940 = vpop.permute.xlu0 %1939
  %v1942 = vmul.f32 %v1940, %v1839
  %v1943 = vadd.f32 %v1936, %v1942
  %v1944 = vxor.u32 %v1943, 2147483648
  %v1945 = vmul.f32 %v1944, 1.442695
  %v1946 = vpow.pop %v1945
  %v1947 = vadd.f32 %v1946, 1.0
  %v1948 = vrcp.pop %v1947
  %v1949 = vmul.f32 1.0, %v1948
  %v1950 = vtanh.pop %v1943
  %v1951 = vmul.f32 %v1949, %v1928
  %1953 = vrot.lane.b32.xlu0 %v1950, 126
  %v1954 = vpop.permute.xlu0 %1953
  %v1956 = vmul.f32 %v1949, %v1954
  %1958 = vrot.lane.b32.xlu0 %v1956, 1
  %v1959 = vpop.permute.xlu0 %1958
  %v1961 = vadd.f32 %v1951, %v1959
  %v1962 = vtanh.pop %v1961
  %1964 = vrot.lane.b32.xlu0 %v1962, 2
  %v1965 = vpop.permute.xlu0 %1964
  %v1967 = vmul.f32 %v1949, %v1965
  %v1968 = vmul.f32 %v1717, %v1833
  %v1969 = vadd.f32 %v1827, %v1968
  %1971 = vset.pattern.permute.xlu0 3
  %1972 = vperm.xlu0 %1971, %v1967
  %v1973 = vpop.permute.xlu0 %1972
  %v1975 = vmul.f32 %v1973, %v1839
  %v1976 = vadd.f32 %v1969, %v1975
  %v1977 = vxor.u32 %v1976, 2147483648
  %v1978 = vmul.f32 %v1977, 1.442695
  %v1979 = vpow.pop %v1978
  %v1980 = vadd.f32 %v1979, 1.0
  %v1981 = vrcp.pop %v1980
  %v1982 = vmul.f32 1.0, %v1981
  %v1983 = vtanh.pop %v1976
  %v1984 = vmul.f32 %v1982, %v1961
  %1986 = vrot.lane.b32.xlu0 %v1983, 126
  %v1987 = vpop.permute.xlu0 %1986
  %v1989 = vmul.f32 %v1982, %v1987
  %1991 = vrot.lane.b32.xlu0 %v1989, 1
  %v1992 = vpop.permute.xlu0 %1991
  %v1994 = vadd.f32 %v1984, %v1992
  %v1995 = vtanh.pop %v1994
  %1997 = vrot.lane.b32.xlu0 %v1995, 2
  %v1998 = vpop.permute.xlu0 %1997
  %v2000 = vmul.f32 %v1982, %v1998
  %v2001 = vmul.f32 %v1752, %v1833
  %v2002 = vadd.f32 %v1827, %v2001
  %2004 = vset.pattern.permute.xlu0 3
  %2005 = vperm.xlu0 %2004, %v2000
  %v2006 = vpop.permute.xlu0 %2005
  %v2008 = vmul.f32 %v2006, %v1839
  %v2009 = vadd.f32 %v2002, %v2008
  %v2010 = vxor.u32 %v2009, 2147483648
  %v2011 = vmul.f32 %v2010, 1.442695
  %v2012 = vpow.pop %v2011
  %v2013 = vadd.f32 %v2012, 1.0
  %v2014 = vrcp.pop %v2013
  %v2015 = vmul.f32 1.0, %v2014
  %v2016 = vtanh.pop %v2009
  %v2017 = vmul.f32 %v2015, %v1994
  %2019 = vrot.lane.b32.xlu0 %v2016, 126
  %v2020 = vpop.permute.xlu0 %2019
  %v2022 = vmul.f32 %v2015, %v2020
  %2024 = vrot.lane.b32.xlu0 %v2022, 1
  %v2025 = vpop.permute.xlu0 %2024
  %v2027 = vadd.f32 %v2017, %v2025
  %v2028 = vtanh.pop %v2027
  %2030 = vrot.lane.b32.xlu0 %v2028, 2
  %v2031 = vpop.permute.xlu0 %2030
  %v2033 = vmul.f32 %v2015, %v2031
  %v2034 = vmul.f32 %v1792, %v1833
  %v2035 = vadd.f32 %v1827, %v2034
  %2037 = vset.pattern.permute.xlu0 3
  %2038 = vperm.xlu0 %2037, %v2033
  %v2039 = vpop.permute.xlu0 %2038
  %v2041 = vmul.f32 %v2039, %v1839
  %v2042 = vadd.f32 %v2035, %v2041
  %v2043 = vxor.u32 %v2042, 2147483648
  %v2044 = vmul.f32 %v2043, 1.442695
  %v2045 = vpow.pop %v2044
  %v2046 = vadd.f32 %v2045, 1.0
  %v2047 = vrcp.pop %v2046
  %v2048 = vmul.f32 1.0, %v2047
  %v2049 = vtanh.pop %v2042
  %v2050 = vmul.f32 %v2048, %v2027
  %2052 = vrot.lane.b32.xlu0 %v2049, 126
  %v2053 = vpop.permute.xlu0 %2052
  %v2055 = vmul.f32 %v2048, %v2053
  %2057 = vrot.lane.b32.xlu0 %v2055, 1
  %v2058 = vpop.permute.xlu0 %2057
  %v2060 = vadd.f32 %v2050, %v2058
  %v2061 = vtanh.pop %v2060
  %2063 = vrot.lane.b32.xlu0 %v2061, 2
  %v2064 = vpop.permute.xlu0 %2063
  %v2066 = vmul.f32 %v2048, %v2064
  %2068 = vset.pattern.permute.xlu0 3
  %2069 = vperm.xlu0 %2068, %v1819
  %v2070 = vpop.permute.xlu0 %2069
  %v2072 = vmul.f32 %v2070, %v1833
  %v2073 = vadd.f32 %v1827, %v2072
  %2075 = vset.pattern.permute.xlu0 3
  %2076 = vperm.xlu0 %2075, %v2066
  %v2077 = vpop.permute.xlu0 %2076
  %v2079 = vmul.f32 %v2077, %v1839
  %v2080 = vadd.f32 %v2073, %v2079
  %v2081 = vxor.u32 %v2080, 2147483648
  %v2082 = vmul.f32 %v2081, 1.442695
  %v2083 = vpow.pop %v2082
  %v2084 = vadd.f32 %v2083, 1.0
  %v2085 = vrcp.pop %v2084
  %v2086 = vmul.f32 1.0, %v2085
  %v2087 = vtanh.pop %v2080
  %v2088 = vmul.f32 %v2086, %v2060
  %2090 = vrot.lane.b32.xlu0 %v2087, 126
  %v2091 = vpop.permute.xlu0 %2090
  %v2093 = vmul.f32 %v2086, %v2091
  %2095 = vrot.lane.b32.xlu0 %v2093, 1
  %v2096 = vpop.permute.xlu0 %2095
  %v2098 = vadd.f32 %v2088, %v2096
  %v2099 = vtanh.pop %v2098
  %2101 = vrot.lane.b32.xlu0 %v2099, 2
  %v2102 = vpop.permute.xlu0 %2101
  %v2104 = vmul.f32 %v2086, %v2102
  %vm2105 = vcmask 25624
  %v2106 = vsel %vm2105, %v1868, -inf
  %v2107 = vsel %vm2105, %v1901, -inf
  %v2108 = vsel %vm2105, %v1934, -inf
  %v2109 = vsel %vm2105, %v1967, -inf
  %v2110 = vsel %vm2105, %v2000, -inf
  %v2111 = vmax.f32 %v2106, %v2110
  %v2112 = vsel %vm2105, %v2033, -inf
  %v2113 = vmax.f32 %v2107, %v2112
  %v2114 = vsel %vm2105, %v2066, -inf
  %v2115 = vmax.f32 %v2108, %v2114
  %v2116 = vsel %vm2105, %v2104, -inf
  %v2117 = vmax.f32 %v2109, %v2116
  %v2118 = vmax.f32 %v2111, %v2113
  %v2119 = vmax.f32 %v2115, %v2117
  %v2120 = vmax.f32 %v2118, %v2119
  %v2121 = vsub.f32 %v1868, %v2120
  %v2122 = vsub.f32 %v1901, %v2120
  %v2123 = vsub.f32 %v1934, %v2120
  %v2124 = vsub.f32 %v1967, %v2120
  %v2125 = vsub.f32 %v2000, %v2120
  %v2126 = vsub.f32 %v2033, %v2120
  %v2127 = vsub.f32 %v2066, %v2120
  %v2128 = vsub.f32 %v2104, %v2120
  %v2129 = vmul.f32 %v2121, 1.442695
  %v2130 = vpow.pop %v2129
  %v2131 = vmul.f32 %v2122, 1.442695
  %v2132 = vpow.pop %v2131
  %v2133 = vmul.f32 %v2123, 1.442695
  %v2134 = vpow.pop %v2133
  %v2135 = vmul.f32 %v2124, 1.442695
  %v2136 = vpow.pop %v2135
  %v2137 = vmul.f32 %v2125, 1.442695
  %v2138 = vpow.pop %v2137
  %v2139 = vmul.f32 %v2126, 1.442695
  %v2140 = vpow.pop %v2139
  %v2141 = vmul.f32 %v2127, 1.442695
  %v2142 = vpow.pop %v2141
  %v2143 = vmul.f32 %v2128, 1.442695
  %v2144 = vpow.pop %v2143
  %v2145 = vsel %vm2105, %v2130, 0.0
  %v2146 = vsel %vm2105, %v2132, 0.0
  %v2147 = vadd.f32 %v2145, %v2146
  %v2148 = vsel %vm2105, %v2134, 0.0
  %v2149 = vadd.f32 %v2147, %v2148
  %v2150 = vsel %vm2105, %v2136, 0.0
  %v2151 = vadd.f32 %v2149, %v2150
  %v2152 = vsel %vm2105, %v2138, 0.0
  %v2153 = vadd.f32 %v2151, %v2152
  %v2154 = vsel %vm2105, %v2140, 0.0
  %v2155 = vadd.f32 %v2153, %v2154
  %v2156 = vsel %vm2105, %v2142, 0.0
  %v2157 = vadd.f32 %v2155, %v2156
  %v2158 = vsel %vm2105, %v2144, 0.0
  %v2159 = vadd.f32 %v2157, %v2158
  %v2160 = vmul.f32 %v1868, %v2159
  %v2161 = vmul.f32 %v1901, %v2159
  %v2162 = vmul.f32 %v1934, %v2159
  %v2163 = vmul.f32 %v1967, %v2159
  %v2164 = vmul.f32 %v2000, %v2159
  %v2165 = vmul.f32 %v2033, %v2159
  %v2166 = vmul.f32 %v2066, %v2159
  %v2167 = vmul.f32 %v2104, %v2159
  %v2168 = vrcp.pop %v2130
  %v2169 = vrcp.pop %v2132
  %v2170 = vrcp.pop %v2134
  %v2171 = vrcp.pop %v2136
  %v2172 = vrcp.pop %v2138
  %v2173 = vrcp.pop %v2140
  %v2174 = vrcp.pop %v2142
  %v2175 = vrcp.pop %v2144
  %v2176 = vmul.f32 %v2160, %v2168
  %v2177 = vmul.f32 %v2161, %v2169
  %v2178 = vmul.f32 %v2162, %v2170
  %v2179 = vmul.f32 %v2163, %v2171
  %v2180 = vmul.f32 %v2164, %v2172
  %v2181 = vmul.f32 %v2165, %v2173
  %v2182 = vmul.f32 %v2166, %v2174
  %v2183 = vmul.f32 %v2167, %v2175
  %2192 = vrot.lane.b32.xlu0 %v2176, 125
  %v2193 = vpop.permute.xlu0 %2192
  %2194 = vrot.lane.b32.xlu0 %v2177, 125
  %v2195 = vpop.permute.xlu0 %2194
  %2196 = vrot.lane.b32.xlu0 %v2178, 125
  %v2197 = vpop.permute.xlu0 %2196
  %2198 = vrot.lane.b32.xlu0 %v2179, 125
  %v2199 = vpop.permute.xlu0 %2198
  %2200 = vrot.lane.b32.xlu0 %v2180, 125
  %v2201 = vpop.permute.xlu0 %2200
  %2202 = vrot.lane.b32.xlu0 %v2181, 125
  %v2203 = vpop.permute.xlu0 %2202
  %2204 = vrot.lane.b32.xlu0 %v2182, 125
  %v2205 = vpop.permute.xlu0 %2204
  %2206 = vrot.lane.b32.xlu0 %v2183, 125
  %v2207 = vpop.permute.xlu0 %2206
  %vm2216 = vcmask 1024
  %2217 = vst.msk [vmem:[%s22] sm:$0x3] %vm2216, %v2193
  %2218 = vst.msk [vmem:[%s22 + $0x2] sm:$0x3] %vm2216, %v2195
  %2219 = vst.msk [vmem:[%s22 + $0x4] sm:$0x3] %vm2216, %v2197
  %2220 = vst.msk [vmem:[%s22 + $0x6] sm:$0x3] %vm2216, %v2199
  %2221 = vst.msk [vmem:[%s22 + $0x8] sm:$0x3] %vm2216, %v2201
  %2222 = vst.msk [vmem:[%s22 + $0xa] sm:$0x3] %vm2216, %v2203
  %2223 = vst.msk [vmem:[%s22 + $0xc] sm:$0x3] %vm2216, %v2205
  %2224 = vst.msk [vmem:[%s22 + $0xe] sm:$0x3] %vm2216, %v2207
  // Predicated region
  $region90: #{tpu_custom_call.1} parent=0 // pred_check
    _
  $region91: #{tpu_custom_call.1} parent=0 // pred_check_branch
    %2226 = sbr.rel (0) target = $region93
  $region92: #{tpu_custom_call.1} parent=0 // pred_region
    _
  $region93: #{tpu_custom_call.1} parent=0 // pred_fallthru
    _
  // Predicated region
  $region94: #{tpu_custom_call.1} parent=0 // pred_check
    _
  $region95: #{tpu_custom_call.1} parent=0 // pred_check_branch
    %2228 = sbr.rel (0) target = $region97
  $region96: #{tpu_custom_call.1} parent=0 // pred_region
    _
  $region97: #{tpu_custom_call.1} parent=0 // pred_fallthru
    _

</llo_original>
